<compile_context>
chip_gen: v7x
topology: tpu7x:2x2x1
jax: 0.10.0
libtpu: 0.0.40
codegen_flags: <defaults>
</compile_context>

<pallas_src>
import math
from functools import partial

import jax
import jax.numpy as jnp
from jax import lax
from jax.experimental import pallas as pl
from jax.experimental.pallas import tpu as pltpu


def _layernorm(v, g, b, eps=1e-5):
    mu = jnp.mean(v, axis=-1, keepdims=True)
    var = jnp.mean((v - mu) ** 2, axis=-1, keepdims=True)
    return (v - mu) * lax.rsqrt(var + eps) * g + b


def _gelu_tanh(v):
    # tanh-approximate GELU: tanh goes to the EUP (free slot when MXU/VALU
    # bound); max abs deviation from erf GELU ~1e-3, well inside tolerance.
    c = math.sqrt(2.0 / math.pi)
    return 0.5 * v * (1.0 + jnp.tanh(c * (v + 0.044715 * v * v * v)))


def block_kernel(x_ref, wqkv_ref, wp_ref, bp_ref,
                 g1_ref, b1_ref, g2_ref, b2_ref,
                 w1_ref, bf1_ref, w2_ref, bf2_ref,
                 out_ref, heads_ref, *, num_heads):
    f32 = jnp.float32
    bf16 = jnp.bfloat16

    x = x_ref[0].astype(f32)                      # (N, C) for this batch element
    N, C = x.shape
    hd = C // num_heads

    # ---------------- norm1 + fused QKV projection ----------------
    xn = _layernorm(x, g1_ref[0], b1_ref[0])                       # f32 stats
    qkv = jnp.dot(xn.astype(bf16), wqkv_ref[...],                  # bf16 x bf16 -> f32
                  preferred_element_type=f32)                      # (N, 3C); scale folded in Q cols
    qkv_b = qkv.astype(bf16)                                       # single full-width downcast

    # ---------------- multi-head attention ----------------
    # Each iteration ends in a scratch store -> bounded live ranges.
    for h in range(num_heads):                                     # static head loop
        lo = h * hd
        qh = qkv_b[:, lo:lo + hd]
        kh = qkv_b[:, C + lo:C + lo + hd]
        vh = qkv_b[:, 2 * C + lo:2 * C + lo + hd]

        # s = qh @ kh^T (contraction over head dim), f32 accumulation
        s = lax.dot_general(qh, kh, (((1,), (1,)), ((), ())),
                            preferred_element_type=f32)            # (N, N)
        s = s - jnp.max(s, axis=-1, keepdims=True)                 # f32 softmax
        p = jnp.exp(s)
        p = p * pl.reciprocal(jnp.sum(p, axis=-1, keepdims=True), approx=True)

        head_out = jnp.dot(p.astype(bf16), vh,                     # (N, hd)
                           preferred_element_type=f32)
        heads_ref[:, lo:lo + hd] = head_out.astype(bf16)           # scratch store

    # One full-K (K = C) output-projection matmul instead of per-head K = hd.
    y = jnp.dot(heads_ref[...], wp_ref[...], preferred_element_type=f32)
    x1 = x + y + bp_ref[0]                         # residual 1 (drop_path = identity)

    # ---------------- norm2 + MLP ----------------
    xn2 = _layernorm(x1, g2_ref[0], b2_ref[0])
    h1 = jnp.dot(xn2.astype(bf16), w1_ref[...],
                 preferred_element_type=f32) + bf1_ref[0]
    h1 = _gelu_tanh(h1)                                            # EUP tanh, f32 elementwise
    h2 = jnp.dot(h1.astype(bf16), w2_ref[...],
                 preferred_element_type=f32) + bf2_ref[0]

    out_ref[0] = (x1 + h2).astype(out_ref.dtype)   # residual 2


def prepare_block_params(params, num_heads):
    """One-time parameter preparation: QKV fusion, scale folding, bf16 casts.

    Hoisted out of the per-call wrapper so repeated forward calls do not pay an
    extra XLA concat/cast pass over the weights.
    """
    f32, bf16 = jnp.float32, jnp.bfloat16
    C = params["wq"].shape[0]
    hd = C // num_heads
    scale = hd ** -0.5

    # Fused QKV weight with the attention scale folded into the Q columns.
    wqkv = jnp.concatenate(
        [params["wq"].astype(f32) * scale,
         params["wk"].astype(f32),
         params["wv"].astype(f32)], axis=1).astype(bf16)           # (C, 3C)
    prepped = [
        wqkv,
        params["wp"].astype(bf16),    # (C, C)
        params["bp"].astype(f32),
        params["g1"].astype(f32),
        params["b1"].astype(f32),
        params["g2"].astype(f32),
        params["b2"].astype(f32),
        params["w1"].astype(bf16),    # (C, H)
        params["bf1"].astype(f32),
        params["w2"].astype(bf16),    # (H, C)
        params["bf2"].astype(f32),
    ]
    return [jax.device_put(p) for p in prepped]


def vit_block_forward(x, prepped, num_heads):
    B, N, C = x.shape
    hidden = prepped[7].shape[1]                                   # w1: (C, H)

    # ----- VMEM budget from the actual footprint (with headroom) -----
    nbytes = lambda a: a.size * a.dtype.itemsize
    weight_bytes = sum(nbytes(p) for p in prepped)
    io_bytes = 2 * 2 * N * C * x.dtype.itemsize            # in+out blocks, double-buffered
    # f32 temporaries: x/xn/y/x1/xn2/h2 (+slack) -> 8*C per row, qkv f32 3*C,
    # per-head (N,N) score/prob temps (~3 live), MLP activations 2*hidden.
    tmp_bytes = 4 * N * (8 * C + 3 * C + 3 * N + 2 * hidden)
    # bf16 temporaries: qkv copy + head-output scratch.
    tmp_bytes += 2 * N * (3 * C + C)
    need = weight_bytes + io_bytes + tmp_bytes

    try:
        info = pltpu.get_tpu_info()
        vmem_cap = int(getattr(info, "vmem_capacity_bytes", 64 * 1024 * 1024))
    except Exception:
        vmem_cap = 64 * 1024 * 1024   # conservative: v7x per-core VMEM
    vmem_limit = int(min(max(2 * need, 32 * 1024 * 1024), (vmem_cap * 3) // 4))

    def resident_spec(a, single_buffer):
        # Grid-invariant operand: constant index_map; optionally single-buffered.
        nd = a.ndim
        idx = lambda *_: (0,) * nd
        if single_buffer:
            return pl.BlockSpec(a.shape, idx, pipeline_mode=pl.Buffered(1))
        return pl.BlockSpec(a.shape, idx)

    def build(single_buffer_weights):
        in_specs = ([pl.BlockSpec((1, N, C), lambda b: (b, 0, 0))]
                    + [resident_spec(p, single_buffer_weights) for p in prepped])
        out_spec = pl.BlockSpec((1, N, C), lambda b: (b, 0, 0))
        return pl.pallas_call(
            partial(block_kernel, num_heads=num_heads),
            out_shape=jax.ShapeDtypeStruct((B, N, C), x.dtype),
            grid=(B,),
            in_specs=in_specs,
            out_specs=out_spec,
            scratch_shapes=[pltpu.VMEM((N, C), jnp.bfloat16)],     # head outputs
            compiler_params=pltpu.CompilerParams(
                dimension_semantics=("parallel",),
                vmem_limit_bytes=vmem_limit),
        )

    try:
        # Single-buffer the grid-invariant weights (they are fetched once).
        return build(True)(x, *prepped)
    except Exception:
        # pipeline_mode=pl.Buffered(1) not supported on this jax/libtpu combo:
        # fall back to default double-buffering (correct; heavier on VMEM). A
        # genuine kernel failure would fail here too and surface.
        # TODO(synk): v7x fallback should use pl.ANY weights + one-time DMA.
        return build(False)(x, *prepped)


# --------------------- pure-JAX reference (PyTorch semantics, f32) ---------------------
def reference_block(x, params, num_heads):
    B, N, C = x.shape
    hd = C // num_heads
    scale = hd ** -0.5

    def ln(v, g, b):
        mu = v.mean(-1, keepdims=True)
        var = ((v - mu) ** 2).mean(-1, keepdims=True)
        return (v - mu) / jnp.sqrt(var + 1e-5) * g + b

    xn = ln(x, params["g1"][0], params["b1"][0])
    q = (xn @ params["wq"]).reshape(B, N, num_heads, hd).transpose(0, 2, 1, 3)
    k = (xn @ params["wk"]).reshape(B, N, num_heads, hd).transpose(0, 2, 1, 3)
    v = (xn @ params["wv"]).reshape(B, N, num_heads, hd).transpose(0, 2, 1, 3)
    attn = jnp.einsum("bhqd,bhkd->bhqk", q, k) * scale
    attn = jax.nn.softmax(attn, axis=-1)
    y = jnp.einsum("bhqk,bhkd->bhqd", attn, v).transpose(0, 2, 1, 3).reshape(B, N, C)
    y = y @ params["wp"] + params["bp"][0]
    x1 = x + y
    xn2 = ln(x1, params["g2"][0], params["b2"][0])
    h1 = xn2 @ params["w1"] + params["bf1"][0]
    h1 = 0.5 * h1 * (1.0 + lax.erf(h1 / math.sqrt(2.0)))           # exact erf GELU
    return x1 + (h1 @ params["w2"] + params["bf2"][0])


if __name__ == "__main__":
    B, N, C = 2, 8, 32
    num_heads = 4
    hidden = int(C * 4.0)

    key = jax.random.PRNGKey(0)
    ks = jax.random.split(key, 12)

    wqkv = 0.02 * jax.random.normal(ks[0], (3 * C, C), jnp.float32)  # torch (out, in)
    params = {
        "wq": wqkv[0:C].T,
        "wk": wqkv[C:2 * C].T,
        "wv": wqkv[2 * C:3 * C].T,
        "wp": (0.02 * jax.random.normal(ks[1], (C, C), jnp.float32)).T,
        "bp": 0.02 * jax.random.normal(ks[2], (1, C), jnp.float32),
        "g1": 1.0 + 0.1 * jax.random.normal(ks[3], (1, C), jnp.float32),
        "b1": 0.1 * jax.random.normal(ks[4], (1, C), jnp.float32),
        "g2": 1.0 + 0.1 * jax.random.normal(ks[5], (1, C), jnp.float32),
        "b2": 0.1 * jax.random.normal(ks[6], (1, C), jnp.float32),
        "w1": (0.02 * jax.random.normal(ks[7], (hidden, C), jnp.float32)).T,
        "bf1": 0.02 * jax.random.normal(ks[8], (1, hidden), jnp.float32),
        "w2": (0.02 * jax.random.normal(ks[9], (C, hidden), jnp.float32)).T,
        "bf2": 0.02 * jax.random.normal(ks[10], (1, C), jnp.float32),
    }

    x = jax.random.normal(ks[11], (B, N, C), jnp.float32)

    prepped = prepare_block_params(params, num_heads)   # one-time weight prep
    out = vit_block_forward(x, prepped, num_heads)
    out = jax.block_until_ready(out)

    ref = reference_block(x, params, num_heads)
    assert out.shape == (B, N, C)
    # bf16 MXU operands + approx reciprocal + tanh GELU -> bf16-appropriate tolerance.
    max_err = float(jnp.max(jnp.abs(out - ref)))
    assert max_err < 2e-2, f"mismatch vs reference: max abs err {max_err}"

    print("KERNEL_OK")
</pallas_src>

<mosaic_0001>
module attributes {stable_mosaic.version = 11 : i64} {
  func.func @block_kernel(%arg0: i32, %arg1: memref<1x8x32xf32, #tpu.memory_space<vmem>>, %arg2: memref<32x96xbf16, #tpu.memory_space<vmem>>, %arg3: memref<32x32xbf16, #tpu.memory_space<vmem>>, %arg4: memref<1x32xf32, #tpu.memory_space<vmem>>, %arg5: memref<1x32xf32, #tpu.memory_space<vmem>>, %arg6: memref<1x32xf32, #tpu.memory_space<vmem>>, %arg7: memref<1x32xf32, #tpu.memory_space<vmem>>, %arg8: memref<1x32xf32, #tpu.memory_space<vmem>>, %arg9: memref<32x128xbf16, #tpu.memory_space<vmem>>, %arg10: memref<1x128xf32, #tpu.memory_space<vmem>>, %arg11: memref<128x32xbf16, #tpu.memory_space<vmem>>, %arg12: memref<1x32xf32, #tpu.memory_space<vmem>>, %arg13: memref<1x8x32xf32, #tpu.memory_space<vmem>>, %arg14: memref<8x32xbf16, #tpu.memory_space<vmem>>) attributes {dimension_semantics = [#tpu.dimension_semantics<parallel>], iteration_bounds = array<i64: 2>, scalar_prefetch = 0 : i64, scratch_operands = 1 : i64, tpu.core_type = #tpu.core_type<tc>, window_params = [{transform_indices = @transform_0, window_bounds = array<i64: 1, 8, 32>}, {pipeline_mode = #tpu.pipeline_mode<synchronous>, transform_indices = @transform_1, window_bounds = array<i64: 32, 96>}, {pipeline_mode = #tpu.pipeline_mode<synchronous>, transform_indices = @transform_2, window_bounds = array<i64: 32, 32>}, {pipeline_mode = #tpu.pipeline_mode<synchronous>, transform_indices = @transform_3, window_bounds = array<i64: 1, 32>}, {pipeline_mode = #tpu.pipeline_mode<synchronous>, transform_indices = @transform_4, window_bounds = array<i64: 1, 32>}, {pipeline_mode = #tpu.pipeline_mode<synchronous>, transform_indices = @transform_5, window_bounds = array<i64: 1, 32>}, {pipeline_mode = #tpu.pipeline_mode<synchronous>, transform_indices = @transform_6, window_bounds = array<i64: 1, 32>}, {pipeline_mode = #tpu.pipeline_mode<synchronous>, transform_indices = @transform_7, window_bounds = array<i64: 1, 32>}, {pipeline_mode = #tpu.pipeline_mode<synchronous>, transform_indices = @transform_8, window_bounds = array<i64: 32, 128>}, {pipeline_mode = #tpu.pipeline_mode<synchronous>, transform_indices = @transform_9, window_bounds = array<i64: 1, 128>}, {pipeline_mode = #tpu.pipeline_mode<synchronous>, transform_indices = @transform_10, window_bounds = array<i64: 128, 32>}, {pipeline_mode = #tpu.pipeline_mode<synchronous>, transform_indices = @transform_11, window_bounds = array<i64: 1, 32>}, {transform_indices = @transform_12, window_bounds = array<i64: 1, 8, 32>}]} {
    %c0 = arith.constant 0 : index
    %c0_0 = arith.constant 0 : index
    %c0_1 = arith.constant 0 : index
    %0 = vector.load %arg1[%c0, %c0_0, %c0_1] : memref<1x8x32xf32, #tpu.memory_space<vmem>>, vector<1x8x32xf32>
    %1 = vector.shape_cast %0 : vector<1x8x32xf32> to vector<8x32xf32>
    %c0_2 = arith.constant 0 : index
    %c0_3 = arith.constant 0 : index
    %2 = vector.load %arg5[%c0_2, %c0_3] : memref<1x32xf32, #tpu.memory_space<vmem>>, vector<1x32xf32>
    %3 = vector.shape_cast %2 : vector<1x32xf32> to vector<32xf32>
    %c0_4 = arith.constant 0 : index
    %c0_5 = arith.constant 0 : index
    %4 = vector.load %arg6[%c0_4, %c0_5] : memref<1x32xf32, #tpu.memory_space<vmem>>, vector<1x32xf32>
    %5 = vector.shape_cast %4 : vector<1x32xf32> to vector<32xf32>
    %cst = arith.constant dense<0.000000e+00> : vector<8xf32>
    %6 = vector.multi_reduction <add>, %1, %cst [1] : vector<8x32xf32> to vector<8xf32>
    %7 = vector.shape_cast %6 : vector<8xf32> to vector<8x1xf32>
    %cst_6 = arith.constant 3.200000e+01 : f32
    %8 = vector.broadcast %cst_6 : f32 to vector<8x1xf32>
    %9 = arith.divf %7, %8 : vector<8x1xf32>
    %10 = vector.broadcast %9 : vector<8x1xf32> to vector<8x32xf32>
    %11 = arith.subf %1, %10 : vector<8x32xf32>
    %12 = arith.mulf %11, %11 : vector<8x32xf32>
    %cst_7 = arith.constant dense<0.000000e+00> : vector<8xf32>
    %13 = vector.multi_reduction <add>, %12, %cst_7 [1] : vector<8x32xf32> to vector<8xf32>
    %14 = vector.shape_cast %13 : vector<8xf32> to vector<8x1xf32>
    %cst_8 = arith.constant 3.200000e+01 : f32
    %15 = vector.broadcast %cst_8 : f32 to vector<8x1xf32>
    %16 = arith.divf %14, %15 : vector<8x1xf32>
    %17 = vector.broadcast %9 : vector<8x1xf32> to vector<8x32xf32>
    %18 = arith.subf %1, %17 : vector<8x32xf32>
    %cst_9 = arith.constant 9.99999974E-6 : f32
    %19 = vector.broadcast %cst_9 : f32 to vector<8x1xf32>
    %20 = arith.addf %16, %19 : vector<8x1xf32>
    %21 = math.rsqrt %20 : vector<8x1xf32>
    %22 = vector.broadcast %21 : vector<8x1xf32> to vector<8x32xf32>
    %23 = arith.mulf %18, %22 : vector<8x32xf32>
    %24 = vector.shape_cast %3 : vector<32xf32> to vector<1x32xf32>
    %25 = vector.broadcast %24 : vector<1x32xf32> to vector<8x32xf32>
    %26 = arith.mulf %23, %25 : vector<8x32xf32>
    %27 = vector.shape_cast %5 : vector<32xf32> to vector<1x32xf32>
    %28 = vector.broadcast %27 : vector<1x32xf32> to vector<8x32xf32>
    %29 = arith.addf %26, %28 : vector<8x32xf32>
    %30 = arith.truncf %29 : vector<8x32xf32> to vector<8x32xbf16>
    %c0_10 = arith.constant 0 : index
    %c0_11 = arith.constant 0 : index
    %31 = vector.load %arg2[%c0_10, %c0_11] : memref<32x96xbf16, #tpu.memory_space<vmem>>, vector<32x96xbf16>
    %cst_12 = arith.constant dense<0.000000e+00> : vector<8x96xf32>
    %32 = tpu.matmul %30, %31, %cst_12 {dimension_numbers = #tpu.dot_dimension_numbers<[1], [0], [0], [1], [0, 0, 1, 1], [], []>} : vector<8x32xbf16>, vector<32x96xbf16>, vector<8x96xf32> -> vector<8x96xf32>
    %33 = arith.truncf %32 : vector<8x96xf32> to vector<8x96xbf16>
    %34 = vector.extract_strided_slice %33 {offsets = [0, 0], sizes = [8, 8], strides = [1, 1]} : vector<8x96xbf16> to vector<8x8xbf16>
    %35 = vector.extract_strided_slice %33 {offsets = [0, 32], sizes = [8, 8], strides = [1, 1]} : vector<8x96xbf16> to vector<8x8xbf16>
    %36 = vector.extract_strided_slice %33 {offsets = [0, 64], sizes = [8, 8], strides = [1, 1]} : vector<8x96xbf16> to vector<8x8xbf16>
    %cst_13 = arith.constant dense<0.000000e+00> : vector<8x8xf32>
    %37 = tpu.matmul %34, %35, %cst_13 {dimension_numbers = #tpu.dot_dimension_numbers<[1], [1], [0], [0], [0, 0, 1, 0], [], []>} : vector<8x8xbf16>, vector<8x8xbf16>, vector<8x8xf32> -> vector<8x8xf32>
    %cst_14 = arith.constant dense<0xFF800000> : vector<8xf32>
    %38 = vector.multi_reduction <maximumf>, %37, %cst_14 [1] : vector<8x8xf32> to vector<8xf32>
    %39 = vector.shape_cast %38 : vector<8xf32> to vector<8x1xf32>
    %40 = vector.broadcast %39 : vector<8x1xf32> to vector<8x8xf32>
    %41 = arith.subf %37, %40 : vector<8x8xf32>
    %42 = math.exp %41 : vector<8x8xf32>
    %cst_15 = arith.constant dense<0.000000e+00> : vector<8xf32>
    %43 = vector.multi_reduction <add>, %42, %cst_15 [1] : vector<8x8xf32> to vector<8xf32>
    %44 = vector.shape_cast %43 : vector<8xf32> to vector<8x1xf32>
    %45 = tpu.reciprocal %44 {approx = true} : vector<8x1xf32> -> vector<8x1xf32>
    %46 = vector.broadcast %45 : vector<8x1xf32> to vector<8x8xf32>
    %47 = arith.mulf %42, %46 : vector<8x8xf32>
    %48 = arith.truncf %47 : vector<8x8xf32> to vector<8x8xbf16>
    %cst_16 = arith.constant dense<0.000000e+00> : vector<8x8xf32>
    %49 = tpu.matmul %48, %36, %cst_16 {dimension_numbers = #tpu.dot_dimension_numbers<[1], [0], [0], [1], [0, 0, 1, 1], [], []>} : vector<8x8xbf16>, vector<8x8xbf16>, vector<8x8xf32> -> vector<8x8xf32>
    %50 = arith.truncf %49 : vector<8x8xf32> to vector<8x8xbf16>
    %c0_17 = arith.constant 0 : index
    %c0_18 = arith.constant 0 : index
    %51 = vector.load %arg14[%c0_17, %c0_18] : memref<8x32xbf16, #tpu.memory_space<vmem>>, vector<8x8xbf16>
    tpu.vector_store %arg14[%c0_17, %c0_18], %50 {strides = array<i32>} : memref<8x32xbf16, #tpu.memory_space<vmem>>, vector<8x8xbf16>,
    %52 = vector.extract_strided_slice %33 {offsets = [0, 8], sizes = [8, 8], strides = [1, 1]} : vector<8x96xbf16> to vector<8x8xbf16>
    %53 = vector.extract_strided_slice %33 {offsets = [0, 40], sizes = [8, 8], strides = [1, 1]} : vector<8x96xbf16> to vector<8x8xbf16>
    %54 = vector.extract_strided_slice %33 {offsets = [0, 72], sizes = [8, 8], strides = [1, 1]} : vector<8x96xbf16> to vector<8x8xbf16>
    %cst_19 = arith.constant dense<0.000000e+00> : vector<8x8xf32>
    %55 = tpu.matmul %52, %53, %cst_19 {dimension_numbers = #tpu.dot_dimension_numbers<[1], [1], [0], [0], [0, 0, 1, 0], [], []>} : vector<8x8xbf16>, vector<8x8xbf16>, vector<8x8xf32> -> vector<8x8xf32>
    %cst_20 = arith.constant dense<0xFF800000> : vector<8xf32>
    %56 = vector.multi_reduction <maximumf>, %55, %cst_20 [1] : vector<8x8xf32> to vector<8xf32>
    %57 = vector.shape_cast %56 : vector<8xf32> to vector<8x1xf32>
    %58 = vector.broadcast %57 : vector<8x1xf32> to vector<8x8xf32>
    %59 = arith.subf %55, %58 : vector<8x8xf32>
    %60 = math.exp %59 : vector<8x8xf32>
    %cst_21 = arith.constant dense<0.000000e+00> : vector<8xf32>
    %61 = vector.multi_reduction <add>, %60, %cst_21 [1] : vector<8x8xf32> to vector<8xf32>
    %62 = vector.shape_cast %61 : vector<8xf32> to vector<8x1xf32>
    %63 = tpu.reciprocal %62 {approx = true} : vector<8x1xf32> -> vector<8x1xf32>
    %64 = vector.broadcast %63 : vector<8x1xf32> to vector<8x8xf32>
    %65 = arith.mulf %60, %64 : vector<8x8xf32>
    %66 = arith.truncf %65 : vector<8x8xf32> to vector<8x8xbf16>
    %cst_22 = arith.constant dense<0.000000e+00> : vector<8x8xf32>
    %67 = tpu.matmul %66, %54, %cst_22 {dimension_numbers = #tpu.dot_dimension_numbers<[1], [0], [0], [1], [0, 0, 1, 1], [], []>} : vector<8x8xbf16>, vector<8x8xbf16>, vector<8x8xf32> -> vector<8x8xf32>
    %68 = arith.truncf %67 : vector<8x8xf32> to vector<8x8xbf16>
    %c0_23 = arith.constant 0 : index
    %c8 = arith.constant 8 : index
    %69 = vector.load %arg14[%c0_23, %c8] : memref<8x32xbf16, #tpu.memory_space<vmem>>, vector<8x8xbf16>
    tpu.vector_store %arg14[%c0_23, %c8], %68 {strides = array<i32>} : memref<8x32xbf16, #tpu.memory_space<vmem>>, vector<8x8xbf16>,
    %70 = vector.extract_strided_slice %33 {offsets = [0, 16], sizes = [8, 8], strides = [1, 1]} : vector<8x96xbf16> to vector<8x8xbf16>
    %71 = vector.extract_strided_slice %33 {offsets = [0, 48], sizes = [8, 8], strides = [1, 1]} : vector<8x96xbf16> to vector<8x8xbf16>
    %72 = vector.extract_strided_slice %33 {offsets = [0, 80], sizes = [8, 8], strides = [1, 1]} : vector<8x96xbf16> to vector<8x8xbf16>
    %cst_24 = arith.constant dense<0.000000e+00> : vector<8x8xf32>
    %73 = tpu.matmul %70, %71, %cst_24 {dimension_numbers = #tpu.dot_dimension_numbers<[1], [1], [0], [0], [0, 0, 1, 0], [], []>} : vector<8x8xbf16>, vector<8x8xbf16>, vector<8x8xf32> -> vector<8x8xf32>
    %cst_25 = arith.constant dense<0xFF800000> : vector<8xf32>
    %74 = vector.multi_reduction <maximumf>, %73, %cst_25 [1] : vector<8x8xf32> to vector<8xf32>
    %75 = vector.shape_cast %74 : vector<8xf32> to vector<8x1xf32>
    %76 = vector.broadcast %75 : vector<8x1xf32> to vector<8x8xf32>
    %77 = arith.subf %73, %76 : vector<8x8xf32>
    %78 = math.exp %77 : vector<8x8xf32>
    %cst_26 = arith.constant dense<0.000000e+00> : vector<8xf32>
    %79 = vector.multi_reduction <add>, %78, %cst_26 [1] : vector<8x8xf32> to vector<8xf32>
    %80 = vector.shape_cast %79 : vector<8xf32> to vector<8x1xf32>
    %81 = tpu.reciprocal %80 {approx = true} : vector<8x1xf32> -> vector<8x1xf32>
    %82 = vector.broadcast %81 : vector<8x1xf32> to vector<8x8xf32>
    %83 = arith.mulf %78, %82 : vector<8x8xf32>
    %84 = arith.truncf %83 : vector<8x8xf32> to vector<8x8xbf16>
    %cst_27 = arith.constant dense<0.000000e+00> : vector<8x8xf32>
    %85 = tpu.matmul %84, %72, %cst_27 {dimension_numbers = #tpu.dot_dimension_numbers<[1], [0], [0], [1], [0, 0, 1, 1], [], []>} : vector<8x8xbf16>, vector<8x8xbf16>, vector<8x8xf32> -> vector<8x8xf32>
    %86 = arith.truncf %85 : vector<8x8xf32> to vector<8x8xbf16>
    %c0_28 = arith.constant 0 : index
    %c16 = arith.constant 16 : index
    %87 = vector.load %arg14[%c0_28, %c16] : memref<8x32xbf16, #tpu.memory_space<vmem>>, vector<8x8xbf16>
    tpu.vector_store %arg14[%c0_28, %c16], %86 {strides = array<i32>} : memref<8x32xbf16, #tpu.memory_space<vmem>>, vector<8x8xbf16>,
    %88 = vector.extract_strided_slice %33 {offsets = [0, 24], sizes = [8, 8], strides = [1, 1]} : vector<8x96xbf16> to vector<8x8xbf16>
    %89 = vector.extract_strided_slice %33 {offsets = [0, 56], sizes = [8, 8], strides = [1, 1]} : vector<8x96xbf16> to vector<8x8xbf16>
    %90 = vector.extract_strided_slice %33 {offsets = [0, 88], sizes = [8, 8], strides = [1, 1]} : vector<8x96xbf16> to vector<8x8xbf16>
    %cst_29 = arith.constant dense<0.000000e+00> : vector<8x8xf32>
    %91 = tpu.matmul %88, %89, %cst_29 {dimension_numbers = #tpu.dot_dimension_numbers<[1], [1], [0], [0], [0, 0, 1, 0], [], []>} : vector<8x8xbf16>, vector<8x8xbf16>, vector<8x8xf32> -> vector<8x8xf32>
    %cst_30 = arith.constant dense<0xFF800000> : vector<8xf32>
    %92 = vector.multi_reduction <maximumf>, %91, %cst_30 [1] : vector<8x8xf32> to vector<8xf32>
    %93 = vector.shape_cast %92 : vector<8xf32> to vector<8x1xf32>
    %94 = vector.broadcast %93 : vector<8x1xf32> to vector<8x8xf32>
    %95 = arith.subf %91, %94 : vector<8x8xf32>
    %96 = math.exp %95 : vector<8x8xf32>
    %cst_31 = arith.constant dense<0.000000e+00> : vector<8xf32>
    %97 = vector.multi_reduction <add>, %96, %cst_31 [1] : vector<8x8xf32> to vector<8xf32>
    %98 = vector.shape_cast %97 : vector<8xf32> to vector<8x1xf32>
    %99 = tpu.reciprocal %98 {approx = true} : vector<8x1xf32> -> vector<8x1xf32>
    %100 = vector.broadcast %99 : vector<8x1xf32> to vector<8x8xf32>
    %101 = arith.mulf %96, %100 : vector<8x8xf32>
    %102 = arith.truncf %101 : vector<8x8xf32> to vector<8x8xbf16>
    %cst_32 = arith.constant dense<0.000000e+00> : vector<8x8xf32>
    %103 = tpu.matmul %102, %90, %cst_32 {dimension_numbers = #tpu.dot_dimension_numbers<[1], [0], [0], [1], [0, 0, 1, 1], [], []>} : vector<8x8xbf16>, vector<8x8xbf16>, vector<8x8xf32> -> vector<8x8xf32>
    %104 = arith.truncf %103 : vector<8x8xf32> to vector<8x8xbf16>
    %c0_33 = arith.constant 0 : index
    %c24 = arith.constant 24 : index
    %105 = vector.load %arg14[%c0_33, %c24] : memref<8x32xbf16, #tpu.memory_space<vmem>>, vector<8x8xbf16>
    tpu.vector_store %arg14[%c0_33, %c24], %104 {strides = array<i32>} : memref<8x32xbf16, #tpu.memory_space<vmem>>, vector<8x8xbf16>,
    %c0_34 = arith.constant 0 : index
    %c0_35 = arith.constant 0 : index
    %106 = vector.load %arg14[%c0_34, %c0_35] : memref<8x32xbf16, #tpu.memory_space<vmem>>, vector<8x32xbf16>
    %c0_36 = arith.constant 0 : index
    %c0_37 = arith.constant 0 : index
    %107 = vector.load %arg3[%c0_36, %c0_37] : memref<32x32xbf16, #tpu.memory_space<vmem>>, vector<32x32xbf16>
    %cst_38 = arith.constant dense<0.000000e+00> : vector<8x32xf32>
    %108 = tpu.matmul %106, %107, %cst_38 {dimension_numbers = #tpu.dot_dimension_numbers<[1], [0], [0], [1], [0, 0, 1, 1], [], []>} : vector<8x32xbf16>, vector<32x32xbf16>, vector<8x32xf32> -> vector<8x32xf32>
    %109 = arith.addf %1, %108 : vector<8x32xf32>
    %c0_39 = arith.constant 0 : index
    %c0_40 = arith.constant 0 : index
    %110 = vector.load %arg4[%c0_39, %c0_40] : memref<1x32xf32, #tpu.memory_space<vmem>>, vector<1x32xf32>
    %111 = vector.shape_cast %110 : vector<1x32xf32> to vector<32xf32>
    %112 = vector.shape_cast %111 : vector<32xf32> to vector<1x32xf32>
    %113 = vector.broadcast %112 : vector<1x32xf32> to vector<8x32xf32>
    %114 = arith.addf %109, %113 : vector<8x32xf32>
    %c0_41 = arith.constant 0 : index
    %c0_42 = arith.constant 0 : index
    %115 = vector.load %arg7[%c0_41, %c0_42] : memref<1x32xf32, #tpu.memory_space<vmem>>, vector<1x32xf32>
    %116 = vector.shape_cast %115 : vector<1x32xf32> to vector<32xf32>
    %c0_43 = arith.constant 0 : index
    %c0_44 = arith.constant 0 : index
    %117 = vector.load %arg8[%c0_43, %c0_44] : memref<1x32xf32, #tpu.memory_space<vmem>>, vector<1x32xf32>
    %118 = vector.shape_cast %117 : vector<1x32xf32> to vector<32xf32>
    %cst_45 = arith.constant dense<0.000000e+00> : vector<8xf32>
    %119 = vector.multi_reduction <add>, %114, %cst_45 [1] : vector<8x32xf32> to vector<8xf32>
    %120 = vector.shape_cast %119 : vector<8xf32> to vector<8x1xf32>
    %cst_46 = arith.constant 3.200000e+01 : f32
    %121 = vector.broadcast %cst_46 : f32 to vector<8x1xf32>
    %122 = arith.divf %120, %121 : vector<8x1xf32>
    %123 = vector.broadcast %122 : vector<8x1xf32> to vector<8x32xf32>
    %124 = arith.subf %114, %123 : vector<8x32xf32>
    %125 = arith.mulf %124, %124 : vector<8x32xf32>
    %cst_47 = arith.constant dense<0.000000e+00> : vector<8xf32>
    %126 = vector.multi_reduction <add>, %125, %cst_47 [1] : vector<8x32xf32> to vector<8xf32>
    %127 = vector.shape_cast %126 : vector<8xf32> to vector<8x1xf32>
    %cst_48 = arith.constant 3.200000e+01 : f32
    %128 = vector.broadcast %cst_48 : f32 to vector<8x1xf32>
    %129 = arith.divf %127, %128 : vector<8x1xf32>
    %130 = vector.broadcast %122 : vector<8x1xf32> to vector<8x32xf32>
    %131 = arith.subf %114, %130 : vector<8x32xf32>
    %cst_49 = arith.constant 9.99999974E-6 : f32
    %132 = vector.broadcast %cst_49 : f32 to vector<8x1xf32>
    %133 = arith.addf %129, %132 : vector<8x1xf32>
    %134 = math.rsqrt %133 : vector<8x1xf32>
    %135 = vector.broadcast %134 : vector<8x1xf32> to vector<8x32xf32>
    %136 = arith.mulf %131, %135 : vector<8x32xf32>
    %137 = vector.shape_cast %116 : vector<32xf32> to vector<1x32xf32>
    %138 = vector.broadcast %137 : vector<1x32xf32> to vector<8x32xf32>
    %139 = arith.mulf %136, %138 : vector<8x32xf32>
    %140 = vector.shape_cast %118 : vector<32xf32> to vector<1x32xf32>
    %141 = vector.broadcast %140 : vector<1x32xf32> to vector<8x32xf32>
    %142 = arith.addf %139, %141 : vector<8x32xf32>
    %143 = arith.truncf %142 : vector<8x32xf32> to vector<8x32xbf16>
    %c0_50 = arith.constant 0 : index
    %c0_51 = arith.constant 0 : index
    %144 = vector.load %arg9[%c0_50, %c0_51] : memref<32x128xbf16, #tpu.memory_space<vmem>>, vector<32x128xbf16>
    %cst_52 = arith.constant dense<0.000000e+00> : vector<8x128xf32>
    %145 = tpu.matmul %143, %144, %cst_52 {dimension_numbers = #tpu.dot_dimension_numbers<[1], [0], [0], [1], [0, 0, 1, 1], [], []>} : vector<8x32xbf16>, vector<32x128xbf16>, vector<8x128xf32> -> vector<8x128xf32>
    %c0_53 = arith.constant 0 : index
    %c0_54 = arith.constant 0 : index
    %146 = vector.load %arg10[%c0_53, %c0_54] : memref<1x128xf32, #tpu.memory_space<vmem>>, vector<1x128xf32>
    %147 = vector.shape_cast %146 : vector<1x128xf32> to vector<128xf32>
    %148 = vector.shape_cast %147 : vector<128xf32> to vector<1x128xf32>
    %149 = vector.broadcast %148 : vector<1x128xf32> to vector<8x128xf32>
    %150 = arith.addf %145, %149 : vector<8x128xf32>
    %cst_55 = arith.constant 5.000000e-01 : f32
    %151 = vector.broadcast %cst_55 : f32 to vector<8x128xf32>
    %152 = arith.mulf %151, %150 : vector<8x128xf32>
    %cst_56 = arith.constant 4.471500e-02 : f32
    %153 = vector.broadcast %cst_56 : f32 to vector<8x128xf32>
    %154 = arith.mulf %153, %150 : vector<8x128xf32>
    %155 = arith.mulf %154, %150 : vector<8x128xf32>
    %156 = arith.mulf %155, %150 : vector<8x128xf32>
    %157 = arith.addf %150, %156 : vector<8x128xf32>
    %cst_57 = arith.constant 0.797884583 : f32
    %158 = vector.broadcast %cst_57 : f32 to vector<8x128xf32>
    %159 = arith.mulf %158, %157 : vector<8x128xf32>
    %160 = math.tanh %159 : vector<8x128xf32>
    %cst_58 = arith.constant 1.000000e+00 : f32
    %161 = vector.broadcast %cst_58 : f32 to vector<8x128xf32>
    %162 = arith.addf %161, %160 : vector<8x128xf32>
    %163 = arith.mulf %152, %162 : vector<8x128xf32>
    %164 = arith.truncf %163 : vector<8x128xf32> to vector<8x128xbf16>
    %c0_59 = arith.constant 0 : index
    %c0_60 = arith.constant 0 : index
    %165 = vector.load %arg11[%c0_59, %c0_60] : memref<128x32xbf16, #tpu.memory_space<vmem>>, vector<128x32xbf16>
    %cst_61 = arith.constant dense<0.000000e+00> : vector<8x32xf32>
    %166 = tpu.matmul %164, %165, %cst_61 {dimension_numbers = #tpu.dot_dimension_numbers<[1], [0], [0], [1], [0, 0, 1, 1], [], []>} : vector<8x128xbf16>, vector<128x32xbf16>, vector<8x32xf32> -> vector<8x32xf32>
    %c0_62 = arith.constant 0 : index
    %c0_63 = arith.constant 0 : index
    %167 = vector.load %arg12[%c0_62, %c0_63] : memref<1x32xf32, #tpu.memory_space<vmem>>, vector<1x32xf32>
    %168 = vector.shape_cast %167 : vector<1x32xf32> to vector<32xf32>
    %169 = vector.shape_cast %168 : vector<32xf32> to vector<1x32xf32>
    %170 = vector.broadcast %169 : vector<1x32xf32> to vector<8x32xf32>
    %171 = arith.addf %166, %170 : vector<8x32xf32>
    %172 = arith.addf %114, %171 : vector<8x32xf32>
    %c0_64 = arith.constant 0 : index
    %c0_65 = arith.constant 0 : index
    %c0_66 = arith.constant 0 : index
    %173 = vector.load %arg13[%c0_64, %c0_65, %c0_66] : memref<1x8x32xf32, #tpu.memory_space<vmem>>, vector<1x8x32xf32>
    %174 = vector.shape_cast %173 : vector<1x8x32xf32> to vector<8x32xf32>
    %175 = vector.shape_cast %172 : vector<8x32xf32> to vector<1x8x32xf32>
    tpu.vector_store %arg13[%c0_64, %c0_65, %c0_66], %175 {strides = array<i32>} : memref<1x8x32xf32, #tpu.memory_space<vmem>>, vector<1x8x32xf32>,
    return
  }
  func.func @transform_0(%arg0: i32) -> (i32, i32, i32) {
    %c0_i32 = arith.constant 0 : i32
    %c0_i32_0 = arith.constant 0 : i32
    %c0_i32_1 = arith.constant 0 : i32
    return %arg0, %c0_i32, %c0_i32_0 : i32, i32, i32
  }
  func.func @transform_1(%arg0: i32) -> (i32, i32) {
    %c0_i32 = arith.constant 0 : i32
    %c0_i32_0 = arith.constant 0 : i32
    %c0_i32_1 = arith.constant 0 : i32
    return %c0_i32, %c0_i32_0 : i32, i32
  }
  func.func @transform_2(%arg0: i32) -> (i32, i32) {
    %c0_i32 = arith.constant 0 : i32
    %c0_i32_0 = arith.constant 0 : i32
    %c0_i32_1 = arith.constant 0 : i32
    return %c0_i32, %c0_i32_0 : i32, i32
  }
  func.func @transform_3(%arg0: i32) -> (i32, i32) {
    %c0_i32 = arith.constant 0 : i32
    %c0_i32_0 = arith.constant 0 : i32
    %c0_i32_1 = arith.constant 0 : i32
    return %c0_i32, %c0_i32_0 : i32, i32
  }
  func.func @transform_4(%arg0: i32) -> (i32, i32) {
    %c0_i32 = arith.constant 0 : i32
    %c0_i32_0 = arith.constant 0 : i32
    %c0_i32_1 = arith.constant 0 : i32
    return %c0_i32, %c0_i32_0 : i32, i32
  }
  func.func @transform_5(%arg0: i32) -> (i32, i32) {
    %c0_i32 = arith.constant 0 : i32
    %c0_i32_0 = arith.constant 0 : i32
    %c0_i32_1 = arith.constant 0 : i32
    return %c0_i32, %c0_i32_0 : i32, i32
  }
  func.func @transform_6(%arg0: i32) -> (i32, i32) {
    %c0_i32 = arith.constant 0 : i32
    %c0_i32_0 = arith.constant 0 : i32
    %c0_i32_1 = arith.constant 0 : i32
    return %c0_i32, %c0_i32_0 : i32, i32
  }
  func.func @transform_7(%arg0: i32) -> (i32, i32) {
    %c0_i32 = arith.constant 0 : i32
    %c0_i32_0 = arith.constant 0 : i32
    %c0_i32_1 = arith.constant 0 : i32
    return %c0_i32, %c0_i32_0 : i32, i32
  }
  func.func @transform_8(%arg0: i32) -> (i32, i32) {
    %c0_i32 = arith.constant 0 : i32
    %c0_i32_0 = arith.constant 0 : i32
    %c0_i32_1 = arith.constant 0 : i32
    return %c0_i32, %c0_i32_0 : i32, i32
  }
  func.func @transform_9(%arg0: i32) -> (i32, i32) {
    %c0_i32 = arith.constant 0 : i32
    %c0_i32_0 = arith.constant 0 : i32
    %c0_i32_1 = arith.constant 0 : i32
    return %c0_i32, %c0_i32_0 : i32, i32
  }
  func.func @transform_10(%arg0: i32) -> (i32, i32) {
    %c0_i32 = arith.constant 0 : i32
    %c0_i32_0 = arith.constant 0 : i32
    %c0_i32_1 = arith.constant 0 : i32
    return %c0_i32, %c0_i32_0 : i32, i32
  }
  func.func @transform_11(%arg0: i32) -> (i32, i32) {
    %c0_i32 = arith.constant 0 : i32
    %c0_i32_0 = arith.constant 0 : i32
    %c0_i32_1 = arith.constant 0 : i32
    return %c0_i32, %c0_i32_0 : i32, i32
  }
  func.func @transform_12(%arg0: i32) -> (i32, i32, i32) {
    %c0_i32 = arith.constant 0 : i32
    %c0_i32_0 = arith.constant 0 : i32
    %c0_i32_1 = arith.constant 0 : i32
    return %arg0, %c0_i32, %c0_i32_0 : i32, i32, i32
  }
}

module attributes {stable_mosaic.version = 11 : i64} {
  func.func @block_kernel(%arg0: i32, %arg1: memref<1x8x32xf32, #tpu.memory_space<vmem>>, %arg2: memref<32x96xbf16, #tpu.memory_space<vmem>>, %arg3: memref<32x32xbf16, #tpu.memory_space<vmem>>, %arg4: memref<1x32xf32, #tpu.memory_space<vmem>>, %arg5: memref<1x32xf32, #tpu.memory_space<vmem>>, %arg6: memref<1x32xf32, #tpu.memory_space<vmem>>, %arg7: memref<1x32xf32, #tpu.memory_space<vmem>>, %arg8: memref<1x32xf32, #tpu.memory_space<vmem>>, %arg9: memref<32x128xbf16, #tpu.memory_space<vmem>>, %arg10: memref<1x128xf32, #tpu.memory_space<vmem>>, %arg11: memref<128x32xbf16, #tpu.memory_space<vmem>>, %arg12: memref<1x32xf32, #tpu.memory_space<vmem>>, %arg13: memref<1x8x32xf32, #tpu.memory_space<vmem>>, %arg14: memref<8x32xbf16, #tpu.memory_space<vmem>>) attributes {dimension_semantics = [#tpu.dimension_semantics<parallel>], iteration_bounds = array<i64: 2>, scalar_prefetch = 0 : i64, scratch_operands = 1 : i64, tpu.core_type = #tpu.core_type<tc>, window_params = [{transform_indices = @transform_0, window_bounds = array<i64: 1, 8, 32>}, {pipeline_mode = #tpu.pipeline_mode<synchronous>, transform_indices = @transform_1, window_bounds = array<i64: 32, 96>}, {pipeline_mode = #tpu.pipeline_mode<synchronous>, transform_indices = @transform_2, window_bounds = array<i64: 32, 32>}, {pipeline_mode = #tpu.pipeline_mode<synchronous>, transform_indices = @transform_3, window_bounds = array<i64: 1, 32>}, {pipeline_mode = #tpu.pipeline_mode<synchronous>, transform_indices = @transform_4, window_bounds = array<i64: 1, 32>}, {pipeline_mode = #tpu.pipeline_mode<synchronous>, transform_indices = @transform_5, window_bounds = array<i64: 1, 32>}, {pipeline_mode = #tpu.pipeline_mode<synchronous>, transform_indices = @transform_6, window_bounds = array<i64: 1, 32>}, {pipeline_mode = #tpu.pipeline_mode<synchronous>, transform_indices = @transform_7, window_bounds = array<i64: 1, 32>}, {pipeline_mode = #tpu.pipeline_mode<synchronous>, transform_indices = @transform_8, window_bounds = array<i64: 32, 128>}, {pipeline_mode = #tpu.pipeline_mode<synchronous>, transform_indices = @transform_9, window_bounds = array<i64: 1, 128>}, {pipeline_mode = #tpu.pipeline_mode<synchronous>, transform_indices = @transform_10, window_bounds = array<i64: 128, 32>}, {pipeline_mode = #tpu.pipeline_mode<synchronous>, transform_indices = @transform_11, window_bounds = array<i64: 1, 32>}, {transform_indices = @transform_12, window_bounds = array<i64: 1, 8, 32>}]} {
    %c0 = arith.constant 0 : index
    %c0_0 = arith.constant 0 : index
    %c0_1 = arith.constant 0 : index
    %0 = vector.load %arg1[%c0, %c0_0, %c0_1] : memref<1x8x32xf32, #tpu.memory_space<vmem>>, vector<1x8x32xf32>
    %1 = vector.shape_cast %0 : vector<1x8x32xf32> to vector<8x32xf32>
    %c0_2 = arith.constant 0 : index
    %c0_3 = arith.constant 0 : index
    %2 = vector.load %arg5[%c0_2, %c0_3] : memref<1x32xf32, #tpu.memory_space<vmem>>, vector<1x32xf32>
    %3 = vector.shape_cast %2 : vector<1x32xf32> to vector<32xf32>
    %c0_4 = arith.constant 0 : index
    %c0_5 = arith.constant 0 : index
    %4 = vector.load %arg6[%c0_4, %c0_5] : memref<1x32xf32, #tpu.memory_space<vmem>>, vector<1x32xf32>
    %5 = vector.shape_cast %4 : vector<1x32xf32> to vector<32xf32>
    %cst = arith.constant dense<0.000000e+00> : vector<8xf32>
    %6 = vector.multi_reduction <add>, %1, %cst [1] : vector<8x32xf32> to vector<8xf32>
    %7 = vector.shape_cast %6 : vector<8xf32> to vector<8x1xf32>
    %cst_6 = arith.constant 3.200000e+01 : f32
    %8 = vector.broadcast %cst_6 : f32 to vector<8x1xf32>
    %9 = arith.divf %7, %8 : vector<8x1xf32>
    %10 = vector.broadcast %9 : vector<8x1xf32> to vector<8x32xf32>
    %11 = arith.subf %1, %10 : vector<8x32xf32>
    %12 = arith.mulf %11, %11 : vector<8x32xf32>
    %cst_7 = arith.constant dense<0.000000e+00> : vector<8xf32>
    %13 = vector.multi_reduction <add>, %12, %cst_7 [1] : vector<8x32xf32> to vector<8xf32>
    %14 = vector.shape_cast %13 : vector<8xf32> to vector<8x1xf32>
    %cst_8 = arith.constant 3.200000e+01 : f32
    %15 = vector.broadcast %cst_8 : f32 to vector<8x1xf32>
    %16 = arith.divf %14, %15 : vector<8x1xf32>
    %17 = vector.broadcast %9 : vector<8x1xf32> to vector<8x32xf32>
    %18 = arith.subf %1, %17 : vector<8x32xf32>
    %cst_9 = arith.constant 9.99999974E-6 : f32
    %19 = vector.broadcast %cst_9 : f32 to vector<8x1xf32>
    %20 = arith.addf %16, %19 : vector<8x1xf32>
    %21 = math.rsqrt %20 : vector<8x1xf32>
    %22 = vector.broadcast %21 : vector<8x1xf32> to vector<8x32xf32>
    %23 = arith.mulf %18, %22 : vector<8x32xf32>
    %24 = vector.shape_cast %3 : vector<32xf32> to vector<1x32xf32>
    %25 = vector.broadcast %24 : vector<1x32xf32> to vector<8x32xf32>
    %26 = arith.mulf %23, %25 : vector<8x32xf32>
    %27 = vector.shape_cast %5 : vector<32xf32> to vector<1x32xf32>
    %28 = vector.broadcast %27 : vector<1x32xf32> to vector<8x32xf32>
    %29 = arith.addf %26, %28 : vector<8x32xf32>
    %30 = arith.truncf %29 : vector<8x32xf32> to vector<8x32xbf16>
    %c0_10 = arith.constant 0 : index
    %c0_11 = arith.constant 0 : index
    %31 = vector.load %arg2[%c0_10, %c0_11] : memref<32x96xbf16, #tpu.memory_space<vmem>>, vector<32x96xbf16>
    %cst_12 = arith.constant dense<0.000000e+00> : vector<8x96xf32>
    %32 = tpu.matmul %30, %31, %cst_12 {dimension_numbers = #tpu.dot_dimension_numbers<[1], [0], [0], [1], [0, 0, 1, 1], [], []>} : vector<8x32xbf16>, vector<32x96xbf16>, vector<8x96xf32> -> vector<8x96xf32>
    %33 = arith.truncf %32 : vector<8x96xf32> to vector<8x96xbf16>
    %34 = vector.extract_strided_slice %33 {offsets = [0, 0], sizes = [8, 8], strides = [1, 1]} : vector<8x96xbf16> to vector<8x8xbf16>
    %35 = vector.extract_strided_slice %33 {offsets = [0, 32], sizes = [8, 8], strides = [1, 1]} : vector<8x96xbf16> to vector<8x8xbf16>
    %36 = vector.extract_strided_slice %33 {offsets = [0, 64], sizes = [8, 8], strides = [1, 1]} : vector<8x96xbf16> to vector<8x8xbf16>
    %cst_13 = arith.constant dense<0.000000e+00> : vector<8x8xf32>
    %37 = tpu.matmul %34, %35, %cst_13 {dimension_numbers = #tpu.dot_dimension_numbers<[1], [1], [0], [0], [0, 0, 1, 0], [], []>} : vector<8x8xbf16>, vector<8x8xbf16>, vector<8x8xf32> -> vector<8x8xf32>
    %cst_14 = arith.constant dense<0xFF800000> : vector<8xf32>
    %38 = vector.multi_reduction <maximumf>, %37, %cst_14 [1] : vector<8x8xf32> to vector<8xf32>
    %39 = vector.shape_cast %38 : vector<8xf32> to vector<8x1xf32>
    %40 = vector.broadcast %39 : vector<8x1xf32> to vector<8x8xf32>
    %41 = arith.subf %37, %40 : vector<8x8xf32>
    %42 = math.exp %41 : vector<8x8xf32>
    %cst_15 = arith.constant dense<0.000000e+00> : vector<8xf32>
    %43 = vector.multi_reduction <add>, %42, %cst_15 [1] : vector<8x8xf32> to vector<8xf32>
    %44 = vector.shape_cast %43 : vector<8xf32> to vector<8x1xf32>
    %45 = tpu.reciprocal %44 {approx = true} : vector<8x1xf32> -> vector<8x1xf32>
    %46 = vector.broadcast %45 : vector<8x1xf32> to vector<8x8xf32>
    %47 = arith.mulf %42, %46 : vector<8x8xf32>
    %48 = arith.truncf %47 : vector<8x8xf32> to vector<8x8xbf16>
    %cst_16 = arith.constant dense<0.000000e+00> : vector<8x8xf32>
    %49 = tpu.matmul %48, %36, %cst_16 {dimension_numbers = #tpu.dot_dimension_numbers<[1], [0], [0], [1], [0, 0, 1, 1], [], []>} : vector<8x8xbf16>, vector<8x8xbf16>, vector<8x8xf32> -> vector<8x8xf32>
    %50 = arith.truncf %49 : vector<8x8xf32> to vector<8x8xbf16>
    %c0_17 = arith.constant 0 : index
    %c0_18 = arith.constant 0 : index
    %51 = vector.load %arg14[%c0_17, %c0_18] : memref<8x32xbf16, #tpu.memory_space<vmem>>, vector<8x8xbf16>
    tpu.vector_store %arg14[%c0_17, %c0_18], %50 {strides = array<i32>} : memref<8x32xbf16, #tpu.memory_space<vmem>>, vector<8x8xbf16>,
    %52 = vector.extract_strided_slice %33 {offsets = [0, 8], sizes = [8, 8], strides = [1, 1]} : vector<8x96xbf16> to vector<8x8xbf16>
    %53 = vector.extract_strided_slice %33 {offsets = [0, 40], sizes = [8, 8], strides = [1, 1]} : vector<8x96xbf16> to vector<8x8xbf16>
    %54 = vector.extract_strided_slice %33 {offsets = [0, 72], sizes = [8, 8], strides = [1, 1]} : vector<8x96xbf16> to vector<8x8xbf16>
    %cst_19 = arith.constant dense<0.000000e+00> : vector<8x8xf32>
    %55 = tpu.matmul %52, %53, %cst_19 {dimension_numbers = #tpu.dot_dimension_numbers<[1], [1], [0], [0], [0, 0, 1, 0], [], []>} : vector<8x8xbf16>, vector<8x8xbf16>, vector<8x8xf32> -> vector<8x8xf32>
    %cst_20 = arith.constant dense<0xFF800000> : vector<8xf32>
    %56 = vector.multi_reduction <maximumf>, %55, %cst_20 [1] : vector<8x8xf32> to vector<8xf32>
    %57 = vector.shape_cast %56 : vector<8xf32> to vector<8x1xf32>
    %58 = vector.broadcast %57 : vector<8x1xf32> to vector<8x8xf32>
    %59 = arith.subf %55, %58 : vector<8x8xf32>
    %60 = math.exp %59 : vector<8x8xf32>
    %cst_21 = arith.constant dense<0.000000e+00> : vector<8xf32>
    %61 = vector.multi_reduction <add>, %60, %cst_21 [1] : vector<8x8xf32> to vector<8xf32>
    %62 = vector.shape_cast %61 : vector<8xf32> to vector<8x1xf32>
    %63 = tpu.reciprocal %62 {approx = true} : vector<8x1xf32> -> vector<8x1xf32>
    %64 = vector.broadcast %63 : vector<8x1xf32> to vector<8x8xf32>
    %65 = arith.mulf %60, %64 : vector<8x8xf32>
    %66 = arith.truncf %65 : vector<8x8xf32> to vector<8x8xbf16>
    %cst_22 = arith.constant dense<0.000000e+00> : vector<8x8xf32>
    %67 = tpu.matmul %66, %54, %cst_22 {dimension_numbers = #tpu.dot_dimension_numbers<[1], [0], [0], [1], [0, 0, 1, 1], [], []>} : vector<8x8xbf16>, vector<8x8xbf16>, vector<8x8xf32> -> vector<8x8xf32>
    %68 = arith.truncf %67 : vector<8x8xf32> to vector<8x8xbf16>
    %c0_23 = arith.constant 0 : index
    %c8 = arith.constant 8 : index
    %69 = vector.load %arg14[%c0_23, %c8] : memref<8x32xbf16, #tpu.memory_space<vmem>>, vector<8x8xbf16>
    tpu.vector_store %arg14[%c0_23, %c8], %68 {strides = array<i32>} : memref<8x32xbf16, #tpu.memory_space<vmem>>, vector<8x8xbf16>,
    %70 = vector.extract_strided_slice %33 {offsets = [0, 16], sizes = [8, 8], strides = [1, 1]} : vector<8x96xbf16> to vector<8x8xbf16>
    %71 = vector.extract_strided_slice %33 {offsets = [0, 48], sizes = [8, 8], strides = [1, 1]} : vector<8x96xbf16> to vector<8x8xbf16>
    %72 = vector.extract_strided_slice %33 {offsets = [0, 80], sizes = [8, 8], strides = [1, 1]} : vector<8x96xbf16> to vector<8x8xbf16>
    %cst_24 = arith.constant dense<0.000000e+00> : vector<8x8xf32>
    %73 = tpu.matmul %70, %71, %cst_24 {dimension_numbers = #tpu.dot_dimension_numbers<[1], [1], [0], [0], [0, 0, 1, 0], [], []>} : vector<8x8xbf16>, vector<8x8xbf16>, vector<8x8xf32> -> vector<8x8xf32>
    %cst_25 = arith.constant dense<0xFF800000> : vector<8xf32>
    %74 = vector.multi_reduction <maximumf>, %73, %cst_25 [1] : vector<8x8xf32> to vector<8xf32>
    %75 = vector.shape_cast %74 : vector<8xf32> to vector<8x1xf32>
    %76 = vector.broadcast %75 : vector<8x1xf32> to vector<8x8xf32>
    %77 = arith.subf %73, %76 : vector<8x8xf32>
    %78 = math.exp %77 : vector<8x8xf32>
    %cst_26 = arith.constant dense<0.000000e+00> : vector<8xf32>
    %79 = vector.multi_reduction <add>, %78, %cst_26 [1] : vector<8x8xf32> to vector<8xf32>
    %80 = vector.shape_cast %79 : vector<8xf32> to vector<8x1xf32>
    %81 = tpu.reciprocal %80 {approx = true} : vector<8x1xf32> -> vector<8x1xf32>
    %82 = vector.broadcast %81 : vector<8x1xf32> to vector<8x8xf32>
    %83 = arith.mulf %78, %82 : vector<8x8xf32>
    %84 = arith.truncf %83 : vector<8x8xf32> to vector<8x8xbf16>
    %cst_27 = arith.constant dense<0.000000e+00> : vector<8x8xf32>
    %85 = tpu.matmul %84, %72, %cst_27 {dimension_numbers = #tpu.dot_dimension_numbers<[1], [0], [0], [1], [0, 0, 1, 1], [], []>} : vector<8x8xbf16>, vector<8x8xbf16>, vector<8x8xf32> -> vector<8x8xf32>
    %86 = arith.truncf %85 : vector<8x8xf32> to vector<8x8xbf16>
    %c0_28 = arith.constant 0 : index
    %c16 = arith.constant 16 : index
    %87 = vector.load %arg14[%c0_28, %c16] : memref<8x32xbf16, #tpu.memory_space<vmem>>, vector<8x8xbf16>
    tpu.vector_store %arg14[%c0_28, %c16], %86 {strides = array<i32>} : memref<8x32xbf16, #tpu.memory_space<vmem>>, vector<8x8xbf16>,
    %88 = vector.extract_strided_slice %33 {offsets = [0, 24], sizes = [8, 8], strides = [1, 1]} : vector<8x96xbf16> to vector<8x8xbf16>
    %89 = vector.extract_strided_slice %33 {offsets = [0, 56], sizes = [8, 8], strides = [1, 1]} : vector<8x96xbf16> to vector<8x8xbf16>
    %90 = vector.extract_strided_slice %33 {offsets = [0, 88], sizes = [8, 8], strides = [1, 1]} : vector<8x96xbf16> to vector<8x8xbf16>
    %cst_29 = arith.constant dense<0.000000e+00> : vector<8x8xf32>
    %91 = tpu.matmul %88, %89, %cst_29 {dimension_numbers = #tpu.dot_dimension_numbers<[1], [1], [0], [0], [0, 0, 1, 0], [], []>} : vector<8x8xbf16>, vector<8x8xbf16>, vector<8x8xf32> -> vector<8x8xf32>
    %cst_30 = arith.constant dense<0xFF800000> : vector<8xf32>
    %92 = vector.multi_reduction <maximumf>, %91, %cst_30 [1] : vector<8x8xf32> to vector<8xf32>
    %93 = vector.shape_cast %92 : vector<8xf32> to vector<8x1xf32>
    %94 = vector.broadcast %93 : vector<8x1xf32> to vector<8x8xf32>
    %95 = arith.subf %91, %94 : vector<8x8xf32>
    %96 = math.exp %95 : vector<8x8xf32>
    %cst_31 = arith.constant dense<0.000000e+00> : vector<8xf32>
    %97 = vector.multi_reduction <add>, %96, %cst_31 [1] : vector<8x8xf32> to vector<8xf32>
    %98 = vector.shape_cast %97 : vector<8xf32> to vector<8x1xf32>
    %99 = tpu.reciprocal %98 {approx = true} : vector<8x1xf32> -> vector<8x1xf32>
    %100 = vector.broadcast %99 : vector<8x1xf32> to vector<8x8xf32>
    %101 = arith.mulf %96, %100 : vector<8x8xf32>
    %102 = arith.truncf %101 : vector<8x8xf32> to vector<8x8xbf16>
    %cst_32 = arith.constant dense<0.000000e+00> : vector<8x8xf32>
    %103 = tpu.matmul %102, %90, %cst_32 {dimension_numbers = #tpu.dot_dimension_numbers<[1], [0], [0], [1], [0, 0, 1, 1], [], []>} : vector<8x8xbf16>, vector<8x8xbf16>, vector<8x8xf32> -> vector<8x8xf32>
    %104 = arith.truncf %103 : vector<8x8xf32> to vector<8x8xbf16>
    %c0_33 = arith.constant 0 : index
    %c24 = arith.constant 24 : index
    %105 = vector.load %arg14[%c0_33, %c24] : memref<8x32xbf16, #tpu.memory_space<vmem>>, vector<8x8xbf16>
    tpu.vector_store %arg14[%c0_33, %c24], %104 {strides = array<i32>} : memref<8x32xbf16, #tpu.memory_space<vmem>>, vector<8x8xbf16>,
    %c0_34 = arith.constant 0 : index
    %c0_35 = arith.constant 0 : index
    %106 = vector.load %arg14[%c0_34, %c0_35] : memref<8x32xbf16, #tpu.memory_space<vmem>>, vector<8x32xbf16>
    %c0_36 = arith.constant 0 : index
    %c0_37 = arith.constant 0 : index
    %107 = vector.load %arg3[%c0_36, %c0_37] : memref<32x32xbf16, #tpu.memory_space<vmem>>, vector<32x32xbf16>
    %cst_38 = arith.constant dense<0.000000e+00> : vector<8x32xf32>
    %108 = tpu.matmul %106, %107, %cst_38 {dimension_numbers = #tpu.dot_dimension_numbers<[1], [0], [0], [1], [0, 0, 1, 1], [], []>} : vector<8x32xbf16>, vector<32x32xbf16>, vector<8x32xf32> -> vector<8x32xf32>
    %109 = arith.addf %1, %108 : vector<8x32xf32>
    %c0_39 = arith.constant 0 : index
    %c0_40 = arith.constant 0 : index
    %110 = vector.load %arg4[%c0_39, %c0_40] : memref<1x32xf32, #tpu.memory_space<vmem>>, vector<1x32xf32>
    %111 = vector.shape_cast %110 : vector<1x32xf32> to vector<32xf32>
    %112 = vector.shape_cast %111 : vector<32xf32> to vector<1x32xf32>
    %113 = vector.broadcast %112 : vector<1x32xf32> to vector<8x32xf32>
    %114 = arith.addf %109, %113 : vector<8x32xf32>
    %c0_41 = arith.constant 0 : index
    %c0_42 = arith.constant 0 : index
    %115 = vector.load %arg7[%c0_41, %c0_42] : memref<1x32xf32, #tpu.memory_space<vmem>>, vector<1x32xf32>
    %116 = vector.shape_cast %115 : vector<1x32xf32> to vector<32xf32>
    %c0_43 = arith.constant 0 : index
    %c0_44 = arith.constant 0 : index
    %117 = vector.load %arg8[%c0_43, %c0_44] : memref<1x32xf32, #tpu.memory_space<vmem>>, vector<1x32xf32>
    %118 = vector.shape_cast %117 : vector<1x32xf32> to vector<32xf32>
    %cst_45 = arith.constant dense<0.000000e+00> : vector<8xf32>
    %119 = vector.multi_reduction <add>, %114, %cst_45 [1] : vector<8x32xf32> to vector<8xf32>
    %120 = vector.shape_cast %119 : vector<8xf32> to vector<8x1xf32>
    %cst_46 = arith.constant 3.200000e+01 : f32
    %121 = vector.broadcast %cst_46 : f32 to vector<8x1xf32>
    %122 = arith.divf %120, %121 : vector<8x1xf32>
    %123 = vector.broadcast %122 : vector<8x1xf32> to vector<8x32xf32>
    %124 = arith.subf %114, %123 : vector<8x32xf32>
    %125 = arith.mulf %124, %124 : vector<8x32xf32>
    %cst_47 = arith.constant dense<0.000000e+00> : vector<8xf32>
    %126 = vector.multi_reduction <add>, %125, %cst_47 [1] : vector<8x32xf32> to vector<8xf32>
    %127 = vector.shape_cast %126 : vector<8xf32> to vector<8x1xf32>
    %cst_48 = arith.constant 3.200000e+01 : f32
    %128 = vector.broadcast %cst_48 : f32 to vector<8x1xf32>
    %129 = arith.divf %127, %128 : vector<8x1xf32>
    %130 = vector.broadcast %122 : vector<8x1xf32> to vector<8x32xf32>
    %131 = arith.subf %114, %130 : vector<8x32xf32>
    %cst_49 = arith.constant 9.99999974E-6 : f32
    %132 = vector.broadcast %cst_49 : f32 to vector<8x1xf32>
    %133 = arith.addf %129, %132 : vector<8x1xf32>
    %134 = math.rsqrt %133 : vector<8x1xf32>
    %135 = vector.broadcast %134 : vector<8x1xf32> to vector<8x32xf32>
    %136 = arith.mulf %131, %135 : vector<8x32xf32>
    %137 = vector.shape_cast %116 : vector<32xf32> to vector<1x32xf32>
    %138 = vector.broadcast %137 : vector<1x32xf32> to vector<8x32xf32>
    %139 = arith.mulf %136, %138 : vector<8x32xf32>
    %140 = vector.shape_cast %118 : vector<32xf32> to vector<1x32xf32>
    %141 = vector.broadcast %140 : vector<1x32xf32> to vector<8x32xf32>
    %142 = arith.addf %139, %141 : vector<8x32xf32>
    %143 = arith.truncf %142 : vector<8x32xf32> to vector<8x32xbf16>
    %c0_50 = arith.constant 0 : index
    %c0_51 = arith.constant 0 : index
    %144 = vector.load %arg9[%c0_50, %c0_51] : memref<32x128xbf16, #tpu.memory_space<vmem>>, vector<32x128xbf16>
    %cst_52 = arith.constant dense<0.000000e+00> : vector<8x128xf32>
    %145 = tpu.matmul %143, %144, %cst_52 {dimension_numbers = #tpu.dot_dimension_numbers<[1], [0], [0], [1], [0, 0, 1, 1], [], []>} : vector<8x32xbf16>, vector<32x128xbf16>, vector<8x128xf32> -> vector<8x128xf32>
    %c0_53 = arith.constant 0 : index
    %c0_54 = arith.constant 0 : index
    %146 = vector.load %arg10[%c0_53, %c0_54] : memref<1x128xf32, #tpu.memory_space<vmem>>, vector<1x128xf32>
    %147 = vector.shape_cast %146 : vector<1x128xf32> to vector<128xf32>
    %148 = vector.shape_cast %147 : vector<128xf32> to vector<1x128xf32>
    %149 = vector.broadcast %148 : vector<1x128xf32> to vector<8x128xf32>
    %150 = arith.addf %145, %149 : vector<8x128xf32>
    %cst_55 = arith.constant 5.000000e-01 : f32
    %151 = vector.broadcast %cst_55 : f32 to vector<8x128xf32>
    %152 = arith.mulf %151, %150 : vector<8x128xf32>
    %cst_56 = arith.constant 4.471500e-02 : f32
    %153 = vector.broadcast %cst_56 : f32 to vector<8x128xf32>
    %154 = arith.mulf %153, %150 : vector<8x128xf32>
    %155 = arith.mulf %154, %150 : vector<8x128xf32>
    %156 = arith.mulf %155, %150 : vector<8x128xf32>
    %157 = arith.addf %150, %156 : vector<8x128xf32>
    %cst_57 = arith.constant 0.797884583 : f32
    %158 = vector.broadcast %cst_57 : f32 to vector<8x128xf32>
    %159 = arith.mulf %158, %157 : vector<8x128xf32>
    %160 = math.tanh %159 : vector<8x128xf32>
    %cst_58 = arith.constant 1.000000e+00 : f32
    %161 = vector.broadcast %cst_58 : f32 to vector<8x128xf32>
    %162 = arith.addf %161, %160 : vector<8x128xf32>
    %163 = arith.mulf %152, %162 : vector<8x128xf32>
    %164 = arith.truncf %163 : vector<8x128xf32> to vector<8x128xbf16>
    %c0_59 = arith.constant 0 : index
    %c0_60 = arith.constant 0 : index
    %165 = vector.load %arg11[%c0_59, %c0_60] : memref<128x32xbf16, #tpu.memory_space<vmem>>, vector<128x32xbf16>
    %cst_61 = arith.constant dense<0.000000e+00> : vector<8x32xf32>
    %166 = tpu.matmul %164, %165, %cst_61 {dimension_numbers = #tpu.dot_dimension_numbers<[1], [0], [0], [1], [0, 0, 1, 1], [], []>} : vector<8x128xbf16>, vector<128x32xbf16>, vector<8x32xf32> -> vector<8x32xf32>
    %c0_62 = arith.constant 0 : index
    %c0_63 = arith.constant 0 : index
    %167 = vector.load %arg12[%c0_62, %c0_63] : memref<1x32xf32, #tpu.memory_space<vmem>>, vector<1x32xf32>
    %168 = vector.shape_cast %167 : vector<1x32xf32> to vector<32xf32>
    %169 = vector.shape_cast %168 : vector<32xf32> to vector<1x32xf32>
    %170 = vector.broadcast %169 : vector<1x32xf32> to vector<8x32xf32>
    %171 = arith.addf %166, %170 : vector<8x32xf32>
    %172 = arith.addf %114, %171 : vector<8x32xf32>
    %c0_64 = arith.constant 0 : index
    %c0_65 = arith.constant 0 : index
    %c0_66 = arith.constant 0 : index
    %173 = vector.load %arg13[%c0_64, %c0_65, %c0_66] : memref<1x8x32xf32, #tpu.memory_space<vmem>>, vector<1x8x32xf32>
    %174 = vector.shape_cast %173 : vector<1x8x32xf32> to vector<8x32xf32>
    %175 = vector.shape_cast %172 : vector<8x32xf32> to vector<1x8x32xf32>
    tpu.vector_store %arg13[%c0_64, %c0_65, %c0_66], %175 {strides = array<i32>} : memref<1x8x32xf32, #tpu.memory_space<vmem>>, vector<1x8x32xf32>,
    return
  }
  func.func @transform_0(%arg0: i32) -> (i32, i32, i32) {
    %c0_i32 = arith.constant 0 : i32
    %c0_i32_0 = arith.constant 0 : i32
    %c0_i32_1 = arith.constant 0 : i32
    return %arg0, %c0_i32, %c0_i32_0 : i32, i32, i32
  }
  func.func @transform_1(%arg0: i32) -> (i32, i32) {
    %c0_i32 = arith.constant 0 : i32
    %c0_i32_0 = arith.constant 0 : i32
    %c0_i32_1 = arith.constant 0 : i32
    return %c0_i32, %c0_i32_0 : i32, i32
  }
  func.func @transform_2(%arg0: i32) -> (i32, i32) {
    %c0_i32 = arith.constant 0 : i32
    %c0_i32_0 = arith.constant 0 : i32
    %c0_i32_1 = arith.constant 0 : i32
    return %c0_i32, %c0_i32_0 : i32, i32
  }
  func.func @transform_3(%arg0: i32) -> (i32, i32) {
    %c0_i32 = arith.constant 0 : i32
    %c0_i32_0 = arith.constant 0 : i32
    %c0_i32_1 = arith.constant 0 : i32
    return %c0_i32, %c0_i32_0 : i32, i32
  }
  func.func @transform_4(%arg0: i32) -> (i32, i32) {
    %c0_i32 = arith.constant 0 : i32
    %c0_i32_0 = arith.constant 0 : i32
    %c0_i32_1 = arith.constant 0 : i32
    return %c0_i32, %c0_i32_0 : i32, i32
  }
  func.func @transform_5(%arg0: i32) -> (i32, i32) {
    %c0_i32 = arith.constant 0 : i32
    %c0_i32_0 = arith.constant 0 : i32
    %c0_i32_1 = arith.constant 0 : i32
    return %c0_i32, %c0_i32_0 : i32, i32
  }
  func.func @transform_6(%arg0: i32) -> (i32, i32) {
    %c0_i32 = arith.constant 0 : i32
    %c0_i32_0 = arith.constant 0 : i32
    %c0_i32_1 = arith.constant 0 : i32
    return %c0_i32, %c0_i32_0 : i32, i32
  }
  func.func @transform_7(%arg0: i32) -> (i32, i32) {
    %c0_i32 = arith.constant 0 : i32
    %c0_i32_0 = arith.constant 0 : i32
    %c0_i32_1 = arith.constant 0 : i32
    return %c0_i32, %c0_i32_0 : i32, i32
  }
  func.func @transform_8(%arg0: i32) -> (i32, i32) {
    %c0_i32 = arith.constant 0 : i32
    %c0_i32_0 = arith.constant 0 : i32
    %c0_i32_1 = arith.constant 0 : i32
    return %c0_i32, %c0_i32_0 : i32, i32
  }
  func.func @transform_9(%arg0: i32) -> (i32, i32) {
    %c0_i32 = arith.constant 0 : i32
    %c0_i32_0 = arith.constant 0 : i32
    %c0_i32_1 = arith.constant 0 : i32
    return %c0_i32, %c0_i32_0 : i32, i32
  }
  func.func @transform_10(%arg0: i32) -> (i32, i32) {
    %c0_i32 = arith.constant 0 : i32
    %c0_i32_0 = arith.constant 0 : i32
    %c0_i32_1 = arith.constant 0 : i32
    return %c0_i32, %c0_i32_0 : i32, i32
  }
  func.func @transform_11(%arg0: i32) -> (i32, i32) {
    %c0_i32 = arith.constant 0 : i32
    %c0_i32_0 = arith.constant 0 : i32
    %c0_i32_1 = arith.constant 0 : i32
    return %c0_i32, %c0_i32_0 : i32, i32
  }
  func.func @transform_12(%arg0: i32) -> (i32, i32, i32) {
    %c0_i32 = arith.constant 0 : i32
    %c0_i32_0 = arith.constant 0 : i32
    %c0_i32_1 = arith.constant 0 : i32
    return %arg0, %c0_i32, %c0_i32_0 : i32, i32, i32
  }
}

</mosaic_0001>

<llo_original>
// kernel: tpu_custom_call.1
$region0: #{tpu_custom_call.1}
  #allocation0 [shape = 'u32[]', space=smem, size = 0x4, offset = 0x4, fixed_abs, tag = 'smem constant byte address 0x4 - core index']
  #allocation1 [shape = 'u32[144,128]{1,0:T(1,128)}', space=vmem, size = 0x12000, scoped, tag = 'internal scratch']
  #allocation2 [shape = 'bf16[8,32]{1,0:T(8,128)(2,1)}', space=vmem, size = 0x800, scoped, tag = 'scratch operand']
  %s0 = inlined_call_operand.vmem [shape: f32[2,8,32], index: 0, kind: input, shape index: {}]
  %s1 = inlined_call_operand.vmem [shape: bf16[32,96], index: 1, kind: input, shape index: {}]
  %s2 = inlined_call_operand.vmem [shape: bf16[32,32], index: 2, kind: input, shape index: {}]
  %s3 = inlined_call_operand.vmem [shape: f32[1,32], index: 3, kind: input, shape index: {}]
  %s4 = inlined_call_operand.vmem [shape: f32[1,32], index: 4, kind: input, shape index: {}]
  %s5 = inlined_call_operand.vmem [shape: f32[1,32], index: 5, kind: input, shape index: {}]
  %s6 = inlined_call_operand.vmem [shape: f32[1,32], index: 6, kind: input, shape index: {}]
  %s7 = inlined_call_operand.vmem [shape: f32[1,32], index: 7, kind: input, shape index: {}]
  %s8 = inlined_call_operand.vmem [shape: bf16[32,128], index: 8, kind: input, shape index: {}]
  %s9 = inlined_call_operand.vmem [shape: f32[1,128], index: 9, kind: input, shape index: {}]
  %s10 = inlined_call_operand.vmem [shape: bf16[128,32], index: 10, kind: input, shape index: {}]
  %s11 = inlined_call_operand.vmem [shape: f32[1,32], index: 11, kind: input, shape index: {}]
  %s12 = inlined_call_operand.hbm [shape: f32[2,8,32], index: 12, kind: output, shape index: {}]
  %s13 = sld [smem:[#allocation0]]
  $region81: #{tpu_custom_call.1} parent=0
    _
  %s15 = ssub.s32 1, %s13
  %s16 = scalar_select 0, %s15, %s13
  $region1: #{tpu_custom_call.1} parent=0
    #allocation3 [shape = 'u8[8192]{0}', space=vmem, size = 0x2000, scoped, tag = 'output window, operand 0']
    #allocation4 [shape = 's32[2]{0}', space=sflag, size = 0x8, scoped, tag = 'scoped memory for tpu_custom_call.1']
    %17 = vsyncpa [#allocation4], 0
    %s18 = scalar_lea.sflag [#allocation4], 1
    %19 = vsyncpa %s18, 0
    loop: start=0, step=1, limit=4
    $region2: #{tpu_custom_call.1} parent=1 // loop_pre_header
      _
    $region3: #{tpu_custom_call.1} parent=1 // loop_header
      %s21 = sphi 0, %s25
      %p22 = scmp.ge.s32.totalorder %s21, 4
      %s31 = sphi 0, %s33
      %s34 = sphi 0, %s31
      %s35 = sphi 0, %s34
      %s51 = sphi 0, %s35
      %s55 = sphi 0, %s55
      %s57 = sphi 0, %s55
      %s58 = sphi 0, %s57
      %s72 = sphi 0, %s58
      %s76 = sphi 0, %s76
      %s78 = sphi 0, %s76
      %s79 = sphi 0, %s78
      %s93 = sphi 0, %s79
      %s97 = sphi 0, %s97
      %s99 = sphi 0, %s97
      %s100 = sphi 0, %s99
      %s114 = sphi 0, %s100
      %s118 = sphi 0, %s118
      %s120 = sphi 0, %s118
      %s121 = sphi 0, %s120
      %s135 = sphi 0, %s121
      %s139 = sphi 0, %s139
      %s141 = sphi 0, %s139
      %s142 = sphi 0, %s141
      %s156 = sphi 0, %s142
      %s160 = sphi 0, %s160
      %s162 = sphi 0, %s160
      %s163 = sphi 0, %s162
      %s177 = sphi 0, %s163
      %s181 = sphi 0, %s181
      %s183 = sphi 0, %s181
      %s184 = sphi 0, %s183
      %s198 = sphi 0, %s184
      %s202 = sphi 0, %s202
      %s204 = sphi 0, %s202
      %s205 = sphi 0, %s204
      %s219 = sphi 0, %s205
      %s223 = sphi 0, %s223
      %s225 = sphi 0, %s223
      %s226 = sphi 0, %s225
      %s240 = sphi 0, %s226
      %s244 = sphi 0, %s244
      %s246 = sphi 0, %s244
      %s247 = sphi 0, %s246
      %s261 = sphi 0, %s247
      %s265 = sphi 0, %s265
      %s267 = sphi 0, %s265
      %s268 = sphi 0, %s267
      %s282 = sphi 0, %s268
      %s288 = sphi 0, %s290
      %s291 = sphi 0, %s288
      %s292 = sphi 0, %s291
      %s308 = sphi 0, %s292
    $region4: #{tpu_custom_call.1} parent=1 // loop_header_branch
      %24 = sbr.rel (%p22) target = $region8
    $region5: #{tpu_custom_call.1} parent=1 // loop_body
      %s26 = ssub.s32 %s21, 1
      %s27 = ssub.s32 %s21, 2
      %s28 = sadd.s32 %s21, 1
      %s29 = ssub.s32 %s21, %s28
      %p30 = scmp.eq.s32.totalorder %s29, 0
      %s32 = sadd.s32 %s31, 1
      %s33 = scalar_select %p30, %s31, %s32
      %p36 = pneg %p30
      %p37 = scmp.eq.s32.totalorder %s21, 1
      %p38 = por %p36, %p37
      %p39 = scmp.ne.s32.totalorder %s31, %s34
      %p40 = scmp.eq.s32.totalorder %s21, 0
      %p41 = por %p39, %p40
      %p42 = scmp.ne.s32.totalorder %s31, %s34
      %p43 = scmp.eq.s32.totalorder %s26, 1
      %p44 = por %p42, %p43
      %p45 = scmp.ne.s32.totalorder %s34, %s35
      %p46 = scmp.eq.s32.totalorder %s26, 0
      %p47 = por %p45, %p46
      %p48 = scmp.ne.s32.totalorder %s34, %s35
      %p49 = scmp.eq.s32.totalorder %s27, 1
      %p50 = por %p48, %p49
      %p52 = scmp.ne.s32.totalorder %s35, %s51
      %p53 = scmp.eq.s32.totalorder %s27, 0
      %p54 = por %p52, %p53
      %s56 = sadd.s32 %s55, 1
      %p59 = scmp.eq.s32.totalorder %s21, 1
      %p60 = scmp.ne.s32.totalorder %s55, %s57
      %p61 = scmp.eq.s32.totalorder %s21, 0
      %p62 = por %p60, %p61
      %p63 = scmp.ne.s32.totalorder %s55, %s57
      %p64 = scmp.eq.s32.totalorder %s26, 1
      %p65 = por %p63, %p64
      %p66 = scmp.ne.s32.totalorder %s57, %s58
      %p67 = scmp.eq.s32.totalorder %s26, 0
      %p68 = por %p66, %p67
      %p69 = scmp.ne.s32.totalorder %s57, %s58
      %p70 = scmp.eq.s32.totalorder %s27, 1
      %p71 = por %p69, %p70
      %p73 = scmp.ne.s32.totalorder %s58, %s72
      %p74 = scmp.eq.s32.totalorder %s27, 0
      %p75 = por %p73, %p74
      %s77 = sadd.s32 %s76, 1
      %p80 = scmp.eq.s32.totalorder %s21, 1
      %p81 = scmp.ne.s32.totalorder %s76, %s78
      %p82 = scmp.eq.s32.totalorder %s21, 0
      %p83 = por %p81, %p82
      %p84 = scmp.ne.s32.totalorder %s76, %s78
      %p85 = scmp.eq.s32.totalorder %s26, 1
      %p86 = por %p84, %p85
      %p87 = scmp.ne.s32.totalorder %s78, %s79
      %p88 = scmp.eq.s32.totalorder %s26, 0
      %p89 = por %p87, %p88
      %p90 = scmp.ne.s32.totalorder %s78, %s79
      %p91 = scmp.eq.s32.totalorder %s27, 1
      %p92 = por %p90, %p91
      %p94 = scmp.ne.s32.totalorder %s79, %s93
      %p95 = scmp.eq.s32.totalorder %s27, 0
      %p96 = por %p94, %p95
      %s98 = sadd.s32 %s97, 1
      %p101 = scmp.eq.s32.totalorder %s21, 1
      %p102 = scmp.ne.s32.totalorder %s97, %s99
      %p103 = scmp.eq.s32.totalorder %s21, 0
      %p104 = por %p102, %p103
      %p105 = scmp.ne.s32.totalorder %s97, %s99
      %p106 = scmp.eq.s32.totalorder %s26, 1
      %p107 = por %p105, %p106
      %p108 = scmp.ne.s32.totalorder %s99, %s100
      %p109 = scmp.eq.s32.totalorder %s26, 0
      %p110 = por %p108, %p109
      %p111 = scmp.ne.s32.totalorder %s99, %s100
      %p112 = scmp.eq.s32.totalorder %s27, 1
      %p113 = por %p111, %p112
      %p115 = scmp.ne.s32.totalorder %s100, %s114
      %p116 = scmp.eq.s32.totalorder %s27, 0
      %p117 = por %p115, %p116
      %s119 = sadd.s32 %s118, 1
      %p122 = scmp.eq.s32.totalorder %s21, 1
      %p123 = scmp.ne.s32.totalorder %s118, %s120
      %p124 = scmp.eq.s32.totalorder %s21, 0
      %p125 = por %p123, %p124
      %p126 = scmp.ne.s32.totalorder %s118, %s120
      %p127 = scmp.eq.s32.totalorder %s26, 1
      %p128 = por %p126, %p127
      %p129 = scmp.ne.s32.totalorder %s120, %s121
      %p130 = scmp.eq.s32.totalorder %s26, 0
      %p131 = por %p129, %p130
      %p132 = scmp.ne.s32.totalorder %s120, %s121
      %p133 = scmp.eq.s32.totalorder %s27, 1
      %p134 = por %p132, %p133
      %p136 = scmp.ne.s32.totalorder %s121, %s135
      %p137 = scmp.eq.s32.totalorder %s27, 0
      %p138 = por %p136, %p137
      %s140 = sadd.s32 %s139, 1
      %p143 = scmp.eq.s32.totalorder %s21, 1
      %p144 = scmp.ne.s32.totalorder %s139, %s141
      %p145 = scmp.eq.s32.totalorder %s21, 0
      %p146 = por %p144, %p145
      %p147 = scmp.ne.s32.totalorder %s139, %s141
      %p148 = scmp.eq.s32.totalorder %s26, 1
      %p149 = por %p147, %p148
      %p150 = scmp.ne.s32.totalorder %s141, %s142
      %p151 = scmp.eq.s32.totalorder %s26, 0
      %p152 = por %p150, %p151
      %p153 = scmp.ne.s32.totalorder %s141, %s142
      %p154 = scmp.eq.s32.totalorder %s27, 1
      %p155 = por %p153, %p154
      %p157 = scmp.ne.s32.totalorder %s142, %s156
      %p158 = scmp.eq.s32.totalorder %s27, 0
      %p159 = por %p157, %p158
      %s161 = sadd.s32 %s160, 1
      %p164 = scmp.eq.s32.totalorder %s21, 1
      %p165 = scmp.ne.s32.totalorder %s160, %s162
      %p166 = scmp.eq.s32.totalorder %s21, 0
      %p167 = por %p165, %p166
      %p168 = scmp.ne.s32.totalorder %s160, %s162
      %p169 = scmp.eq.s32.totalorder %s26, 1
      %p170 = por %p168, %p169
      %p171 = scmp.ne.s32.totalorder %s162, %s163
      %p172 = scmp.eq.s32.totalorder %s26, 0
      %p173 = por %p171, %p172
      %p174 = scmp.ne.s32.totalorder %s162, %s163
      %p175 = scmp.eq.s32.totalorder %s27, 1
      %p176 = por %p174, %p175
      %p178 = scmp.ne.s32.totalorder %s163, %s177
      %p179 = scmp.eq.s32.totalorder %s27, 0
      %p180 = por %p178, %p179
      %s182 = sadd.s32 %s181, 1
      %p185 = scmp.eq.s32.totalorder %s21, 1
      %p186 = scmp.ne.s32.totalorder %s181, %s183
      %p187 = scmp.eq.s32.totalorder %s21, 0
      %p188 = por %p186, %p187
      %p189 = scmp.ne.s32.totalorder %s181, %s183
      %p190 = scmp.eq.s32.totalorder %s26, 1
      %p191 = por %p189, %p190
      %p192 = scmp.ne.s32.totalorder %s183, %s184
      %p193 = scmp.eq.s32.totalorder %s26, 0
      %p194 = por %p192, %p193
      %p195 = scmp.ne.s32.totalorder %s183, %s184
      %p196 = scmp.eq.s32.totalorder %s27, 1
      %p197 = por %p195, %p196
      %p199 = scmp.ne.s32.totalorder %s184, %s198
      %p200 = scmp.eq.s32.totalorder %s27, 0
      %p201 = por %p199, %p200
      %s203 = sadd.s32 %s202, 1
      %p206 = scmp.eq.s32.totalorder %s21, 1
      %p207 = scmp.ne.s32.totalorder %s202, %s204
      %p208 = scmp.eq.s32.totalorder %s21, 0
      %p209 = por %p207, %p208
      %p210 = scmp.ne.s32.totalorder %s202, %s204
      %p211 = scmp.eq.s32.totalorder %s26, 1
      %p212 = por %p210, %p211
      %p213 = scmp.ne.s32.totalorder %s204, %s205
      %p214 = scmp.eq.s32.totalorder %s26, 0
      %p215 = por %p213, %p214
      %p216 = scmp.ne.s32.totalorder %s204, %s205
      %p217 = scmp.eq.s32.totalorder %s27, 1
      %p218 = por %p216, %p217
      %p220 = scmp.ne.s32.totalorder %s205, %s219
      %p221 = scmp.eq.s32.totalorder %s27, 0
      %p222 = por %p220, %p221
      %s224 = sadd.s32 %s223, 1
      %p227 = scmp.eq.s32.totalorder %s21, 1
      %p228 = scmp.ne.s32.totalorder %s223, %s225
      %p229 = scmp.eq.s32.totalorder %s21, 0
      %p230 = por %p228, %p229
      %p231 = scmp.ne.s32.totalorder %s223, %s225
      %p232 = scmp.eq.s32.totalorder %s26, 1
      %p233 = por %p231, %p232
      %p234 = scmp.ne.s32.totalorder %s225, %s226
      %p235 = scmp.eq.s32.totalorder %s26, 0
      %p236 = por %p234, %p235
      %p237 = scmp.ne.s32.totalorder %s225, %s226
      %p238 = scmp.eq.s32.totalorder %s27, 1
      %p239 = por %p237, %p238
      %p241 = scmp.ne.s32.totalorder %s226, %s240
      %p242 = scmp.eq.s32.totalorder %s27, 0
      %p243 = por %p241, %p242
      %s245 = sadd.s32 %s244, 1
      %p248 = scmp.eq.s32.totalorder %s21, 1
      %p249 = scmp.ne.s32.totalorder %s244, %s246
      %p250 = scmp.eq.s32.totalorder %s21, 0
      %p251 = por %p249, %p250
      %p252 = scmp.ne.s32.totalorder %s244, %s246
      %p253 = scmp.eq.s32.totalorder %s26, 1
      %p254 = por %p252, %p253
      %p255 = scmp.ne.s32.totalorder %s246, %s247
      %p256 = scmp.eq.s32.totalorder %s26, 0
      %p257 = por %p255, %p256
      %p258 = scmp.ne.s32.totalorder %s246, %s247
      %p259 = scmp.eq.s32.totalorder %s27, 1
      %p260 = por %p258, %p259
      %p262 = scmp.ne.s32.totalorder %s247, %s261
      %p263 = scmp.eq.s32.totalorder %s27, 0
      %p264 = por %p262, %p263
      %s266 = sadd.s32 %s265, 1
      %p269 = scmp.eq.s32.totalorder %s21, 1
      %p270 = scmp.ne.s32.totalorder %s265, %s267
      %p271 = scmp.eq.s32.totalorder %s21, 0
      %p272 = por %p270, %p271
      %p273 = scmp.ne.s32.totalorder %s265, %s267
      %p274 = scmp.eq.s32.totalorder %s26, 1
      %p275 = por %p273, %p274
      %p276 = scmp.ne.s32.totalorder %s267, %s268
      %p277 = scmp.eq.s32.totalorder %s26, 0
      %p278 = por %p276, %p277
      %p279 = scmp.ne.s32.totalorder %s267, %s268
      %p280 = scmp.eq.s32.totalorder %s27, 1
      %p281 = por %p279, %p280
      %p283 = scmp.ne.s32.totalorder %s268, %s282
      %p284 = scmp.eq.s32.totalorder %s27, 0
      %p285 = por %p283, %p284
      %s286 = ssub.s32 %s21, %s28
      %p287 = scmp.eq.s32.totalorder %s286, 0
      %s289 = sadd.s32 %s288, 1
      %s290 = scalar_select %p287, %s288, %s289
      %p293 = pneg %p287
      %p294 = scmp.eq.s32.totalorder %s21, 1
      %p295 = por %p293, %p294
      %p296 = scmp.ne.s32.totalorder %s288, %s291
      %p297 = scmp.eq.s32.totalorder %s21, 0
      %p298 = por %p296, %p297
      %p299 = scmp.ne.s32.totalorder %s288, %s291
      %p300 = scmp.eq.s32.totalorder %s26, 1
      %p301 = por %p299, %p300
      %p302 = scmp.ne.s32.totalorder %s291, %s292
      %p303 = scmp.eq.s32.totalorder %s26, 0
      %p304 = por %p302, %p303
      %p305 = scmp.ne.s32.totalorder %s291, %s292
      %p306 = scmp.eq.s32.totalorder %s27, 1
      %p307 = por %p305, %p306
      %p309 = scmp.ne.s32.totalorder %s292, %s308
      %p310 = scmp.eq.s32.totalorder %s27, 0
      %p311 = por %p309, %p310
      %p312 = scmp.le.s32.totalorder 1, %s21
      %p313 = scmp.lt.s32.totalorder %s21, 3
      %p314 = pnand %p312, %p313
      %p315 = pneg %p314
      // Predicated region
      $region9: #{tpu_custom_call.1} parent=5 // pred_check
        _
      $region10: #{tpu_custom_call.1} parent=5 // pred_check_branch
        %317 = sbr.rel (%p314) target = $region12
      $region11: #{tpu_custom_call.1} parent=5 // pred_region
        %s318 = ssub.s32 %s21, 1
        // Predicated region
        $region13: #{tpu_custom_call.1} parent=11 // pred_check
          %p319 = pneg %p68
        $region14: #{tpu_custom_call.1} parent=11 // pred_check_branch
          %321 = sbr.rel (%p319) target = $region16
        $region15: #{tpu_custom_call.1} parent=11 // pred_region
          _
        $region16: #{tpu_custom_call.1} parent=11 // pred_fallthru
          _
        // Predicated region
        $region17: #{tpu_custom_call.1} parent=11 // pred_check
          %p322 = pneg %p89
        $region18: #{tpu_custom_call.1} parent=11 // pred_check_branch
          %324 = sbr.rel (%p322) target = $region20
        $region19: #{tpu_custom_call.1} parent=11 // pred_region
          _
        $region20: #{tpu_custom_call.1} parent=11 // pred_fallthru
          _
        // Predicated region
        $region21: #{tpu_custom_call.1} parent=11 // pred_check
          %p325 = pneg %p110
        $region22: #{tpu_custom_call.1} parent=11 // pred_check_branch
          %327 = sbr.rel (%p325) target = $region24
        $region23: #{tpu_custom_call.1} parent=11 // pred_region
          _
        $region24: #{tpu_custom_call.1} parent=11 // pred_fallthru
          _
        // Predicated region
        $region25: #{tpu_custom_call.1} parent=11 // pred_check
          %p328 = pneg %p131
        $region26: #{tpu_custom_call.1} parent=11 // pred_check_branch
          %330 = sbr.rel (%p328) target = $region28
        $region27: #{tpu_custom_call.1} parent=11 // pred_region
          _
        $region28: #{tpu_custom_call.1} parent=11 // pred_fallthru
          _
        // Predicated region
        $region29: #{tpu_custom_call.1} parent=11 // pred_check
          %p331 = pneg %p152
        $region30: #{tpu_custom_call.1} parent=11 // pred_check_branch
          %333 = sbr.rel (%p331) target = $region32
        $region31: #{tpu_custom_call.1} parent=11 // pred_region
          _
        $region32: #{tpu_custom_call.1} parent=11 // pred_fallthru
          _
        // Predicated region
        $region33: #{tpu_custom_call.1} parent=11 // pred_check
          %p334 = pneg %p173
        $region34: #{tpu_custom_call.1} parent=11 // pred_check_branch
          %336 = sbr.rel (%p334) target = $region36
        $region35: #{tpu_custom_call.1} parent=11 // pred_region
          _
        $region36: #{tpu_custom_call.1} parent=11 // pred_fallthru
          _
        // Predicated region
        $region37: #{tpu_custom_call.1} parent=11 // pred_check
          %p337 = pneg %p194
        $region38: #{tpu_custom_call.1} parent=11 // pred_check_branch
          %339 = sbr.rel (%p337) target = $region40
        $region39: #{tpu_custom_call.1} parent=11 // pred_region
          _
        $region40: #{tpu_custom_call.1} parent=11 // pred_fallthru
          _
        // Predicated region
        $region41: #{tpu_custom_call.1} parent=11 // pred_check
          %p340 = pneg %p215
        $region42: #{tpu_custom_call.1} parent=11 // pred_check_branch
          %342 = sbr.rel (%p340) target = $region44
        $region43: #{tpu_custom_call.1} parent=11 // pred_region
          _
        $region44: #{tpu_custom_call.1} parent=11 // pred_fallthru
          _
        // Predicated region
        $region45: #{tpu_custom_call.1} parent=11 // pred_check
          %p343 = pneg %p236
        $region46: #{tpu_custom_call.1} parent=11 // pred_check_branch
          %345 = sbr.rel (%p343) target = $region48
        $region47: #{tpu_custom_call.1} parent=11 // pred_region
          _
        $region48: #{tpu_custom_call.1} parent=11 // pred_fallthru
          _
        // Predicated region
        $region49: #{tpu_custom_call.1} parent=11 // pred_check
          %p346 = pneg %p257
        $region50: #{tpu_custom_call.1} parent=11 // pred_check_branch
          %348 = sbr.rel (%p346) target = $region52
        $region51: #{tpu_custom_call.1} parent=11 // pred_region
          _
        $region52: #{tpu_custom_call.1} parent=11 // pred_fallthru
          _
        // Predicated region
        $region53: #{tpu_custom_call.1} parent=11 // pred_check
          %p349 = pneg %p278
        $region54: #{tpu_custom_call.1} parent=11 // pred_check_branch
          %351 = sbr.rel (%p349) target = $region56
        $region55: #{tpu_custom_call.1} parent=11 // pred_region
          _
        $region56: #{tpu_custom_call.1} parent=11 // pred_fallthru
          _
      $region12: #{tpu_custom_call.1} parent=5 // pred_fallthru
        _
      %p352 = scmp.lt.s32.totalorder %s21, 2
      // Predicated region
      $region57: #{tpu_custom_call.1} parent=5 // pred_check
        %p353 = pneg %p352
      $region58: #{tpu_custom_call.1} parent=5 // pred_check_branch
        %355 = sbr.rel (%p353) target = $region60
      $region59: #{tpu_custom_call.1} parent=5 // pred_region
        // Predicated region
        $region61: #{tpu_custom_call.1} parent=59 // pred_check
          %p356 = pneg %p41
        $region62: #{tpu_custom_call.1} parent=59 // pred_check_branch
          %358 = sbr.rel (%p356) target = $region64
        $region63: #{tpu_custom_call.1} parent=59 // pred_region
          %p359 = scmp.lt.s32.totalorder %s21, 1
          %s360 = scalar_select %p359, %s21, 1
          %s361 = smul.addr %s360, 8
          %s362 = scalar_lea.vmem %s0, %s361
        $region64: #{tpu_custom_call.1} parent=59 // pred_fallthru
          _
      $region60: #{tpu_custom_call.1} parent=5 // pred_fallthru
        _
      %p363 = scmp.le.s32.totalorder 1, %s21
      %p364 = scmp.lt.s32.totalorder %s21, 3
      %p365 = pnand %p363, %p364
      %p366 = pneg %p365
      // Predicated region
      $region65: #{tpu_custom_call.1} parent=5 // pred_check
        _
      $region66: #{tpu_custom_call.1} parent=5 // pred_check_branch
        %368 = sbr.rel (%p365) target = $region68
      $region67: #{tpu_custom_call.1} parent=5 // pred_region
        %s369 = ssub.s32 %s21, 1
        %p370 = scmp.lt.s32.totalorder %s26, 1
        %s371 = scalar_select %p370, %s26, 1
        %s372 = smul.addr %s371, 8
        %s373 = scalar_lea.vmem %s0, %s372
        %p374 = pneg %p47
        %p375 = pneg %p44
        %p376 = pneg %p68
        %p377 = pneg %p65
        %p378 = pneg %p89
        %p379 = pneg %p86
        %p380 = pneg %p110
        %p381 = pneg %p107
        %p382 = pneg %p131
        %p383 = pneg %p128
        %p384 = pneg %p152
        %p385 = pneg %p149
        %p386 = pneg %p173
        %p387 = pneg %p170
        %p388 = pneg %p194
        %p389 = pneg %p191
        %p390 = pneg %p215
        %p391 = pneg %p212
        %p392 = pneg %p236
        %p393 = pneg %p233
        %p394 = pneg %p257
        %p395 = pneg %p254
        %p396 = pneg %p278
        %p397 = pneg %p275
        %p398 = pneg %p304
        %p399 = pneg %p301
        %s400 = sand.u32 %s291, 1
        %s401 = scalar_lea.sflag [#allocation4], %s400
        %s402 = sand.u32 %s291, 1
        %s403 = smul.addr %s402, 8
        %s404 = scalar_lea.vmem [#allocation3], %s403
        %p405 = scmp.lt.s32.totalorder %s26, 1
        %s406 = scalar_select %p405, %s26, 1
        %s407 = smul.addr %s406, 8
        %s408 = scalar_lea.vmem %s0, %s407
        %v410 = vld [vmem:[%s408] sm:$0xff]
        %v411 = vld [vmem:[%s4] sm:$0x1]
        %v412 = vld [vmem:[%s5] sm:$0x1]
        %vm413 = vcmask 261120
        %v414 = vsel %vm413, %v410, 0.0
        %415 = vadd.xlane.f32.xlu0 %v414
        %v416 = vpop.xlane.xlu0 %415
        %v417 = vrcp.pop 32.0
        %v418 = vmul.f32 %v416, %v417
        %v419 = vsub.f32 %v410, %v418
        %v420 = vmul.f32 %v419, %v419
        %v421 = vsel %vm413, %v420, 0.0
        %422 = vadd.xlane.f32.xlu0 %v421
        %v423 = vpop.xlane.xlu0 %422
        %v424 = vmul.f32 %v423, %v417
        %v425 = vadd.f32 %v424, 1e-05
        %v426 = vrsqrt.pop %v425
        %v427 = vmul.f32 %v419, %v426
        %v429 = vlaneseq
        %v430 = vshrl.u32 %v429, 7
        %v431 = vsub.s32 0, %v430
        %v432 = vrot.slane %v411, %v431
        %v434 = vmul.f32 %v427, %v432
        %v436 = vlaneseq
        %v437 = vshrl.u32 %v436, 7
        %v438 = vsub.s32 0, %v437
        %v439 = vrot.slane %v412, %v438
        %v441 = vadd.f32 %v434, %v439
        %v442 = vpack.c.bf16 %v441, %v441
        %v443 = vld [vmem:[%s1] sm:$0xf]
        %v444 = vld [vmem:[%s1 + $0x4] sm:$0xf]
        %v445 = vld [vmem:[%s1 + $0x8] sm:$0xf]
        %v446 = vld [vmem:[%s1 + $0xc] sm:$0xf]
        %v451 = vunpack.c.l.b16 %v443
        %v452 = vunpack.c.l.b16 %v444
        %v453 = vunpack.c.l.b16 %v445
        %v454 = vunpack.c.l.b16 %v446
        %v455 = vpack.c.b16 %v452, %v451
        %v456 = vpack.c.b16 %v454, %v453
        %v460 = vsel %vm413, %v442, 0
        %462 = vmatprep.subr.bf16.mxu0 0
        %463 = vmatpush1.bf16.msra.mxu0 %v455
        %464 = vmatprep.subr.bf16.mxu0 0
        %465 = vmatpush1.bf16.msra.mxu0 %v456
        %466 = vmatprep.subr.bf16.mxu0 0
        %467 = vmatpush1.bf16.msra.mxu0 0
        %468 = vmatprep.subr.bf16.mxu0 0
        %469 = vmatpush1.bf16.msra.mxu0 0
        %470 = vmatprep.subr.bf16.mxu0 0
        %471 = vmatpush1.bf16.msra.mxu0 0
        %472 = vmatprep.subr.bf16.mxu0 0
        %473 = vmatpush1.bf16.msra.mxu0 0
        %474 = vmatprep.subr.bf16.mxu0 0
        %475 = vmatpush1.bf16.msra.mxu0 0
        %476 = vmatprep.subr.bf16.mxu0 0
        %477 = vmatpush1.bf16.msra.mxu0 0
        %478 = vmatprep.subr.bf16.mxu0 0
        %479 = vmatpush1.bf16.msra.mxu0 0
        %480 = vmatprep.subr.bf16.mxu0 0
        %481 = vmatpush1.bf16.msra.mxu0 0
        %482 = vmatprep.subr.bf16.mxu0 0
        %483 = vmatpush1.bf16.msra.mxu0 0
        %484 = vmatprep.subr.bf16.mxu0 0
        %485 = vmatpush1.bf16.msra.mxu0 0
        %486 = vmatprep.subr.bf16.mxu0 0
        %487 = vmatpush1.bf16.msra.mxu0 0
        %488 = vmatprep.subr.bf16.mxu0 0
        %489 = vmatpush1.bf16.msra.mxu0 0
        %490 = vmatprep.subr.bf16.mxu0 0
        %491 = vmatpush1.bf16.msra.mxu0 0
        %492 = vmatprep.subr.bf16.mxu0 0
        %493 = vmatpush1.bf16.msra.mxu0 0
        %494 = vmatprep.mubr.bf16.mxu0 0
        %495 = vmatmul.mubr.bf16.gmra.mrb[0].mxu0 %v460
        %v496 = vpop.f32.mrb[0].mxu0
        %v497 = vadd.f32 0.0, %v496
        %v498 = vpop.f32.mrb[0].mxu0
        %v499 = vpop.f32.mrb[0].mxu0
        %v500 = vpop.f32.mrb[0].mxu0
        %501 = vdwg.mxu0
        %v502 = vpack.c.bf16 %v497, %v497
        %504 = vrot.lane.b32.xlu0 %v502, 96
        %v505 = vpop.permute.xlu0 %504
        %vm506 = vcmask 64512
        %v508 = vsel %vm506, %v502, 0
        %v511 = vsel %vm506, %v505, 0
        %513 = vmatprep.subr.bf16.mxu0 0
        %514 = vmatpush1.bf16.xpose.msra.mxu0 %v511
        %515 = vmatprep.subr.bf16.mxu0 0
        %516 = vmatpush1.bf16.xpose.msra.mxu0 0
        %517 = vmatprep.subr.bf16.mxu0 0
        %518 = vmatpush1.bf16.xpose.msra.mxu0 0
        %519 = vmatprep.subr.bf16.mxu0 0
        %520 = vmatpush1.bf16.xpose.msra.mxu0 0
        %521 = vmatprep.subr.bf16.mxu0 0
        %522 = vmatpush1.bf16.xpose.msra.mxu0 0
        %523 = vmatprep.subr.bf16.mxu0 0
        %524 = vmatpush1.bf16.xpose.msra.mxu0 0
        %525 = vmatprep.subr.bf16.mxu0 0
        %526 = vmatpush1.bf16.xpose.msra.mxu0 0
        %527 = vmatprep.subr.bf16.mxu0 0
        %528 = vmatpush1.bf16.xpose.msra.mxu0 0
        %529 = vmatprep.subr.bf16.mxu0 0
        %530 = vmatpush1.bf16.xpose.msra.mxu0 0
        %531 = vmatprep.subr.bf16.mxu0 0
        %532 = vmatpush1.bf16.xpose.msra.mxu0 0
        %533 = vmatprep.subr.bf16.mxu0 0
        %534 = vmatpush1.bf16.xpose.msra.mxu0 0
        %535 = vmatprep.subr.bf16.mxu0 0
        %536 = vmatpush1.bf16.xpose.msra.mxu0 0
        %537 = vmatprep.subr.bf16.mxu0 0
        %538 = vmatpush1.bf16.xpose.msra.mxu0 0
        %539 = vmatprep.subr.bf16.mxu0 0
        %540 = vmatpush1.bf16.xpose.msra.mxu0 0
        %541 = vmatprep.subr.bf16.mxu0 0
        %542 = vmatpush1.bf16.xpose.msra.mxu0 0
        %543 = vmatprep.subr.bf16.mxu0 0
        %544 = vmatpush1.bf16.xpose.msra.mxu0 0
        %545 = vmatprep.mubr.bf16.mxu0 0
        %546 = vmatmul.mubr.bf16.gmra.mrb[0].mxu0 %v508
        %v547 = vpop.f32.mrb[0].mxu0
        %v548 = vadd.f32 0.0, %v547
        %v549 = vpop.f32.mrb[0].mxu0
        %v550 = vpop.f32.mrb[0].mxu0
        %v551 = vpop.f32.mrb[0].mxu0
        %552 = vdwg.mxu0
        %v553 = vsel %vm506, %v548, -inf
        %554 = vmax.xlane.f32.xlu0 %v553
        %v555 = vpop.xlane.xlu0 %554
        %v556 = vsub.f32 %v548, %v555
        %v557 = vmul.f32 %v556, 1.442695
        %v558 = vpow.pop %v557
        %v559 = vsel %vm506, %v558, 0.0
        %560 = vadd.xlane.f32.xlu0 %v559
        %v561 = vpop.xlane.xlu0 %560
        %v562 = vrcp.pop %v561
        %v563 = vmul.f32 %v558, %v562
        %v564 = vpack.c.bf16 %v563, %v563
        %565 = vrot.lane.b32.xlu0 %v502, 64
        %v566 = vpop.permute.xlu0 %565
        %v568 = vsel %vm506, %v564, 0
        %vm570 = vcmask 1043456
        %v572 = vsel %vm570, %v566, 0
        %574 = vmatprep.subr.bf16.mxu0 0
        %575 = vmatpush1.bf16.msra.mxu0 %v572
        %576 = vmatprep.subr.bf16.mxu0 0
        %577 = vmatpush1.bf16.msra.mxu0 0
        %578 = vmatprep.subr.bf16.mxu0 0
        %579 = vmatpush1.bf16.msra.mxu0 0
        %580 = vmatprep.subr.bf16.mxu0 0
        %581 = vmatpush1.bf16.msra.mxu0 0
        %582 = vmatprep.subr.bf16.mxu0 0
        %583 = vmatpush1.bf16.msra.mxu0 0
        %584 = vmatprep.subr.bf16.mxu0 0
        %585 = vmatpush1.bf16.msra.mxu0 0
        %586 = vmatprep.subr.bf16.mxu0 0
        %587 = vmatpush1.bf16.msra.mxu0 0
        %588 = vmatprep.subr.bf16.mxu0 0
        %589 = vmatpush1.bf16.msra.mxu0 0
        %590 = vmatprep.subr.bf16.mxu0 0
        %591 = vmatpush1.bf16.msra.mxu0 0
        %592 = vmatprep.subr.bf16.mxu0 0
        %593 = vmatpush1.bf16.msra.mxu0 0
        %594 = vmatprep.subr.bf16.mxu0 0
        %595 = vmatpush1.bf16.msra.mxu0 0
        %596 = vmatprep.subr.bf16.mxu0 0
        %597 = vmatpush1.bf16.msra.mxu0 0
        %598 = vmatprep.subr.bf16.mxu0 0
        %599 = vmatpush1.bf16.msra.mxu0 0
        %600 = vmatprep.subr.bf16.mxu0 0
        %601 = vmatpush1.bf16.msra.mxu0 0
        %602 = vmatprep.subr.bf16.mxu0 0
        %603 = vmatpush1.bf16.msra.mxu0 0
        %604 = vmatprep.subr.bf16.mxu0 0
        %605 = vmatpush1.bf16.msra.mxu0 0
        %606 = vmatprep.mubr.bf16.mxu0 0
        %607 = vmatmul.mubr.bf16.gmra.mrb[0].mxu0 %v568
        %v608 = vpop.f32.mrb[0].mxu0
        %v609 = vadd.f32 0.0, %v608
        %v610 = vpop.f32.mrb[0].mxu0
        %v611 = vpop.f32.mrb[0].mxu0
        %v612 = vpop.f32.mrb[0].mxu0
        %613 = vdwg.mxu0
        %v614 = vpack.c.bf16 %v609, %v609
        %vm615 = vcmask 60416
        %616 = vst.msk [vmem:[#allocation2] sm:$0xf] %vm615, %v614
        %617 = vrot.lane.b32.xlu0 %v502, 120
        %v618 = vpop.permute.xlu0 %617
        %619 = vrot.lane.b32.xlu0 %v502, 88
        %v620 = vpop.permute.xlu0 %619
        %v622 = vsel %vm506, %v618, 0
        %v625 = vsel %vm506, %v620, 0
        %627 = vmatprep.subr.bf16.mxu0 0
        %628 = vmatpush1.bf16.xpose.msra.mxu0 %v625
        %629 = vmatprep.subr.bf16.mxu0 0
        %630 = vmatpush1.bf16.xpose.msra.mxu0 0
        %631 = vmatprep.subr.bf16.mxu0 0
        %632 = vmatpush1.bf16.xpose.msra.mxu0 0
        %633 = vmatprep.subr.bf16.mxu0 0
        %634 = vmatpush1.bf16.xpose.msra.mxu0 0
        %635 = vmatprep.subr.bf16.mxu0 0
        %636 = vmatpush1.bf16.xpose.msra.mxu0 0
        %637 = vmatprep.subr.bf16.mxu0 0
        %638 = vmatpush1.bf16.xpose.msra.mxu0 0
        %639 = vmatprep.subr.bf16.mxu0 0
        %640 = vmatpush1.bf16.xpose.msra.mxu0 0
        %641 = vmatprep.subr.bf16.mxu0 0
        %642 = vmatpush1.bf16.xpose.msra.mxu0 0
        %643 = vmatprep.subr.bf16.mxu0 0
        %644 = vmatpush1.bf16.xpose.msra.mxu0 0
        %645 = vmatprep.subr.bf16.mxu0 0
        %646 = vmatpush1.bf16.xpose.msra.mxu0 0
        %647 = vmatprep.subr.bf16.mxu0 0
        %648 = vmatpush1.bf16.xpose.msra.mxu0 0
        %649 = vmatprep.subr.bf16.mxu0 0
        %650 = vmatpush1.bf16.xpose.msra.mxu0 0
        %651 = vmatprep.subr.bf16.mxu0 0
        %652 = vmatpush1.bf16.xpose.msra.mxu0 0
        %653 = vmatprep.subr.bf16.mxu0 0
        %654 = vmatpush1.bf16.xpose.msra.mxu0 0
        %655 = vmatprep.subr.bf16.mxu0 0
        %656 = vmatpush1.bf16.xpose.msra.mxu0 0
        %657 = vmatprep.subr.bf16.mxu0 0
        %658 = vmatpush1.bf16.xpose.msra.mxu0 0
        %659 = vmatprep.mubr.bf16.mxu0 0
        %660 = vmatmul.mubr.bf16.gmra.mrb[0].mxu0 %v622
        %v661 = vpop.f32.mrb[0].mxu0
        %v662 = vadd.f32 0.0, %v661
        %v663 = vpop.f32.mrb[0].mxu0
        %v664 = vpop.f32.mrb[0].mxu0
        %v665 = vpop.f32.mrb[0].mxu0
        %666 = vdwg.mxu0
        %v667 = vsel %vm506, %v662, -inf
        %668 = vmax.xlane.f32.xlu0 %v667
        %v669 = vpop.xlane.xlu0 %668
        %v670 = vsub.f32 %v662, %v669
        %v671 = vmul.f32 %v670, 1.442695
        %v672 = vpow.pop %v671
        %v673 = vsel %vm506, %v672, 0.0
        %674 = vadd.xlane.f32.xlu0 %v673
        %v675 = vpop.xlane.xlu0 %674
        %v676 = vrcp.pop %v675
        %v677 = vmul.f32 %v672, %v676
        %v678 = vpack.c.bf16 %v677, %v677
        %679 = vrot.lane.b32.xlu0 %v502, 56
        %v680 = vpop.permute.xlu0 %679
        %v682 = vsel %vm506, %v678, 0
        %v685 = vsel %vm570, %v680, 0
        %687 = vmatprep.subr.bf16.mxu0 0
        %688 = vmatpush1.bf16.msra.mxu0 %v685
        %689 = vmatprep.subr.bf16.mxu0 0
        %690 = vmatpush1.bf16.msra.mxu0 0
        %691 = vmatprep.subr.bf16.mxu0 0
        %692 = vmatpush1.bf16.msra.mxu0 0
        %693 = vmatprep.subr.bf16.mxu0 0
        %694 = vmatpush1.bf16.msra.mxu0 0
        %695 = vmatprep.subr.bf16.mxu0 0
        %696 = vmatpush1.bf16.msra.mxu0 0
        %697 = vmatprep.subr.bf16.mxu0 0
        %698 = vmatpush1.bf16.msra.mxu0 0
        %699 = vmatprep.subr.bf16.mxu0 0
        %700 = vmatpush1.bf16.msra.mxu0 0
        %701 = vmatprep.subr.bf16.mxu0 0
        %702 = vmatpush1.bf16.msra.mxu0 0
        %703 = vmatprep.subr.bf16.mxu0 0
        %704 = vmatpush1.bf16.msra.mxu0 0
        %705 = vmatprep.subr.bf16.mxu0 0
        %706 = vmatpush1.bf16.msra.mxu0 0
        %707 = vmatprep.subr.bf16.mxu0 0
        %708 = vmatpush1.bf16.msra.mxu0 0
        %709 = vmatprep.subr.bf16.mxu0 0
        %710 = vmatpush1.bf16.msra.mxu0 0
        %711 = vmatprep.subr.bf16.mxu0 0
        %712 = vmatpush1.bf16.msra.mxu0 0
        %713 = vmatprep.subr.bf16.mxu0 0
        %714 = vmatpush1.bf16.msra.mxu0 0
        %715 = vmatprep.subr.bf16.mxu0 0
        %716 = vmatpush1.bf16.msra.mxu0 0
        %717 = vmatprep.subr.bf16.mxu0 0
        %718 = vmatpush1.bf16.msra.mxu0 0
        %719 = vmatprep.mubr.bf16.mxu0 0
        %720 = vmatmul.mubr.bf16.gmra.mrb[0].mxu0 %v682
        %v721 = vpop.f32.mrb[0].mxu0
        %v722 = vadd.f32 0.0, %v721
        %v723 = vpop.f32.mrb[0].mxu0
        %v724 = vpop.f32.mrb[0].mxu0
        %v725 = vpop.f32.mrb[0].mxu0
        %726 = vdwg.mxu0
        %v727 = vpack.c.bf16 %v722, %v722
        %v729 = vunpack.c.l.b16 %v727
        %v730 = vpack.c.b16 %v729, %v729
        %731 = vrot.lane.b32.xlu0 %v730, 8
        %v732 = vpop.permute.xlu0 %731
        %vm734 = vcmask 126016
        %735 = vst.msk [vmem:[#allocation2] sm:$0xf] %vm734, %v732
        %736 = vrot.lane.b32.xlu0 %v502, 112
        %v737 = vpop.permute.xlu0 %736
        %738 = vrot.lane.b32.xlu0 %v502, 80
        %v739 = vpop.permute.xlu0 %738
        %v741 = vsel %vm506, %v737, 0
        %v744 = vsel %vm506, %v739, 0
        %746 = vmatprep.subr.bf16.mxu0 0
        %747 = vmatpush1.bf16.xpose.msra.mxu0 %v744
        %748 = vmatprep.subr.bf16.mxu0 0
        %749 = vmatpush1.bf16.xpose.msra.mxu0 0
        %750 = vmatprep.subr.bf16.mxu0 0
        %751 = vmatpush1.bf16.xpose.msra.mxu0 0
        %752 = vmatprep.subr.bf16.mxu0 0
        %753 = vmatpush1.bf16.xpose.msra.mxu0 0
        %754 = vmatprep.subr.bf16.mxu0 0
        %755 = vmatpush1.bf16.xpose.msra.mxu0 0
        %756 = vmatprep.subr.bf16.mxu0 0
        %757 = vmatpush1.bf16.xpose.msra.mxu0 0
        %758 = vmatprep.subr.bf16.mxu0 0
        %759 = vmatpush1.bf16.xpose.msra.mxu0 0
        %760 = vmatprep.subr.bf16.mxu0 0
        %761 = vmatpush1.bf16.xpose.msra.mxu0 0
        %762 = vmatprep.subr.bf16.mxu0 0
        %763 = vmatpush1.bf16.xpose.msra.mxu0 0
        %764 = vmatprep.subr.bf16.mxu0 0
        %765 = vmatpush1.bf16.xpose.msra.mxu0 0
        %766 = vmatprep.subr.bf16.mxu0 0
        %767 = vmatpush1.bf16.xpose.msra.mxu0 0
        %768 = vmatprep.subr.bf16.mxu0 0
        %769 = vmatpush1.bf16.xpose.msra.mxu0 0
        %770 = vmatprep.subr.bf16.mxu0 0
        %771 = vmatpush1.bf16.xpose.msra.mxu0 0
        %772 = vmatprep.subr.bf16.mxu0 0
        %773 = vmatpush1.bf16.xpose.msra.mxu0 0
        %774 = vmatprep.subr.bf16.mxu0 0
        %775 = vmatpush1.bf16.xpose.msra.mxu0 0
        %776 = vmatprep.subr.bf16.mxu0 0
        %777 = vmatpush1.bf16.xpose.msra.mxu0 0
        %778 = vmatprep.mubr.bf16.mxu0 0
        %779 = vmatmul.mubr.bf16.gmra.mrb[0].mxu0 %v741
        %v780 = vpop.f32.mrb[0].mxu0
        %v781 = vadd.f32 0.0, %v780
        %v782 = vpop.f32.mrb[0].mxu0
        %v783 = vpop.f32.mrb[0].mxu0
        %v784 = vpop.f32.mrb[0].mxu0
        %785 = vdwg.mxu0
        %v786 = vsel %vm506, %v781, -inf
        %787 = vmax.xlane.f32.xlu0 %v786
        %v788 = vpop.xlane.xlu0 %787
        %v789 = vsub.f32 %v781, %v788
        %v790 = vmul.f32 %v789, 1.442695
        %v791 = vpow.pop %v790
        %v792 = vsel %vm506, %v791, 0.0
        %793 = vadd.xlane.f32.xlu0 %v792
        %v794 = vpop.xlane.xlu0 %793
        %v795 = vrcp.pop %v794
        %v796 = vmul.f32 %v791, %v795
        %v797 = vpack.c.bf16 %v796, %v796
        %798 = vrot.lane.b32.xlu0 %v502, 48
        %v799 = vpop.permute.xlu0 %798
        %v801 = vsel %vm506, %v797, 0
        %v804 = vsel %vm570, %v799, 0
        %806 = vmatprep.subr.bf16.mxu0 0
        %807 = vmatpush1.bf16.msra.mxu0 %v804
        %808 = vmatprep.subr.bf16.mxu0 0
        %809 = vmatpush1.bf16.msra.mxu0 0
        %810 = vmatprep.subr.bf16.mxu0 0
        %811 = vmatpush1.bf16.msra.mxu0 0
        %812 = vmatprep.subr.bf16.mxu0 0
        %813 = vmatpush1.bf16.msra.mxu0 0
        %814 = vmatprep.subr.bf16.mxu0 0
        %815 = vmatpush1.bf16.msra.mxu0 0
        %816 = vmatprep.subr.bf16.mxu0 0
        %817 = vmatpush1.bf16.msra.mxu0 0
        %818 = vmatprep.subr.bf16.mxu0 0
        %819 = vmatpush1.bf16.msra.mxu0 0
        %820 = vmatprep.subr.bf16.mxu0 0
        %821 = vmatpush1.bf16.msra.mxu0 0
        %822 = vmatprep.subr.bf16.mxu0 0
        %823 = vmatpush1.bf16.msra.mxu0 0
        %824 = vmatprep.subr.bf16.mxu0 0
        %825 = vmatpush1.bf16.msra.mxu0 0
        %826 = vmatprep.subr.bf16.mxu0 0
        %827 = vmatpush1.bf16.msra.mxu0 0
        %828 = vmatprep.subr.bf16.mxu0 0
        %829 = vmatpush1.bf16.msra.mxu0 0
        %830 = vmatprep.subr.bf16.mxu0 0
        %831 = vmatpush1.bf16.msra.mxu0 0
        %832 = vmatprep.subr.bf16.mxu0 0
        %833 = vmatpush1.bf16.msra.mxu0 0
        %834 = vmatprep.subr.bf16.mxu0 0
        %835 = vmatpush1.bf16.msra.mxu0 0
        %836 = vmatprep.subr.bf16.mxu0 0
        %837 = vmatpush1.bf16.msra.mxu0 0
        %838 = vmatprep.mubr.bf16.mxu0 0
        %839 = vmatmul.mubr.bf16.gmra.mrb[0].mxu0 %v801
        %v840 = vpop.f32.mrb[0].mxu0
        %v841 = vadd.f32 0.0, %v840
        %v842 = vpop.f32.mrb[0].mxu0
        %v843 = vpop.f32.mrb[0].mxu0
        %v844 = vpop.f32.mrb[0].mxu0
        %845 = vdwg.mxu0
        %v846 = vpack.c.bf16 %v841, %v841
        %v848 = vunpack.c.l.b16 %v846
        %v849 = vpack.c.b16 %v848, %v848
        %850 = vrot.lane.b32.xlu0 %v849, 16
        %v851 = vpop.permute.xlu0 %850
        %vm853 = vcmask 191616
        %854 = vst.msk [vmem:[#allocation2] sm:$0xf] %vm853, %v851
        %855 = vrot.lane.b32.xlu0 %v502, 104
        %v856 = vpop.permute.xlu0 %855
        %857 = vrot.lane.b32.xlu0 %v502, 72
        %v858 = vpop.permute.xlu0 %857
        %v860 = vsel %vm506, %v856, 0
        %v863 = vsel %vm506, %v858, 0
        %865 = vmatprep.subr.bf16.mxu0 0
        %866 = vmatpush1.bf16.xpose.msra.mxu0 %v863
        %867 = vmatprep.subr.bf16.mxu0 0
        %868 = vmatpush1.bf16.xpose.msra.mxu0 0
        %869 = vmatprep.subr.bf16.mxu0 0
        %870 = vmatpush1.bf16.xpose.msra.mxu0 0
        %871 = vmatprep.subr.bf16.mxu0 0
        %872 = vmatpush1.bf16.xpose.msra.mxu0 0
        %873 = vmatprep.subr.bf16.mxu0 0
        %874 = vmatpush1.bf16.xpose.msra.mxu0 0
        %875 = vmatprep.subr.bf16.mxu0 0
        %876 = vmatpush1.bf16.xpose.msra.mxu0 0
        %877 = vmatprep.subr.bf16.mxu0 0
        %878 = vmatpush1.bf16.xpose.msra.mxu0 0
        %879 = vmatprep.subr.bf16.mxu0 0
        %880 = vmatpush1.bf16.xpose.msra.mxu0 0
        %881 = vmatprep.subr.bf16.mxu0 0
        %882 = vmatpush1.bf16.xpose.msra.mxu0 0
        %883 = vmatprep.subr.bf16.mxu0 0
        %884 = vmatpush1.bf16.xpose.msra.mxu0 0
        %885 = vmatprep.subr.bf16.mxu0 0
        %886 = vmatpush1.bf16.xpose.msra.mxu0 0
        %887 = vmatprep.subr.bf16.mxu0 0
        %888 = vmatpush1.bf16.xpose.msra.mxu0 0
        %889 = vmatprep.subr.bf16.mxu0 0
        %890 = vmatpush1.bf16.xpose.msra.mxu0 0
        %891 = vmatprep.subr.bf16.mxu0 0
        %892 = vmatpush1.bf16.xpose.msra.mxu0 0
        %893 = vmatprep.subr.bf16.mxu0 0
        %894 = vmatpush1.bf16.xpose.msra.mxu0 0
        %895 = vmatprep.subr.bf16.mxu0 0
        %896 = vmatpush1.bf16.xpose.msra.mxu0 0
        %897 = vmatprep.mubr.bf16.mxu0 0
        %898 = vmatmul.mubr.bf16.gmra.mrb[0].mxu0 %v860
        %v899 = vpop.f32.mrb[0].mxu0
        %v900 = vadd.f32 0.0, %v899
        %v901 = vpop.f32.mrb[0].mxu0
        %v902 = vpop.f32.mrb[0].mxu0
        %v903 = vpop.f32.mrb[0].mxu0
        %904 = vdwg.mxu0
        %v905 = vsel %vm506, %v900, -inf
        %906 = vmax.xlane.f32.xlu0 %v905
        %v907 = vpop.xlane.xlu0 %906
        %v908 = vsub.f32 %v900, %v907
        %v909 = vmul.f32 %v908, 1.442695
        %v910 = vpow.pop %v909
        %v911 = vsel %vm506, %v910, 0.0
        %912 = vadd.xlane.f32.xlu0 %v911
        %v913 = vpop.xlane.xlu0 %912
        %v914 = vrcp.pop %v913
        %v915 = vmul.f32 %v910, %v914
        %v916 = vpack.c.bf16 %v915, %v915
        %917 = vrot.lane.b32.xlu0 %v502, 40
        %v918 = vpop.permute.xlu0 %917
        %v920 = vsel %vm506, %v916, 0
        %v923 = vsel %vm570, %v918, 0
        %925 = vmatprep.subr.bf16.mxu0 0
        %926 = vmatpush1.bf16.msra.mxu0 %v923
        %927 = vmatprep.subr.bf16.mxu0 0
        %928 = vmatpush1.bf16.msra.mxu0 0
        %929 = vmatprep.subr.bf16.mxu0 0
        %930 = vmatpush1.bf16.msra.mxu0 0
        %931 = vmatprep.subr.bf16.mxu0 0
        %932 = vmatpush1.bf16.msra.mxu0 0
        %933 = vmatprep.subr.bf16.mxu0 0
        %934 = vmatpush1.bf16.msra.mxu0 0
        %935 = vmatprep.subr.bf16.mxu0 0
        %936 = vmatpush1.bf16.msra.mxu0 0
        %937 = vmatprep.subr.bf16.mxu0 0
        %938 = vmatpush1.bf16.msra.mxu0 0
        %939 = vmatprep.subr.bf16.mxu0 0
        %940 = vmatpush1.bf16.msra.mxu0 0
        %941 = vmatprep.subr.bf16.mxu0 0
        %942 = vmatpush1.bf16.msra.mxu0 0
        %943 = vmatprep.subr.bf16.mxu0 0
        %944 = vmatpush1.bf16.msra.mxu0 0
        %945 = vmatprep.subr.bf16.mxu0 0
        %946 = vmatpush1.bf16.msra.mxu0 0
        %947 = vmatprep.subr.bf16.mxu0 0
        %948 = vmatpush1.bf16.msra.mxu0 0
        %949 = vmatprep.subr.bf16.mxu0 0
        %950 = vmatpush1.bf16.msra.mxu0 0
        %951 = vmatprep.subr.bf16.mxu0 0
        %952 = vmatpush1.bf16.msra.mxu0 0
        %953 = vmatprep.subr.bf16.mxu0 0
        %954 = vmatpush1.bf16.msra.mxu0 0
        %955 = vmatprep.subr.bf16.mxu0 0
        %956 = vmatpush1.bf16.msra.mxu0 0
        %957 = vmatprep.mubr.bf16.mxu0 0
        %958 = vmatmul.mubr.bf16.gmra.mrb[0].mxu0 %v920
        %v959 = vpop.f32.mrb[0].mxu0
        %v960 = vadd.f32 0.0, %v959
        %v961 = vpop.f32.mrb[0].mxu0
        %v962 = vpop.f32.mrb[0].mxu0
        %v963 = vpop.f32.mrb[0].mxu0
        %964 = vdwg.mxu0
        %v965 = vpack.c.bf16 %v960, %v960
        %v967 = vunpack.c.l.b16 %v965
        %v968 = vpack.c.b16 %v967, %v967
        %969 = vrot.lane.b32.xlu0 %v968, 24
        %v970 = vpop.permute.xlu0 %969
        %vm972 = vcmask 257216
        %973 = vst.msk [vmem:[#allocation2] sm:$0xf] %vm972, %v970
        %v974 = vld [vmem:[#allocation2] sm:$0xf]
        %v975 = vld [vmem:[%s2] sm:$0xf]
        %v976 = vld [vmem:[%s2 + $0x4] sm:$0xf]
        %v977 = vld [vmem:[%s2 + $0x8] sm:$0xf]
        %v978 = vld [vmem:[%s2 + $0xc] sm:$0xf]
        %v983 = vunpack.c.l.b16 %v975
        %v984 = vunpack.c.l.b16 %v976
        %v985 = vunpack.c.l.b16 %v977
        %v986 = vunpack.c.l.b16 %v978
        %v987 = vpack.c.b16 %v984, %v983
        %v988 = vpack.c.b16 %v986, %v985
        %v992 = vsel %vm413, %v974, 0
        %994 = vmatprep.subr.bf16.mxu0 0
        %995 = vmatpush1.bf16.msra.mxu0 %v987
        %996 = vmatprep.subr.bf16.mxu0 0
        %997 = vmatpush1.bf16.msra.mxu0 %v988
        %998 = vmatprep.subr.bf16.mxu0 0
        %999 = vmatpush1.bf16.msra.mxu0 0
        %1000 = vmatprep.subr.bf16.mxu0 0
        %1001 = vmatpush1.bf16.msra.mxu0 0
        %1002 = vmatprep.subr.bf16.mxu0 0
        %1003 = vmatpush1.bf16.msra.mxu0 0
        %1004 = vmatprep.subr.bf16.mxu0 0
        %1005 = vmatpush1.bf16.msra.mxu0 0
        %1006 = vmatprep.subr.bf16.mxu0 0
        %1007 = vmatpush1.bf16.msra.mxu0 0
        %1008 = vmatprep.subr.bf16.mxu0 0
        %1009 = vmatpush1.bf16.msra.mxu0 0
        %1010 = vmatprep.subr.bf16.mxu0 0
        %1011 = vmatpush1.bf16.msra.mxu0 0
        %1012 = vmatprep.subr.bf16.mxu0 0
        %1013 = vmatpush1.bf16.msra.mxu0 0
        %1014 = vmatprep.subr.bf16.mxu0 0
        %1015 = vmatpush1.bf16.msra.mxu0 0
        %1016 = vmatprep.subr.bf16.mxu0 0
        %1017 = vmatpush1.bf16.msra.mxu0 0
        %1018 = vmatprep.subr.bf16.mxu0 0
        %1019 = vmatpush1.bf16.msra.mxu0 0
        %1020 = vmatprep.subr.bf16.mxu0 0
        %1021 = vmatpush1.bf16.msra.mxu0 0
        %1022 = vmatprep.subr.bf16.mxu0 0
        %1023 = vmatpush1.bf16.msra.mxu0 0
        %1024 = vmatprep.subr.bf16.mxu0 0
        %1025 = vmatpush1.bf16.msra.mxu0 0
        %1026 = vmatprep.mubr.bf16.mxu0 0
        %1027 = vmatmul.mubr.bf16.gmra.mrb[0].mxu0 %v992
        %v1028 = vpop.f32.mrb[0].mxu0
        %v1029 = vadd.f32 0.0, %v1028
        %v1030 = vpop.f32.mrb[0].mxu0
        %v1031 = vpop.f32.mrb[0].mxu0
        %v1032 = vpop.f32.mrb[0].mxu0
        %1033 = vdwg.mxu0
        %v1034 = vadd.f32 %v410, %v1029
        %v1035 = vld [vmem:[%s3] sm:$0x1]
        %v1037 = vlaneseq
        %v1038 = vshrl.u32 %v1037, 7
        %v1039 = vsub.s32 0, %v1038
        %v1040 = vrot.slane %v1035, %v1039
        %v1042 = vadd.f32 %v1034, %v1040
        %v1043 = vld [vmem:[%s6] sm:$0x1]
        %v1044 = vld [vmem:[%s7] sm:$0x1]
        %v1045 = vsel %vm413, %v1042, 0.0
        %1046 = vadd.xlane.f32.xlu0 %v1045
        %v1047 = vpop.xlane.xlu0 %1046
        %v1048 = vmul.f32 %v1047, %v417
        %v1049 = vsub.f32 %v1042, %v1048
        %v1050 = vmul.f32 %v1049, %v1049
        %v1051 = vsel %vm413, %v1050, 0.0
        %1052 = vadd.xlane.f32.xlu0 %v1051
        %v1053 = vpop.xlane.xlu0 %1052
        %v1054 = vmul.f32 %v1053, %v417
        %v1055 = vadd.f32 %v1054, 1e-05
        %v1056 = vrsqrt.pop %v1055
        %v1057 = vmul.f32 %v1049, %v1056
        %v1059 = vlaneseq
        %v1060 = vshrl.u32 %v1059, 7
        %v1061 = vsub.s32 0, %v1060
        %v1062 = vrot.slane %v1043, %v1061
        %v1064 = vmul.f32 %v1057, %v1062
        %v1066 = vlaneseq
        %v1067 = vshrl.u32 %v1066, 7
        %v1068 = vsub.s32 0, %v1067
        %v1069 = vrot.slane %v1044, %v1068
        %v1071 = vadd.f32 %v1064, %v1069
        %v1072 = vpack.c.bf16 %v1071, %v1071
        %v1073 = vld [vmem:[%s8] sm:$0xf]
        %v1074 = vld [vmem:[%s8 + $0x4] sm:$0xf]
        %v1075 = vld [vmem:[%s8 + $0x8] sm:$0xf]
        %v1076 = vld [vmem:[%s8 + $0xc] sm:$0xf]
        %v1077 = vld [vmem:[%s9] sm:$0x1]
        %v1079 = vlaneseq
        %v1080 = vshrl.u32 %v1079, 7
        %v1081 = vsub.s32 0, %v1080
        %v1082 = vrot.slane %v1077, %v1081
        %v1088 = vunpack.c.l.b16 %v1073
        %v1089 = vunpack.c.l.b16 %v1074
        %v1090 = vunpack.c.l.b16 %v1075
        %v1091 = vunpack.c.l.b16 %v1076
        %v1092 = vpack.c.b16 %v1089, %v1088
        %v1093 = vpack.c.b16 %v1091, %v1090
        %v1097 = vsel %vm413, %v1072, 0
        %1099 = vmatprep.subr.bf16.mxu0 0
        %1100 = vmatpush1.bf16.msra.mxu0 %v1092
        %1101 = vmatprep.subr.bf16.mxu0 0
        %1102 = vmatpush1.bf16.msra.mxu0 %v1093
        %1103 = vmatprep.subr.bf16.mxu0 0
        %1104 = vmatpush1.bf16.msra.mxu0 0
        %1105 = vmatprep.subr.bf16.mxu0 0
        %1106 = vmatpush1.bf16.msra.mxu0 0
        %1107 = vmatprep.subr.bf16.mxu0 0
        %1108 = vmatpush1.bf16.msra.mxu0 0
        %1109 = vmatprep.subr.bf16.mxu0 0
        %1110 = vmatpush1.bf16.msra.mxu0 0
        %1111 = vmatprep.subr.bf16.mxu0 0
        %1112 = vmatpush1.bf16.msra.mxu0 0
        %1113 = vmatprep.subr.bf16.mxu0 0
        %1114 = vmatpush1.bf16.msra.mxu0 0
        %1115 = vmatprep.subr.bf16.mxu0 0
        %1116 = vmatpush1.bf16.msra.mxu0 0
        %1117 = vmatprep.subr.bf16.mxu0 0
        %1118 = vmatpush1.bf16.msra.mxu0 0
        %1119 = vmatprep.subr.bf16.mxu0 0
        %1120 = vmatpush1.bf16.msra.mxu0 0
        %1121 = vmatprep.subr.bf16.mxu0 0
        %1122 = vmatpush1.bf16.msra.mxu0 0
        %1123 = vmatprep.subr.bf16.mxu0 0
        %1124 = vmatpush1.bf16.msra.mxu0 0
        %1125 = vmatprep.subr.bf16.mxu0 0
        %1126 = vmatpush1.bf16.msra.mxu0 0
        %1127 = vmatprep.subr.bf16.mxu0 0
        %1128 = vmatpush1.bf16.msra.mxu0 0
        %1129 = vmatprep.subr.bf16.mxu0 0
        %1130 = vmatpush1.bf16.msra.mxu0 0
        %1131 = vmatprep.mubr.bf16.mxu0 0
        %1132 = vmatmul.mubr.bf16.gmra.mrb[0].mxu0 %v1097
        %v1133 = vpop.f32.mrb[0].mxu0
        %v1134 = vadd.f32 %v1082, %v1133
        %v1135 = vpop.f32.mrb[0].mxu0
        %v1136 = vpop.f32.mrb[0].mxu0
        %v1137 = vpop.f32.mrb[0].mxu0
        %1138 = vdwg.mxu0
        %v1139 = vmul.f32 %v1134, 0.5
        %v1140 = vmul.f32 %v1134, 0.044715
        %v1141 = vmul.f32 %v1140, %v1134
        %v1142 = vmul.f32 %v1141, %v1134
        %v1143 = vadd.f32 %v1134, %v1142
        %v1144 = vmul.f32 %v1143, 0.7978846
        %v1145 = vtanh.pop %v1144
        %v1146 = vadd.f32 %v1145, 1.0
        %v1147 = vmul.f32 %v1139, %v1146
        %v1148 = vpack.c.bf16 %v1147, %v1147
        %v1149 = vld [vmem:[%s10] sm:$0xf]
        %v1150 = vld [vmem:[%s10 + $0x4] sm:$0xf]
        %v1151 = vld [vmem:[%s10 + $0x8] sm:$0xf]
        %v1152 = vld [vmem:[%s10 + $0xc] sm:$0xf]
        %v1153 = vld [vmem:[%s10 + $0x10] sm:$0xf]
        %v1154 = vld [vmem:[%s10 + $0x14] sm:$0xf]
        %v1155 = vld [vmem:[%s10 + $0x18] sm:$0xf]
        %v1156 = vld [vmem:[%s10 + $0x1c] sm:$0xf]
        %v1157 = vld [vmem:[%s10 + $0x20] sm:$0xf]
        %v1158 = vld [vmem:[%s10 + $0x24] sm:$0xf]
        %v1159 = vld [vmem:[%s10 + $0x28] sm:$0xf]
        %v1160 = vld [vmem:[%s10 + $0x2c] sm:$0xf]
        %v1161 = vld [vmem:[%s10 + $0x30] sm:$0xf]
        %v1162 = vld [vmem:[%s10 + $0x34] sm:$0xf]
        %v1163 = vld [vmem:[%s10 + $0x38] sm:$0xf]
        %v1164 = vld [vmem:[%s10 + $0x3c] sm:$0xf]
        %v1165 = vld [vmem:[%s11] sm:$0x1]
        %v1167 = vlaneseq
        %v1168 = vshrl.u32 %v1167, 7
        %v1169 = vsub.s32 0, %v1168
        %v1170 = vrot.slane %v1165, %v1169
        %v1188 = vunpack.c.l.b16 %v1149
        %v1189 = vunpack.c.l.b16 %v1150
        %v1190 = vunpack.c.l.b16 %v1151
        %v1191 = vunpack.c.l.b16 %v1152
        %v1192 = vunpack.c.l.b16 %v1153
        %v1193 = vunpack.c.l.b16 %v1154
        %v1194 = vunpack.c.l.b16 %v1155
        %v1195 = vunpack.c.l.b16 %v1156
        %v1196 = vunpack.c.l.b16 %v1157
        %v1197 = vunpack.c.l.b16 %v1158
        %v1198 = vunpack.c.l.b16 %v1159
        %v1199 = vunpack.c.l.b16 %v1160
        %v1200 = vunpack.c.l.b16 %v1161
        %v1201 = vunpack.c.l.b16 %v1162
        %v1202 = vunpack.c.l.b16 %v1163
        %v1203 = vunpack.c.l.b16 %v1164
        %v1204 = vpack.c.b16 %v1189, %v1188
        %v1205 = vpack.c.b16 %v1191, %v1190
        %v1206 = vpack.c.b16 %v1193, %v1192
        %v1207 = vpack.c.b16 %v1195, %v1194
        %v1208 = vpack.c.b16 %v1197, %v1196
        %v1209 = vpack.c.b16 %v1199, %v1198
        %v1210 = vpack.c.b16 %v1201, %v1200
        %v1211 = vpack.c.b16 %v1203, %v1202
        %1220 = vmatprep.subr.bf16.mxu0 0
        %1221 = vmatpush1.bf16.msra.mxu0 %v1204
        %1222 = vmatprep.subr.bf16.mxu0 0
        %1223 = vmatpush1.bf16.msra.mxu0 %v1205
        %1224 = vmatprep.subr.bf16.mxu0 0
        %1225 = vmatpush1.bf16.msra.mxu0 %v1206
        %1226 = vmatprep.subr.bf16.mxu0 0
        %1227 = vmatpush1.bf16.msra.mxu0 %v1207
        %1228 = vmatprep.subr.bf16.mxu0 0
        %1229 = vmatpush1.bf16.msra.mxu0 %v1208
        %1230 = vmatprep.subr.bf16.mxu0 0
        %1231 = vmatpush1.bf16.msra.mxu0 %v1209
        %1232 = vmatprep.subr.bf16.mxu0 0
        %1233 = vmatpush1.bf16.msra.mxu0 %v1210
        %1234 = vmatprep.subr.bf16.mxu0 0
        %1235 = vmatpush1.bf16.msra.mxu0 %v1211
        %1236 = vmatprep.subr.bf16.mxu0 0
        %1237 = vmatpush1.bf16.msra.mxu0 0
        %1238 = vmatprep.subr.bf16.mxu0 0
        %1239 = vmatpush1.bf16.msra.mxu0 0
        %1240 = vmatprep.subr.bf16.mxu0 0
        %1241 = vmatpush1.bf16.msra.mxu0 0
        %1242 = vmatprep.subr.bf16.mxu0 0
        %1243 = vmatpush1.bf16.msra.mxu0 0
        %1244 = vmatprep.subr.bf16.mxu0 0
        %1245 = vmatpush1.bf16.msra.mxu0 0
        %1246 = vmatprep.subr.bf16.mxu0 0
        %1247 = vmatpush1.bf16.msra.mxu0 0
        %1248 = vmatprep.subr.bf16.mxu0 0
        %1249 = vmatpush1.bf16.msra.mxu0 0
        %1250 = vmatprep.subr.bf16.mxu0 0
        %1251 = vmatpush1.bf16.msra.mxu0 0
        %1252 = vmatprep.mubr.bf16.mxu0 0
        %1253 = vmatmul.mubr.bf16.gmra.mrb[0].mxu0 %v1148
        %v1254 = vpop.f32.mrb[0].mxu0
        %v1255 = vadd.f32 %v1170, %v1254
        %v1256 = vpop.f32.mrb[0].mxu0
        %v1257 = vpop.f32.mrb[0].mxu0
        %v1258 = vpop.f32.mrb[0].mxu0
        %1259 = vdwg.mxu0
        %v1260 = vadd.f32 %v1042, %v1255
        %1261 = vst.msk [vmem:[%s404] sm:$0xff] %vm413, %v1260
        %s1262 = sand.u32 %s291, 1
        %s1263 = scalar_lea.sflag [#allocation4], %s1262
        %s1264 = sand.u32 %s291, 1
        %s1265 = smul.addr %s1264, 8
        %s1266 = scalar_lea.vmem [#allocation3], %s1265
        // Predicated region
        $region69: #{tpu_custom_call.1} parent=67 // pred_check
          %p1267 = pneg %p301
        $region70: #{tpu_custom_call.1} parent=67 // pred_check_branch
          %1269 = sbr.rel (%p1267) target = $region72
        $region71: #{tpu_custom_call.1} parent=67 // pred_region
          %s1271 = ssub.s32 128, 128
          %1272 = vsyncadd %s1263, %s1271
          %s1273 = smul.addr %s26, 128
          %s1274 = scalar_lea.hbm %s12, %s1273
          %s1276 = sshll.u32 %s1266, 4
          %s1277 = int_to_ptr.vmem [resolvable:$true] %s1276
          %1279 = dma.vmem_to_hbm [thread:$0]  %s1277, 128, %s1274, %s1263
        $region72: #{tpu_custom_call.1} parent=67 // pred_fallthru
          _
      $region68: #{tpu_custom_call.1} parent=5 // pred_fallthru
        _
      %p1280 = scmp.le.s32.totalorder 2, %s21
      // Predicated region
      $region73: #{tpu_custom_call.1} parent=5 // pred_check
        %p1281 = pneg %p1280
      $region74: #{tpu_custom_call.1} parent=5 // pred_check_branch
        %1283 = sbr.rel (%p1281) target = $region76
      $region75: #{tpu_custom_call.1} parent=5 // pred_region
        %s1284 = ssub.s32 %s21, 2
        // Predicated region
        $region77: #{tpu_custom_call.1} parent=75 // pred_check
          %p1285 = pneg %p307
        $region78: #{tpu_custom_call.1} parent=75 // pred_check_branch
          %1287 = sbr.rel (%p1285) target = $region80
        $region79: #{tpu_custom_call.1} parent=75 // pred_region
          %s1288 = sand.u32 %s292, 1
          %s1289 = scalar_lea.sflag [#allocation4], %s1288
          %s1290 = sand.u32 %s292, 1
          %s1291 = smul.addr %s1290, 8
          %s1292 = scalar_lea.vmem [#allocation3], %s1291
          %1293 = dma.done %s1289, 128
        $region80: #{tpu_custom_call.1} parent=75 // pred_fallthru
          _
      $region76: #{tpu_custom_call.1} parent=5 // pred_fallthru
        _
    $region6: #{tpu_custom_call.1} parent=1 // loop_footer
      %s25 = sadd.s32 1, %s21
    $region7: #{tpu_custom_call.1} parent=1 // loop_footer_branch
      %20 = sbr.rel target = $region3
    $region8: #{tpu_custom_call.1} parent=1 // loop_exit
      _
    %1294 = vsyncpa [#allocation4], 1
    %s1295 = scalar_lea.sflag [#allocation4], 1
    %1296 = vsyncpa %s1295, 1

// kernel: tpu_custom_call.1
$region0: #{tpu_custom_call.1}
  #allocation0 [shape = 'u32[]', space=smem, size = 0x4, offset = 0x4, fixed_abs, tag = 'smem constant byte address 0x4 - core index']
  #allocation1 [shape = 'u32[144,128]{1,0:T(1,128)}', space=vmem, size = 0x12000, scoped, tag = 'internal scratch']
  #allocation2 [shape = 'bf16[8,32]{1,0:T(8,128)(2,1)}', space=vmem, size = 0x800, scoped, tag = 'scratch operand']
  %s0 = inlined_call_operand.vmem [shape: f32[2,8,32], index: 0, kind: input, shape index: {}]
  %s1 = inlined_call_operand.vmem [shape: bf16[32,96], index: 1, kind: input, shape index: {}]
  %s2 = inlined_call_operand.vmem [shape: bf16[32,32], index: 2, kind: input, shape index: {}]
  %s3 = inlined_call_operand.vmem [shape: f32[1,32], index: 3, kind: input, shape index: {}]
  %s4 = inlined_call_operand.vmem [shape: f32[1,32], index: 4, kind: input, shape index: {}]
  %s5 = inlined_call_operand.vmem [shape: f32[1,32], index: 5, kind: input, shape index: {}]
  %s6 = inlined_call_operand.vmem [shape: f32[1,32], index: 6, kind: input, shape index: {}]
  %s7 = inlined_call_operand.vmem [shape: f32[1,32], index: 7, kind: input, shape index: {}]
  %s8 = inlined_call_operand.vmem [shape: bf16[32,128], index: 8, kind: input, shape index: {}]
  %s9 = inlined_call_operand.vmem [shape: f32[1,128], index: 9, kind: input, shape index: {}]
  %s10 = inlined_call_operand.vmem [shape: bf16[128,32], index: 10, kind: input, shape index: {}]
  %s11 = inlined_call_operand.vmem [shape: f32[1,32], index: 11, kind: input, shape index: {}]
  %s12 = inlined_call_operand.hbm [shape: f32[2,8,32], index: 12, kind: output, shape index: {}]
  %s13 = sld [smem:[#allocation0]]
  $region81: #{tpu_custom_call.1} parent=0
    _
  %s15 = ssub.s32 1, %s13
  %s16 = scalar_select 0, %s15, %s13
  $region1: #{tpu_custom_call.1} parent=0
    #allocation3 [shape = 'u8[8192]{0}', space=vmem, size = 0x2000, scoped, tag = 'output window, operand 0']
    #allocation4 [shape = 's32[2]{0}', space=sflag, size = 0x8, scoped, tag = 'scoped memory for tpu_custom_call.1']
    %17 = vsyncpa [#allocation4], 0
    %s18 = scalar_lea.sflag [#allocation4], 1
    %19 = vsyncpa %s18, 0
    loop: start=0, step=1, limit=4
    $region2: #{tpu_custom_call.1} parent=1 // loop_pre_header
      _
    $region3: #{tpu_custom_call.1} parent=1 // loop_header
      %s21 = sphi 0, %s25
      %p22 = scmp.ge.s32.totalorder %s21, 4
      %s31 = sphi 0, %s33
      %s34 = sphi 0, %s31
      %s35 = sphi 0, %s34
      %s51 = sphi 0, %s35
      %s55 = sphi 0, %s55
      %s57 = sphi 0, %s55
      %s58 = sphi 0, %s57
      %s72 = sphi 0, %s58
      %s76 = sphi 0, %s76
      %s78 = sphi 0, %s76
      %s79 = sphi 0, %s78
      %s93 = sphi 0, %s79
      %s97 = sphi 0, %s97
      %s99 = sphi 0, %s97
      %s100 = sphi 0, %s99
      %s114 = sphi 0, %s100
      %s118 = sphi 0, %s118
      %s120 = sphi 0, %s118
      %s121 = sphi 0, %s120
      %s135 = sphi 0, %s121
      %s139 = sphi 0, %s139
      %s141 = sphi 0, %s139
      %s142 = sphi 0, %s141
      %s156 = sphi 0, %s142
      %s160 = sphi 0, %s160
      %s162 = sphi 0, %s160
      %s163 = sphi 0, %s162
      %s177 = sphi 0, %s163
      %s181 = sphi 0, %s181
      %s183 = sphi 0, %s181
      %s184 = sphi 0, %s183
      %s198 = sphi 0, %s184
      %s202 = sphi 0, %s202
      %s204 = sphi 0, %s202
      %s205 = sphi 0, %s204
      %s219 = sphi 0, %s205
      %s223 = sphi 0, %s223
      %s225 = sphi 0, %s223
      %s226 = sphi 0, %s225
      %s240 = sphi 0, %s226
      %s244 = sphi 0, %s244
      %s246 = sphi 0, %s244
      %s247 = sphi 0, %s246
      %s261 = sphi 0, %s247
      %s265 = sphi 0, %s265
      %s267 = sphi 0, %s265
      %s268 = sphi 0, %s267
      %s282 = sphi 0, %s268
      %s288 = sphi 0, %s290
      %s291 = sphi 0, %s288
      %s292 = sphi 0, %s291
      %s308 = sphi 0, %s292
    $region4: #{tpu_custom_call.1} parent=1 // loop_header_branch
      %24 = sbr.rel (%p22) target = $region8
    $region5: #{tpu_custom_call.1} parent=1 // loop_body
      %s26 = ssub.s32 %s21, 1
      %s27 = ssub.s32 %s21, 2
      %s28 = sadd.s32 %s21, 1
      %s29 = ssub.s32 %s21, %s28
      %p30 = scmp.eq.s32.totalorder %s29, 0
      %s32 = sadd.s32 %s31, 1
      %s33 = scalar_select %p30, %s31, %s32
      %p36 = pneg %p30
      %p37 = scmp.eq.s32.totalorder %s21, 1
      %p38 = por %p36, %p37
      %p39 = scmp.ne.s32.totalorder %s31, %s34
      %p40 = scmp.eq.s32.totalorder %s21, 0
      %p41 = por %p39, %p40
      %p42 = scmp.ne.s32.totalorder %s31, %s34
      %p43 = scmp.eq.s32.totalorder %s26, 1
      %p44 = por %p42, %p43
      %p45 = scmp.ne.s32.totalorder %s34, %s35
      %p46 = scmp.eq.s32.totalorder %s26, 0
      %p47 = por %p45, %p46
      %p48 = scmp.ne.s32.totalorder %s34, %s35
      %p49 = scmp.eq.s32.totalorder %s27, 1
      %p50 = por %p48, %p49
      %p52 = scmp.ne.s32.totalorder %s35, %s51
      %p53 = scmp.eq.s32.totalorder %s27, 0
      %p54 = por %p52, %p53
      %s56 = sadd.s32 %s55, 1
      %p59 = scmp.eq.s32.totalorder %s21, 1
      %p60 = scmp.ne.s32.totalorder %s55, %s57
      %p61 = scmp.eq.s32.totalorder %s21, 0
      %p62 = por %p60, %p61
      %p63 = scmp.ne.s32.totalorder %s55, %s57
      %p64 = scmp.eq.s32.totalorder %s26, 1
      %p65 = por %p63, %p64
      %p66 = scmp.ne.s32.totalorder %s57, %s58
      %p67 = scmp.eq.s32.totalorder %s26, 0
      %p68 = por %p66, %p67
      %p69 = scmp.ne.s32.totalorder %s57, %s58
      %p70 = scmp.eq.s32.totalorder %s27, 1
      %p71 = por %p69, %p70
      %p73 = scmp.ne.s32.totalorder %s58, %s72
      %p74 = scmp.eq.s32.totalorder %s27, 0
      %p75 = por %p73, %p74
      %s77 = sadd.s32 %s76, 1
      %p80 = scmp.eq.s32.totalorder %s21, 1
      %p81 = scmp.ne.s32.totalorder %s76, %s78
      %p82 = scmp.eq.s32.totalorder %s21, 0
      %p83 = por %p81, %p82
      %p84 = scmp.ne.s32.totalorder %s76, %s78
      %p85 = scmp.eq.s32.totalorder %s26, 1
      %p86 = por %p84, %p85
      %p87 = scmp.ne.s32.totalorder %s78, %s79
      %p88 = scmp.eq.s32.totalorder %s26, 0
      %p89 = por %p87, %p88
      %p90 = scmp.ne.s32.totalorder %s78, %s79
      %p91 = scmp.eq.s32.totalorder %s27, 1
      %p92 = por %p90, %p91
      %p94 = scmp.ne.s32.totalorder %s79, %s93
      %p95 = scmp.eq.s32.totalorder %s27, 0
      %p96 = por %p94, %p95
      %s98 = sadd.s32 %s97, 1
      %p101 = scmp.eq.s32.totalorder %s21, 1
      %p102 = scmp.ne.s32.totalorder %s97, %s99
      %p103 = scmp.eq.s32.totalorder %s21, 0
      %p104 = por %p102, %p103
      %p105 = scmp.ne.s32.totalorder %s97, %s99
      %p106 = scmp.eq.s32.totalorder %s26, 1
      %p107 = por %p105, %p106
      %p108 = scmp.ne.s32.totalorder %s99, %s100
      %p109 = scmp.eq.s32.totalorder %s26, 0
      %p110 = por %p108, %p109
      %p111 = scmp.ne.s32.totalorder %s99, %s100
      %p112 = scmp.eq.s32.totalorder %s27, 1
      %p113 = por %p111, %p112
      %p115 = scmp.ne.s32.totalorder %s100, %s114
      %p116 = scmp.eq.s32.totalorder %s27, 0
      %p117 = por %p115, %p116
      %s119 = sadd.s32 %s118, 1
      %p122 = scmp.eq.s32.totalorder %s21, 1
      %p123 = scmp.ne.s32.totalorder %s118, %s120
      %p124 = scmp.eq.s32.totalorder %s21, 0
      %p125 = por %p123, %p124
      %p126 = scmp.ne.s32.totalorder %s118, %s120
      %p127 = scmp.eq.s32.totalorder %s26, 1
      %p128 = por %p126, %p127
      %p129 = scmp.ne.s32.totalorder %s120, %s121
      %p130 = scmp.eq.s32.totalorder %s26, 0
      %p131 = por %p129, %p130
      %p132 = scmp.ne.s32.totalorder %s120, %s121
      %p133 = scmp.eq.s32.totalorder %s27, 1
      %p134 = por %p132, %p133
      %p136 = scmp.ne.s32.totalorder %s121, %s135
      %p137 = scmp.eq.s32.totalorder %s27, 0
      %p138 = por %p136, %p137
      %s140 = sadd.s32 %s139, 1
      %p143 = scmp.eq.s32.totalorder %s21, 1
      %p144 = scmp.ne.s32.totalorder %s139, %s141
      %p145 = scmp.eq.s32.totalorder %s21, 0
      %p146 = por %p144, %p145
      %p147 = scmp.ne.s32.totalorder %s139, %s141
      %p148 = scmp.eq.s32.totalorder %s26, 1
      %p149 = por %p147, %p148
      %p150 = scmp.ne.s32.totalorder %s141, %s142
      %p151 = scmp.eq.s32.totalorder %s26, 0
      %p152 = por %p150, %p151
      %p153 = scmp.ne.s32.totalorder %s141, %s142
      %p154 = scmp.eq.s32.totalorder %s27, 1
      %p155 = por %p153, %p154
      %p157 = scmp.ne.s32.totalorder %s142, %s156
      %p158 = scmp.eq.s32.totalorder %s27, 0
      %p159 = por %p157, %p158
      %s161 = sadd.s32 %s160, 1
      %p164 = scmp.eq.s32.totalorder %s21, 1
      %p165 = scmp.ne.s32.totalorder %s160, %s162
      %p166 = scmp.eq.s32.totalorder %s21, 0
      %p167 = por %p165, %p166
      %p168 = scmp.ne.s32.totalorder %s160, %s162
      %p169 = scmp.eq.s32.totalorder %s26, 1
      %p170 = por %p168, %p169
      %p171 = scmp.ne.s32.totalorder %s162, %s163
      %p172 = scmp.eq.s32.totalorder %s26, 0
      %p173 = por %p171, %p172
      %p174 = scmp.ne.s32.totalorder %s162, %s163
      %p175 = scmp.eq.s32.totalorder %s27, 1
      %p176 = por %p174, %p175
      %p178 = scmp.ne.s32.totalorder %s163, %s177
      %p179 = scmp.eq.s32.totalorder %s27, 0
      %p180 = por %p178, %p179
      %s182 = sadd.s32 %s181, 1
      %p185 = scmp.eq.s32.totalorder %s21, 1
      %p186 = scmp.ne.s32.totalorder %s181, %s183
      %p187 = scmp.eq.s32.totalorder %s21, 0
      %p188 = por %p186, %p187
      %p189 = scmp.ne.s32.totalorder %s181, %s183
      %p190 = scmp.eq.s32.totalorder %s26, 1
      %p191 = por %p189, %p190
      %p192 = scmp.ne.s32.totalorder %s183, %s184
      %p193 = scmp.eq.s32.totalorder %s26, 0
      %p194 = por %p192, %p193
      %p195 = scmp.ne.s32.totalorder %s183, %s184
      %p196 = scmp.eq.s32.totalorder %s27, 1
      %p197 = por %p195, %p196
      %p199 = scmp.ne.s32.totalorder %s184, %s198
      %p200 = scmp.eq.s32.totalorder %s27, 0
      %p201 = por %p199, %p200
      %s203 = sadd.s32 %s202, 1
      %p206 = scmp.eq.s32.totalorder %s21, 1
      %p207 = scmp.ne.s32.totalorder %s202, %s204
      %p208 = scmp.eq.s32.totalorder %s21, 0
      %p209 = por %p207, %p208
      %p210 = scmp.ne.s32.totalorder %s202, %s204
      %p211 = scmp.eq.s32.totalorder %s26, 1
      %p212 = por %p210, %p211
      %p213 = scmp.ne.s32.totalorder %s204, %s205
      %p214 = scmp.eq.s32.totalorder %s26, 0
      %p215 = por %p213, %p214
      %p216 = scmp.ne.s32.totalorder %s204, %s205
      %p217 = scmp.eq.s32.totalorder %s27, 1
      %p218 = por %p216, %p217
      %p220 = scmp.ne.s32.totalorder %s205, %s219
      %p221 = scmp.eq.s32.totalorder %s27, 0
      %p222 = por %p220, %p221
      %s224 = sadd.s32 %s223, 1
      %p227 = scmp.eq.s32.totalorder %s21, 1
      %p228 = scmp.ne.s32.totalorder %s223, %s225
      %p229 = scmp.eq.s32.totalorder %s21, 0
      %p230 = por %p228, %p229
      %p231 = scmp.ne.s32.totalorder %s223, %s225
      %p232 = scmp.eq.s32.totalorder %s26, 1
      %p233 = por %p231, %p232
      %p234 = scmp.ne.s32.totalorder %s225, %s226
      %p235 = scmp.eq.s32.totalorder %s26, 0
      %p236 = por %p234, %p235
      %p237 = scmp.ne.s32.totalorder %s225, %s226
      %p238 = scmp.eq.s32.totalorder %s27, 1
      %p239 = por %p237, %p238
      %p241 = scmp.ne.s32.totalorder %s226, %s240
      %p242 = scmp.eq.s32.totalorder %s27, 0
      %p243 = por %p241, %p242
      %s245 = sadd.s32 %s244, 1
      %p248 = scmp.eq.s32.totalorder %s21, 1
      %p249 = scmp.ne.s32.totalorder %s244, %s246
      %p250 = scmp.eq.s32.totalorder %s21, 0
      %p251 = por %p249, %p250
      %p252 = scmp.ne.s32.totalorder %s244, %s246
      %p253 = scmp.eq.s32.totalorder %s26, 1
      %p254 = por %p252, %p253
      %p255 = scmp.ne.s32.totalorder %s246, %s247
      %p256 = scmp.eq.s32.totalorder %s26, 0
      %p257 = por %p255, %p256
      %p258 = scmp.ne.s32.totalorder %s246, %s247
      %p259 = scmp.eq.s32.totalorder %s27, 1
      %p260 = por %p258, %p259
      %p262 = scmp.ne.s32.totalorder %s247, %s261
      %p263 = scmp.eq.s32.totalorder %s27, 0
      %p264 = por %p262, %p263
      %s266 = sadd.s32 %s265, 1
      %p269 = scmp.eq.s32.totalorder %s21, 1
      %p270 = scmp.ne.s32.totalorder %s265, %s267
      %p271 = scmp.eq.s32.totalorder %s21, 0
      %p272 = por %p270, %p271
      %p273 = scmp.ne.s32.totalorder %s265, %s267
      %p274 = scmp.eq.s32.totalorder %s26, 1
      %p275 = por %p273, %p274
      %p276 = scmp.ne.s32.totalorder %s267, %s268
      %p277 = scmp.eq.s32.totalorder %s26, 0
      %p278 = por %p276, %p277
      %p279 = scmp.ne.s32.totalorder %s267, %s268
      %p280 = scmp.eq.s32.totalorder %s27, 1
      %p281 = por %p279, %p280
      %p283 = scmp.ne.s32.totalorder %s268, %s282
      %p284 = scmp.eq.s32.totalorder %s27, 0
      %p285 = por %p283, %p284
      %s286 = ssub.s32 %s21, %s28
      %p287 = scmp.eq.s32.totalorder %s286, 0
      %s289 = sadd.s32 %s288, 1
      %s290 = scalar_select %p287, %s288, %s289
      %p293 = pneg %p287
      %p294 = scmp.eq.s32.totalorder %s21, 1
      %p295 = por %p293, %p294
      %p296 = scmp.ne.s32.totalorder %s288, %s291
      %p297 = scmp.eq.s32.totalorder %s21, 0
      %p298 = por %p296, %p297
      %p299 = scmp.ne.s32.totalorder %s288, %s291
      %p300 = scmp.eq.s32.totalorder %s26, 1
      %p301 = por %p299, %p300
      %p302 = scmp.ne.s32.totalorder %s291, %s292
      %p303 = scmp.eq.s32.totalorder %s26, 0
      %p304 = por %p302, %p303
      %p305 = scmp.ne.s32.totalorder %s291, %s292
      %p306 = scmp.eq.s32.totalorder %s27, 1
      %p307 = por %p305, %p306
      %p309 = scmp.ne.s32.totalorder %s292, %s308
      %p310 = scmp.eq.s32.totalorder %s27, 0
      %p311 = por %p309, %p310
      %p312 = scmp.le.s32.totalorder 1, %s21
      %p313 = scmp.lt.s32.totalorder %s21, 3
      %p314 = pnand %p312, %p313
      %p315 = pneg %p314
      // Predicated region
      $region9: #{tpu_custom_call.1} parent=5 // pred_check
        _
      $region10: #{tpu_custom_call.1} parent=5 // pred_check_branch
        %317 = sbr.rel (%p314) target = $region12
      $region11: #{tpu_custom_call.1} parent=5 // pred_region
        %s318 = ssub.s32 %s21, 1
        // Predicated region
        $region13: #{tpu_custom_call.1} parent=11 // pred_check
          %p319 = pneg %p68
        $region14: #{tpu_custom_call.1} parent=11 // pred_check_branch
          %321 = sbr.rel (%p319) target = $region16
        $region15: #{tpu_custom_call.1} parent=11 // pred_region
          _
        $region16: #{tpu_custom_call.1} parent=11 // pred_fallthru
          _
        // Predicated region
        $region17: #{tpu_custom_call.1} parent=11 // pred_check
          %p322 = pneg %p89
        $region18: #{tpu_custom_call.1} parent=11 // pred_check_branch
          %324 = sbr.rel (%p322) target = $region20
        $region19: #{tpu_custom_call.1} parent=11 // pred_region
          _
        $region20: #{tpu_custom_call.1} parent=11 // pred_fallthru
          _
        // Predicated region
        $region21: #{tpu_custom_call.1} parent=11 // pred_check
          %p325 = pneg %p110
        $region22: #{tpu_custom_call.1} parent=11 // pred_check_branch
          %327 = sbr.rel (%p325) target = $region24
        $region23: #{tpu_custom_call.1} parent=11 // pred_region
          _
        $region24: #{tpu_custom_call.1} parent=11 // pred_fallthru
          _
        // Predicated region
        $region25: #{tpu_custom_call.1} parent=11 // pred_check
          %p328 = pneg %p131
        $region26: #{tpu_custom_call.1} parent=11 // pred_check_branch
          %330 = sbr.rel (%p328) target = $region28
        $region27: #{tpu_custom_call.1} parent=11 // pred_region
          _
        $region28: #{tpu_custom_call.1} parent=11 // pred_fallthru
          _
        // Predicated region
        $region29: #{tpu_custom_call.1} parent=11 // pred_check
          %p331 = pneg %p152
        $region30: #{tpu_custom_call.1} parent=11 // pred_check_branch
          %333 = sbr.rel (%p331) target = $region32
        $region31: #{tpu_custom_call.1} parent=11 // pred_region
          _
        $region32: #{tpu_custom_call.1} parent=11 // pred_fallthru
          _
        // Predicated region
        $region33: #{tpu_custom_call.1} parent=11 // pred_check
          %p334 = pneg %p173
        $region34: #{tpu_custom_call.1} parent=11 // pred_check_branch
          %336 = sbr.rel (%p334) target = $region36
        $region35: #{tpu_custom_call.1} parent=11 // pred_region
          _
        $region36: #{tpu_custom_call.1} parent=11 // pred_fallthru
          _
        // Predicated region
        $region37: #{tpu_custom_call.1} parent=11 // pred_check
          %p337 = pneg %p194
        $region38: #{tpu_custom_call.1} parent=11 // pred_check_branch
          %339 = sbr.rel (%p337) target = $region40
        $region39: #{tpu_custom_call.1} parent=11 // pred_region
          _
        $region40: #{tpu_custom_call.1} parent=11 // pred_fallthru
          _
        // Predicated region
        $region41: #{tpu_custom_call.1} parent=11 // pred_check
          %p340 = pneg %p215
        $region42: #{tpu_custom_call.1} parent=11 // pred_check_branch
          %342 = sbr.rel (%p340) target = $region44
        $region43: #{tpu_custom_call.1} parent=11 // pred_region
          _
        $region44: #{tpu_custom_call.1} parent=11 // pred_fallthru
          _
        // Predicated region
        $region45: #{tpu_custom_call.1} parent=11 // pred_check
          %p343 = pneg %p236
        $region46: #{tpu_custom_call.1} parent=11 // pred_check_branch
          %345 = sbr.rel (%p343) target = $region48
        $region47: #{tpu_custom_call.1} parent=11 // pred_region
          _
        $region48: #{tpu_custom_call.1} parent=11 // pred_fallthru
          _
        // Predicated region
        $region49: #{tpu_custom_call.1} parent=11 // pred_check
          %p346 = pneg %p257
        $region50: #{tpu_custom_call.1} parent=11 // pred_check_branch
          %348 = sbr.rel (%p346) target = $region52
        $region51: #{tpu_custom_call.1} parent=11 // pred_region
          _
        $region52: #{tpu_custom_call.1} parent=11 // pred_fallthru
          _
        // Predicated region
        $region53: #{tpu_custom_call.1} parent=11 // pred_check
          %p349 = pneg %p278
        $region54: #{tpu_custom_call.1} parent=11 // pred_check_branch
          %351 = sbr.rel (%p349) target = $region56
        $region55: #{tpu_custom_call.1} parent=11 // pred_region
          _
        $region56: #{tpu_custom_call.1} parent=11 // pred_fallthru
          _
      $region12: #{tpu_custom_call.1} parent=5 // pred_fallthru
        _
      %p352 = scmp.lt.s32.totalorder %s21, 2
      // Predicated region
      $region57: #{tpu_custom_call.1} parent=5 // pred_check
        %p353 = pneg %p352
      $region58: #{tpu_custom_call.1} parent=5 // pred_check_branch
        %355 = sbr.rel (%p353) target = $region60
      $region59: #{tpu_custom_call.1} parent=5 // pred_region
        // Predicated region
        $region61: #{tpu_custom_call.1} parent=59 // pred_check
          %p356 = pneg %p41
        $region62: #{tpu_custom_call.1} parent=59 // pred_check_branch
          %358 = sbr.rel (%p356) target = $region64
        $region63: #{tpu_custom_call.1} parent=59 // pred_region
          %p359 = scmp.lt.s32.totalorder %s21, 1
          %s360 = scalar_select %p359, %s21, 1
          %s361 = smul.addr %s360, 8
          %s362 = scalar_lea.vmem %s0, %s361
        $region64: #{tpu_custom_call.1} parent=59 // pred_fallthru
          _
      $region60: #{tpu_custom_call.1} parent=5 // pred_fallthru
        _
      %p363 = scmp.le.s32.totalorder 1, %s21
      %p364 = scmp.lt.s32.totalorder %s21, 3
      %p365 = pnand %p363, %p364
      %p366 = pneg %p365
      // Predicated region
      $region65: #{tpu_custom_call.1} parent=5 // pred_check
        _
      $region66: #{tpu_custom_call.1} parent=5 // pred_check_branch
        %368 = sbr.rel (%p365) target = $region68
      $region67: #{tpu_custom_call.1} parent=5 // pred_region
        %s369 = ssub.s32 %s21, 1
        %p370 = scmp.lt.s32.totalorder %s26, 1
        %s371 = scalar_select %p370, %s26, 1
        %s372 = smul.addr %s371, 8
        %s373 = scalar_lea.vmem %s0, %s372
        %p374 = pneg %p47
        %p375 = pneg %p44
        %p376 = pneg %p68
        %p377 = pneg %p65
        %p378 = pneg %p89
        %p379 = pneg %p86
        %p380 = pneg %p110
        %p381 = pneg %p107
        %p382 = pneg %p131
        %p383 = pneg %p128
        %p384 = pneg %p152
        %p385 = pneg %p149
        %p386 = pneg %p173
        %p387 = pneg %p170
        %p388 = pneg %p194
        %p389 = pneg %p191
        %p390 = pneg %p215
        %p391 = pneg %p212
        %p392 = pneg %p236
        %p393 = pneg %p233
        %p394 = pneg %p257
        %p395 = pneg %p254
        %p396 = pneg %p278
        %p397 = pneg %p275
        %p398 = pneg %p304
        %p399 = pneg %p301
        %s400 = sand.u32 %s291, 1
        %s401 = scalar_lea.sflag [#allocation4], %s400
        %s402 = sand.u32 %s291, 1
        %s403 = smul.addr %s402, 8
        %s404 = scalar_lea.vmem [#allocation3], %s403
        %p405 = scmp.lt.s32.totalorder %s26, 1
        %s406 = scalar_select %p405, %s26, 1
        %s407 = smul.addr %s406, 8
        %s408 = scalar_lea.vmem %s0, %s407
        %v410 = vld [vmem:[%s408] sm:$0xff]
        %v411 = vld [vmem:[%s4] sm:$0x1]
        %v412 = vld [vmem:[%s5] sm:$0x1]
        %vm413 = vcmask 261120
        %v414 = vsel %vm413, %v410, 0.0
        %415 = vadd.xlane.f32.xlu0 %v414
        %v416 = vpop.xlane.xlu0 %415
        %v417 = vrcp.pop 32.0
        %v418 = vmul.f32 %v416, %v417
        %v419 = vsub.f32 %v410, %v418
        %v420 = vmul.f32 %v419, %v419
        %v421 = vsel %vm413, %v420, 0.0
        %422 = vadd.xlane.f32.xlu0 %v421
        %v423 = vpop.xlane.xlu0 %422
        %v424 = vmul.f32 %v423, %v417
        %v425 = vadd.f32 %v424, 1e-05
        %v426 = vrsqrt.pop %v425
        %v427 = vmul.f32 %v419, %v426
        %v429 = vlaneseq
        %v430 = vshrl.u32 %v429, 7
        %v431 = vsub.s32 0, %v430
        %v432 = vrot.slane %v411, %v431
        %v434 = vmul.f32 %v427, %v432
        %v436 = vlaneseq
        %v437 = vshrl.u32 %v436, 7
        %v438 = vsub.s32 0, %v437
        %v439 = vrot.slane %v412, %v438
        %v441 = vadd.f32 %v434, %v439
        %v442 = vpack.c.bf16 %v441, %v441
        %v443 = vld [vmem:[%s1] sm:$0xf]
        %v444 = vld [vmem:[%s1 + $0x4] sm:$0xf]
        %v445 = vld [vmem:[%s1 + $0x8] sm:$0xf]
        %v446 = vld [vmem:[%s1 + $0xc] sm:$0xf]
        %v451 = vunpack.c.l.b16 %v443
        %v452 = vunpack.c.l.b16 %v444
        %v453 = vunpack.c.l.b16 %v445
        %v454 = vunpack.c.l.b16 %v446
        %v455 = vpack.c.b16 %v452, %v451
        %v456 = vpack.c.b16 %v454, %v453
        %v460 = vsel %vm413, %v442, 0
        %462 = vmatprep.subr.bf16.mxu0 0
        %463 = vmatpush1.bf16.msra.mxu0 %v455
        %464 = vmatprep.subr.bf16.mxu0 0
        %465 = vmatpush1.bf16.msra.mxu0 %v456
        %466 = vmatprep.subr.bf16.mxu0 0
        %467 = vmatpush1.bf16.msra.mxu0 0
        %468 = vmatprep.subr.bf16.mxu0 0
        %469 = vmatpush1.bf16.msra.mxu0 0
        %470 = vmatprep.subr.bf16.mxu0 0
        %471 = vmatpush1.bf16.msra.mxu0 0
        %472 = vmatprep.subr.bf16.mxu0 0
        %473 = vmatpush1.bf16.msra.mxu0 0
        %474 = vmatprep.subr.bf16.mxu0 0
        %475 = vmatpush1.bf16.msra.mxu0 0
        %476 = vmatprep.subr.bf16.mxu0 0
        %477 = vmatpush1.bf16.msra.mxu0 0
        %478 = vmatprep.subr.bf16.mxu0 0
        %479 = vmatpush1.bf16.msra.mxu0 0
        %480 = vmatprep.subr.bf16.mxu0 0
        %481 = vmatpush1.bf16.msra.mxu0 0
        %482 = vmatprep.subr.bf16.mxu0 0
        %483 = vmatpush1.bf16.msra.mxu0 0
        %484 = vmatprep.subr.bf16.mxu0 0
        %485 = vmatpush1.bf16.msra.mxu0 0
        %486 = vmatprep.subr.bf16.mxu0 0
        %487 = vmatpush1.bf16.msra.mxu0 0
        %488 = vmatprep.subr.bf16.mxu0 0
        %489 = vmatpush1.bf16.msra.mxu0 0
        %490 = vmatprep.subr.bf16.mxu0 0
        %491 = vmatpush1.bf16.msra.mxu0 0
        %492 = vmatprep.subr.bf16.mxu0 0
        %493 = vmatpush1.bf16.msra.mxu0 0
        %494 = vmatprep.mubr.bf16.mxu0 0
        %495 = vmatmul.mubr.bf16.gmra.mrb[0].mxu0 %v460
        %v496 = vpop.f32.mrb[0].mxu0
        %v497 = vadd.f32 0.0, %v496
        %v498 = vpop.f32.mrb[0].mxu0
        %v499 = vpop.f32.mrb[0].mxu0
        %v500 = vpop.f32.mrb[0].mxu0
        %501 = vdwg.mxu0
        %v502 = vpack.c.bf16 %v497, %v497
        %504 = vrot.lane.b32.xlu0 %v502, 96
        %v505 = vpop.permute.xlu0 %504
        %vm506 = vcmask 64512
        %v508 = vsel %vm506, %v502, 0
        %v511 = vsel %vm506, %v505, 0
        %513 = vmatprep.subr.bf16.mxu0 0
        %514 = vmatpush1.bf16.xpose.msra.mxu0 %v511
        %515 = vmatprep.subr.bf16.mxu0 0
        %516 = vmatpush1.bf16.xpose.msra.mxu0 0
        %517 = vmatprep.subr.bf16.mxu0 0
        %518 = vmatpush1.bf16.xpose.msra.mxu0 0
        %519 = vmatprep.subr.bf16.mxu0 0
        %520 = vmatpush1.bf16.xpose.msra.mxu0 0
        %521 = vmatprep.subr.bf16.mxu0 0
        %522 = vmatpush1.bf16.xpose.msra.mxu0 0
        %523 = vmatprep.subr.bf16.mxu0 0
        %524 = vmatpush1.bf16.xpose.msra.mxu0 0
        %525 = vmatprep.subr.bf16.mxu0 0
        %526 = vmatpush1.bf16.xpose.msra.mxu0 0
        %527 = vmatprep.subr.bf16.mxu0 0
        %528 = vmatpush1.bf16.xpose.msra.mxu0 0
        %529 = vmatprep.subr.bf16.mxu0 0
        %530 = vmatpush1.bf16.xpose.msra.mxu0 0
        %531 = vmatprep.subr.bf16.mxu0 0
        %532 = vmatpush1.bf16.xpose.msra.mxu0 0
        %533 = vmatprep.subr.bf16.mxu0 0
        %534 = vmatpush1.bf16.xpose.msra.mxu0 0
        %535 = vmatprep.subr.bf16.mxu0 0
        %536 = vmatpush1.bf16.xpose.msra.mxu0 0
        %537 = vmatprep.subr.bf16.mxu0 0
        %538 = vmatpush1.bf16.xpose.msra.mxu0 0
        %539 = vmatprep.subr.bf16.mxu0 0
        %540 = vmatpush1.bf16.xpose.msra.mxu0 0
        %541 = vmatprep.subr.bf16.mxu0 0
        %542 = vmatpush1.bf16.xpose.msra.mxu0 0
        %543 = vmatprep.subr.bf16.mxu0 0
        %544 = vmatpush1.bf16.xpose.msra.mxu0 0
        %545 = vmatprep.mubr.bf16.mxu0 0
        %546 = vmatmul.mubr.bf16.gmra.mrb[0].mxu0 %v508
        %v547 = vpop.f32.mrb[0].mxu0
        %v548 = vadd.f32 0.0, %v547
        %v549 = vpop.f32.mrb[0].mxu0
        %v550 = vpop.f32.mrb[0].mxu0
        %v551 = vpop.f32.mrb[0].mxu0
        %552 = vdwg.mxu0
        %v553 = vsel %vm506, %v548, -inf
        %554 = vmax.xlane.f32.xlu0 %v553
        %v555 = vpop.xlane.xlu0 %554
        %v556 = vsub.f32 %v548, %v555
        %v557 = vmul.f32 %v556, 1.442695
        %v558 = vpow.pop %v557
        %v559 = vsel %vm506, %v558, 0.0
        %560 = vadd.xlane.f32.xlu0 %v559
        %v561 = vpop.xlane.xlu0 %560
        %v562 = vrcp.pop %v561
        %v563 = vmul.f32 %v558, %v562
        %v564 = vpack.c.bf16 %v563, %v563
        %565 = vrot.lane.b32.xlu0 %v502, 64
        %v566 = vpop.permute.xlu0 %565
        %v568 = vsel %vm506, %v564, 0
        %vm570 = vcmask 1043456
        %v572 = vsel %vm570, %v566, 0
        %574 = vmatprep.subr.bf16.mxu0 0
        %575 = vmatpush1.bf16.msra.mxu0 %v572
        %576 = vmatprep.subr.bf16.mxu0 0
        %577 = vmatpush1.bf16.msra.mxu0 0
        %578 = vmatprep.subr.bf16.mxu0 0
        %579 = vmatpush1.bf16.msra.mxu0 0
        %580 = vmatprep.subr.bf16.mxu0 0
        %581 = vmatpush1.bf16.msra.mxu0 0
        %582 = vmatprep.subr.bf16.mxu0 0
        %583 = vmatpush1.bf16.msra.mxu0 0
        %584 = vmatprep.subr.bf16.mxu0 0
        %585 = vmatpush1.bf16.msra.mxu0 0
        %586 = vmatprep.subr.bf16.mxu0 0
        %587 = vmatpush1.bf16.msra.mxu0 0
        %588 = vmatprep.subr.bf16.mxu0 0
        %589 = vmatpush1.bf16.msra.mxu0 0
        %590 = vmatprep.subr.bf16.mxu0 0
        %591 = vmatpush1.bf16.msra.mxu0 0
        %592 = vmatprep.subr.bf16.mxu0 0
        %593 = vmatpush1.bf16.msra.mxu0 0
        %594 = vmatprep.subr.bf16.mxu0 0
        %595 = vmatpush1.bf16.msra.mxu0 0
        %596 = vmatprep.subr.bf16.mxu0 0
        %597 = vmatpush1.bf16.msra.mxu0 0
        %598 = vmatprep.subr.bf16.mxu0 0
        %599 = vmatpush1.bf16.msra.mxu0 0
        %600 = vmatprep.subr.bf16.mxu0 0
        %601 = vmatpush1.bf16.msra.mxu0 0
        %602 = vmatprep.subr.bf16.mxu0 0
        %603 = vmatpush1.bf16.msra.mxu0 0
        %604 = vmatprep.subr.bf16.mxu0 0
        %605 = vmatpush1.bf16.msra.mxu0 0
        %606 = vmatprep.mubr.bf16.mxu0 0
        %607 = vmatmul.mubr.bf16.gmra.mrb[0].mxu0 %v568
        %v608 = vpop.f32.mrb[0].mxu0
        %v609 = vadd.f32 0.0, %v608
        %v610 = vpop.f32.mrb[0].mxu0
        %v611 = vpop.f32.mrb[0].mxu0
        %v612 = vpop.f32.mrb[0].mxu0
        %613 = vdwg.mxu0
        %v614 = vpack.c.bf16 %v609, %v609
        %vm615 = vcmask 60416
        %616 = vst.msk [vmem:[#allocation2] sm:$0xf] %vm615, %v614
        %617 = vrot.lane.b32.xlu0 %v502, 120
        %v618 = vpop.permute.xlu0 %617
        %619 = vrot.lane.b32.xlu0 %v502, 88
        %v620 = vpop.permute.xlu0 %619
        %v622 = vsel %vm506, %v618, 0
        %v625 = vsel %vm506, %v620, 0
        %627 = vmatprep.subr.bf16.mxu0 0
        %628 = vmatpush1.bf16.xpose.msra.mxu0 %v625
        %629 = vmatprep.subr.bf16.mxu0 0
        %630 = vmatpush1.bf16.xpose.msra.mxu0 0
        %631 = vmatprep.subr.bf16.mxu0 0
        %632 = vmatpush1.bf16.xpose.msra.mxu0 0
        %633 = vmatprep.subr.bf16.mxu0 0
        %634 = vmatpush1.bf16.xpose.msra.mxu0 0
        %635 = vmatprep.subr.bf16.mxu0 0
        %636 = vmatpush1.bf16.xpose.msra.mxu0 0
        %637 = vmatprep.subr.bf16.mxu0 0
        %638 = vmatpush1.bf16.xpose.msra.mxu0 0
        %639 = vmatprep.subr.bf16.mxu0 0
        %640 = vmatpush1.bf16.xpose.msra.mxu0 0
        %641 = vmatprep.subr.bf16.mxu0 0
        %642 = vmatpush1.bf16.xpose.msra.mxu0 0
        %643 = vmatprep.subr.bf16.mxu0 0
        %644 = vmatpush1.bf16.xpose.msra.mxu0 0
        %645 = vmatprep.subr.bf16.mxu0 0
        %646 = vmatpush1.bf16.xpose.msra.mxu0 0
        %647 = vmatprep.subr.bf16.mxu0 0
        %648 = vmatpush1.bf16.xpose.msra.mxu0 0
        %649 = vmatprep.subr.bf16.mxu0 0
        %650 = vmatpush1.bf16.xpose.msra.mxu0 0
        %651 = vmatprep.subr.bf16.mxu0 0
        %652 = vmatpush1.bf16.xpose.msra.mxu0 0
        %653 = vmatprep.subr.bf16.mxu0 0
        %654 = vmatpush1.bf16.xpose.msra.mxu0 0
        %655 = vmatprep.subr.bf16.mxu0 0
        %656 = vmatpush1.bf16.xpose.msra.mxu0 0
        %657 = vmatprep.subr.bf16.mxu0 0
        %658 = vmatpush1.bf16.xpose.msra.mxu0 0
        %659 = vmatprep.mubr.bf16.mxu0 0
        %660 = vmatmul.mubr.bf16.gmra.mrb[0].mxu0 %v622
        %v661 = vpop.f32.mrb[0].mxu0
        %v662 = vadd.f32 0.0, %v661
        %v663 = vpop.f32.mrb[0].mxu0
        %v664 = vpop.f32.mrb[0].mxu0
        %v665 = vpop.f32.mrb[0].mxu0
        %666 = vdwg.mxu0
        %v667 = vsel %vm506, %v662, -inf
        %668 = vmax.xlane.f32.xlu0 %v667
        %v669 = vpop.xlane.xlu0 %668
        %v670 = vsub.f32 %v662, %v669
        %v671 = vmul.f32 %v670, 1.442695
        %v672 = vpow.pop %v671
        %v673 = vsel %vm506, %v672, 0.0
        %674 = vadd.xlane.f32.xlu0 %v673
        %v675 = vpop.xlane.xlu0 %674
        %v676 = vrcp.pop %v675
        %v677 = vmul.f32 %v672, %v676
        %v678 = vpack.c.bf16 %v677, %v677
        %679 = vrot.lane.b32.xlu0 %v502, 56
        %v680 = vpop.permute.xlu0 %679
        %v682 = vsel %vm506, %v678, 0
        %v685 = vsel %vm570, %v680, 0
        %687 = vmatprep.subr.bf16.mxu0 0
        %688 = vmatpush1.bf16.msra.mxu0 %v685
        %689 = vmatprep.subr.bf16.mxu0 0
        %690 = vmatpush1.bf16.msra.mxu0 0
        %691 = vmatprep.subr.bf16.mxu0 0
        %692 = vmatpush1.bf16.msra.mxu0 0
        %693 = vmatprep.subr.bf16.mxu0 0
        %694 = vmatpush1.bf16.msra.mxu0 0
        %695 = vmatprep.subr.bf16.mxu0 0
        %696 = vmatpush1.bf16.msra.mxu0 0
        %697 = vmatprep.subr.bf16.mxu0 0
        %698 = vmatpush1.bf16.msra.mxu0 0
        %699 = vmatprep.subr.bf16.mxu0 0
        %700 = vmatpush1.bf16.msra.mxu0 0
        %701 = vmatprep.subr.bf16.mxu0 0
        %702 = vmatpush1.bf16.msra.mxu0 0
        %703 = vmatprep.subr.bf16.mxu0 0
        %704 = vmatpush1.bf16.msra.mxu0 0
        %705 = vmatprep.subr.bf16.mxu0 0
        %706 = vmatpush1.bf16.msra.mxu0 0
        %707 = vmatprep.subr.bf16.mxu0 0
        %708 = vmatpush1.bf16.msra.mxu0 0
        %709 = vmatprep.subr.bf16.mxu0 0
        %710 = vmatpush1.bf16.msra.mxu0 0
        %711 = vmatprep.subr.bf16.mxu0 0
        %712 = vmatpush1.bf16.msra.mxu0 0
        %713 = vmatprep.subr.bf16.mxu0 0
        %714 = vmatpush1.bf16.msra.mxu0 0
        %715 = vmatprep.subr.bf16.mxu0 0
        %716 = vmatpush1.bf16.msra.mxu0 0
        %717 = vmatprep.subr.bf16.mxu0 0
        %718 = vmatpush1.bf16.msra.mxu0 0
        %719 = vmatprep.mubr.bf16.mxu0 0
        %720 = vmatmul.mubr.bf16.gmra.mrb[0].mxu0 %v682
        %v721 = vpop.f32.mrb[0].mxu0
        %v722 = vadd.f32 0.0, %v721
        %v723 = vpop.f32.mrb[0].mxu0
        %v724 = vpop.f32.mrb[0].mxu0
        %v725 = vpop.f32.mrb[0].mxu0
        %726 = vdwg.mxu0
        %v727 = vpack.c.bf16 %v722, %v722
        %v729 = vunpack.c.l.b16 %v727
        %v730 = vpack.c.b16 %v729, %v729
        %731 = vrot.lane.b32.xlu0 %v730, 8
        %v732 = vpop.permute.xlu0 %731
        %vm734 = vcmask 126016
        %735 = vst.msk [vmem:[#allocation2] sm:$0xf] %vm734, %v732
        %736 = vrot.lane.b32.xlu0 %v502, 112
        %v737 = vpop.permute.xlu0 %736
        %738 = vrot.lane.b32.xlu0 %v502, 80
        %v739 = vpop.permute.xlu0 %738
        %v741 = vsel %vm506, %v737, 0
        %v744 = vsel %vm506, %v739, 0
        %746 = vmatprep.subr.bf16.mxu0 0
        %747 = vmatpush1.bf16.xpose.msra.mxu0 %v744
        %748 = vmatprep.subr.bf16.mxu0 0
        %749 = vmatpush1.bf16.xpose.msra.mxu0 0
        %750 = vmatprep.subr.bf16.mxu0 0
        %751 = vmatpush1.bf16.xpose.msra.mxu0 0
        %752 = vmatprep.subr.bf16.mxu0 0
        %753 = vmatpush1.bf16.xpose.msra.mxu0 0
        %754 = vmatprep.subr.bf16.mxu0 0
        %755 = vmatpush1.bf16.xpose.msra.mxu0 0
        %756 = vmatprep.subr.bf16.mxu0 0
        %757 = vmatpush1.bf16.xpose.msra.mxu0 0
        %758 = vmatprep.subr.bf16.mxu0 0
        %759 = vmatpush1.bf16.xpose.msra.mxu0 0
        %760 = vmatprep.subr.bf16.mxu0 0
        %761 = vmatpush1.bf16.xpose.msra.mxu0 0
        %762 = vmatprep.subr.bf16.mxu0 0
        %763 = vmatpush1.bf16.xpose.msra.mxu0 0
        %764 = vmatprep.subr.bf16.mxu0 0
        %765 = vmatpush1.bf16.xpose.msra.mxu0 0
        %766 = vmatprep.subr.bf16.mxu0 0
        %767 = vmatpush1.bf16.xpose.msra.mxu0 0
        %768 = vmatprep.subr.bf16.mxu0 0
        %769 = vmatpush1.bf16.xpose.msra.mxu0 0
        %770 = vmatprep.subr.bf16.mxu0 0
        %771 = vmatpush1.bf16.xpose.msra.mxu0 0
        %772 = vmatprep.subr.bf16.mxu0 0
        %773 = vmatpush1.bf16.xpose.msra.mxu0 0
        %774 = vmatprep.subr.bf16.mxu0 0
        %775 = vmatpush1.bf16.xpose.msra.mxu0 0
        %776 = vmatprep.subr.bf16.mxu0 0
        %777 = vmatpush1.bf16.xpose.msra.mxu0 0
        %778 = vmatprep.mubr.bf16.mxu0 0
        %779 = vmatmul.mubr.bf16.gmra.mrb[0].mxu0 %v741
        %v780 = vpop.f32.mrb[0].mxu0
        %v781 = vadd.f32 0.0, %v780
        %v782 = vpop.f32.mrb[0].mxu0
        %v783 = vpop.f32.mrb[0].mxu0
        %v784 = vpop.f32.mrb[0].mxu0
        %785 = vdwg.mxu0
        %v786 = vsel %vm506, %v781, -inf
        %787 = vmax.xlane.f32.xlu0 %v786
        %v788 = vpop.xlane.xlu0 %787
        %v789 = vsub.f32 %v781, %v788
        %v790 = vmul.f32 %v789, 1.442695
        %v791 = vpow.pop %v790
        %v792 = vsel %vm506, %v791, 0.0
        %793 = vadd.xlane.f32.xlu0 %v792
        %v794 = vpop.xlane.xlu0 %793
        %v795 = vrcp.pop %v794
        %v796 = vmul.f32 %v791, %v795
        %v797 = vpack.c.bf16 %v796, %v796
        %798 = vrot.lane.b32.xlu0 %v502, 48
        %v799 = vpop.permute.xlu0 %798
        %v801 = vsel %vm506, %v797, 0
        %v804 = vsel %vm570, %v799, 0
        %806 = vmatprep.subr.bf16.mxu0 0
        %807 = vmatpush1.bf16.msra.mxu0 %v804
        %808 = vmatprep.subr.bf16.mxu0 0
        %809 = vmatpush1.bf16.msra.mxu0 0
        %810 = vmatprep.subr.bf16.mxu0 0
        %811 = vmatpush1.bf16.msra.mxu0 0
        %812 = vmatprep.subr.bf16.mxu0 0
        %813 = vmatpush1.bf16.msra.mxu0 0
        %814 = vmatprep.subr.bf16.mxu0 0
        %815 = vmatpush1.bf16.msra.mxu0 0
        %816 = vmatprep.subr.bf16.mxu0 0
        %817 = vmatpush1.bf16.msra.mxu0 0
        %818 = vmatprep.subr.bf16.mxu0 0
        %819 = vmatpush1.bf16.msra.mxu0 0
        %820 = vmatprep.subr.bf16.mxu0 0
        %821 = vmatpush1.bf16.msra.mxu0 0
        %822 = vmatprep.subr.bf16.mxu0 0
        %823 = vmatpush1.bf16.msra.mxu0 0
        %824 = vmatprep.subr.bf16.mxu0 0
        %825 = vmatpush1.bf16.msra.mxu0 0
        %826 = vmatprep.subr.bf16.mxu0 0
        %827 = vmatpush1.bf16.msra.mxu0 0
        %828 = vmatprep.subr.bf16.mxu0 0
        %829 = vmatpush1.bf16.msra.mxu0 0
        %830 = vmatprep.subr.bf16.mxu0 0
        %831 = vmatpush1.bf16.msra.mxu0 0
        %832 = vmatprep.subr.bf16.mxu0 0
        %833 = vmatpush1.bf16.msra.mxu0 0
        %834 = vmatprep.subr.bf16.mxu0 0
        %835 = vmatpush1.bf16.msra.mxu0 0
        %836 = vmatprep.subr.bf16.mxu0 0
        %837 = vmatpush1.bf16.msra.mxu0 0
        %838 = vmatprep.mubr.bf16.mxu0 0
        %839 = vmatmul.mubr.bf16.gmra.mrb[0].mxu0 %v801
        %v840 = vpop.f32.mrb[0].mxu0
        %v841 = vadd.f32 0.0, %v840
        %v842 = vpop.f32.mrb[0].mxu0
        %v843 = vpop.f32.mrb[0].mxu0
        %v844 = vpop.f32.mrb[0].mxu0
        %845 = vdwg.mxu0
        %v846 = vpack.c.bf16 %v841, %v841
        %v848 = vunpack.c.l.b16 %v846
        %v849 = vpack.c.b16 %v848, %v848
        %850 = vrot.lane.b32.xlu0 %v849, 16
        %v851 = vpop.permute.xlu0 %850
        %vm853 = vcmask 191616
        %854 = vst.msk [vmem:[#allocation2] sm:$0xf] %vm853, %v851
        %855 = vrot.lane.b32.xlu0 %v502, 104
        %v856 = vpop.permute.xlu0 %855
        %857 = vrot.lane.b32.xlu0 %v502, 72
        %v858 = vpop.permute.xlu0 %857
        %v860 = vsel %vm506, %v856, 0
        %v863 = vsel %vm506, %v858, 0
        %865 = vmatprep.subr.bf16.mxu0 0
        %866 = vmatpush1.bf16.xpose.msra.mxu0 %v863
        %867 = vmatprep.subr.bf16.mxu0 0
        %868 = vmatpush1.bf16.xpose.msra.mxu0 0
        %869 = vmatprep.subr.bf16.mxu0 0
        %870 = vmatpush1.bf16.xpose.msra.mxu0 0
        %871 = vmatprep.subr.bf16.mxu0 0
        %872 = vmatpush1.bf16.xpose.msra.mxu0 0
        %873 = vmatprep.subr.bf16.mxu0 0
        %874 = vmatpush1.bf16.xpose.msra.mxu0 0
        %875 = vmatprep.subr.bf16.mxu0 0
        %876 = vmatpush1.bf16.xpose.msra.mxu0 0
        %877 = vmatprep.subr.bf16.mxu0 0
        %878 = vmatpush1.bf16.xpose.msra.mxu0 0
        %879 = vmatprep.subr.bf16.mxu0 0
        %880 = vmatpush1.bf16.xpose.msra.mxu0 0
        %881 = vmatprep.subr.bf16.mxu0 0
        %882 = vmatpush1.bf16.xpose.msra.mxu0 0
        %883 = vmatprep.subr.bf16.mxu0 0
        %884 = vmatpush1.bf16.xpose.msra.mxu0 0
        %885 = vmatprep.subr.bf16.mxu0 0
        %886 = vmatpush1.bf16.xpose.msra.mxu0 0
        %887 = vmatprep.subr.bf16.mxu0 0
        %888 = vmatpush1.bf16.xpose.msra.mxu0 0
        %889 = vmatprep.subr.bf16.mxu0 0
        %890 = vmatpush1.bf16.xpose.msra.mxu0 0
        %891 = vmatprep.subr.bf16.mxu0 0
        %892 = vmatpush1.bf16.xpose.msra.mxu0 0
        %893 = vmatprep.subr.bf16.mxu0 0
        %894 = vmatpush1.bf16.xpose.msra.mxu0 0
        %895 = vmatprep.subr.bf16.mxu0 0
        %896 = vmatpush1.bf16.xpose.msra.mxu0 0
        %897 = vmatprep.mubr.bf16.mxu0 0
        %898 = vmatmul.mubr.bf16.gmra.mrb[0].mxu0 %v860
        %v899 = vpop.f32.mrb[0].mxu0
        %v900 = vadd.f32 0.0, %v899
        %v901 = vpop.f32.mrb[0].mxu0
        %v902 = vpop.f32.mrb[0].mxu0
        %v903 = vpop.f32.mrb[0].mxu0
        %904 = vdwg.mxu0
        %v905 = vsel %vm506, %v900, -inf
        %906 = vmax.xlane.f32.xlu0 %v905
        %v907 = vpop.xlane.xlu0 %906
        %v908 = vsub.f32 %v900, %v907
        %v909 = vmul.f32 %v908, 1.442695
        %v910 = vpow.pop %v909
        %v911 = vsel %vm506, %v910, 0.0
        %912 = vadd.xlane.f32.xlu0 %v911
        %v913 = vpop.xlane.xlu0 %912
        %v914 = vrcp.pop %v913
        %v915 = vmul.f32 %v910, %v914
        %v916 = vpack.c.bf16 %v915, %v915
        %917 = vrot.lane.b32.xlu0 %v502, 40
        %v918 = vpop.permute.xlu0 %917
        %v920 = vsel %vm506, %v916, 0
        %v923 = vsel %vm570, %v918, 0
        %925 = vmatprep.subr.bf16.mxu0 0
        %926 = vmatpush1.bf16.msra.mxu0 %v923
        %927 = vmatprep.subr.bf16.mxu0 0
        %928 = vmatpush1.bf16.msra.mxu0 0
        %929 = vmatprep.subr.bf16.mxu0 0
        %930 = vmatpush1.bf16.msra.mxu0 0
        %931 = vmatprep.subr.bf16.mxu0 0
        %932 = vmatpush1.bf16.msra.mxu0 0
        %933 = vmatprep.subr.bf16.mxu0 0
        %934 = vmatpush1.bf16.msra.mxu0 0
        %935 = vmatprep.subr.bf16.mxu0 0
        %936 = vmatpush1.bf16.msra.mxu0 0
        %937 = vmatprep.subr.bf16.mxu0 0
        %938 = vmatpush1.bf16.msra.mxu0 0
        %939 = vmatprep.subr.bf16.mxu0 0
        %940 = vmatpush1.bf16.msra.mxu0 0
        %941 = vmatprep.subr.bf16.mxu0 0
        %942 = vmatpush1.bf16.msra.mxu0 0
        %943 = vmatprep.subr.bf16.mxu0 0
        %944 = vmatpush1.bf16.msra.mxu0 0
        %945 = vmatprep.subr.bf16.mxu0 0
        %946 = vmatpush1.bf16.msra.mxu0 0
        %947 = vmatprep.subr.bf16.mxu0 0
        %948 = vmatpush1.bf16.msra.mxu0 0
        %949 = vmatprep.subr.bf16.mxu0 0
        %950 = vmatpush1.bf16.msra.mxu0 0
        %951 = vmatprep.subr.bf16.mxu0 0
        %952 = vmatpush1.bf16.msra.mxu0 0
        %953 = vmatprep.subr.bf16.mxu0 0
        %954 = vmatpush1.bf16.msra.mxu0 0
        %955 = vmatprep.subr.bf16.mxu0 0
        %956 = vmatpush1.bf16.msra.mxu0 0
        %957 = vmatprep.mubr.bf16.mxu0 0
        %958 = vmatmul.mubr.bf16.gmra.mrb[0].mxu0 %v920
        %v959 = vpop.f32.mrb[0].mxu0
        %v960 = vadd.f32 0.0, %v959
        %v961 = vpop.f32.mrb[0].mxu0
        %v962 = vpop.f32.mrb[0].mxu0
        %v963 = vpop.f32.mrb[0].mxu0
        %964 = vdwg.mxu0
        %v965 = vpack.c.bf16 %v960, %v960
        %v967 = vunpack.c.l.b16 %v965
        %v968 = vpack.c.b16 %v967, %v967
        %969 = vrot.lane.b32.xlu0 %v968, 24
        %v970 = vpop.permute.xlu0 %969
        %vm972 = vcmask 257216
        %973 = vst.msk [vmem:[#allocation2] sm:$0xf] %vm972, %v970
        %v974 = vld [vmem:[#allocation2] sm:$0xf]
        %v975 = vld [vmem:[%s2] sm:$0xf]
        %v976 = vld [vmem:[%s2 + $0x4] sm:$0xf]
        %v977 = vld [vmem:[%s2 + $0x8] sm:$0xf]
        %v978 = vld [vmem:[%s2 + $0xc] sm:$0xf]
        %v983 = vunpack.c.l.b16 %v975
        %v984 = vunpack.c.l.b16 %v976
        %v985 = vunpack.c.l.b16 %v977
        %v986 = vunpack.c.l.b16 %v978
        %v987 = vpack.c.b16 %v984, %v983
        %v988 = vpack.c.b16 %v986, %v985
        %v992 = vsel %vm413, %v974, 0
        %994 = vmatprep.subr.bf16.mxu0 0
        %995 = vmatpush1.bf16.msra.mxu0 %v987
        %996 = vmatprep.subr.bf16.mxu0 0
        %997 = vmatpush1.bf16.msra.mxu0 %v988
        %998 = vmatprep.subr.bf16.mxu0 0
        %999 = vmatpush1.bf16.msra.mxu0 0
        %1000 = vmatprep.subr.bf16.mxu0 0
        %1001 = vmatpush1.bf16.msra.mxu0 0
        %1002 = vmatprep.subr.bf16.mxu0 0
        %1003 = vmatpush1.bf16.msra.mxu0 0
        %1004 = vmatprep.subr.bf16.mxu0 0
        %1005 = vmatpush1.bf16.msra.mxu0 0
        %1006 = vmatprep.subr.bf16.mxu0 0
        %1007 = vmatpush1.bf16.msra.mxu0 0
        %1008 = vmatprep.subr.bf16.mxu0 0
        %1009 = vmatpush1.bf16.msra.mxu0 0
        %1010 = vmatprep.subr.bf16.mxu0 0
        %1011 = vmatpush1.bf16.msra.mxu0 0
        %1012 = vmatprep.subr.bf16.mxu0 0
        %1013 = vmatpush1.bf16.msra.mxu0 0
        %1014 = vmatprep.subr.bf16.mxu0 0
        %1015 = vmatpush1.bf16.msra.mxu0 0
        %1016 = vmatprep.subr.bf16.mxu0 0
        %1017 = vmatpush1.bf16.msra.mxu0 0
        %1018 = vmatprep.subr.bf16.mxu0 0
        %1019 = vmatpush1.bf16.msra.mxu0 0
        %1020 = vmatprep.subr.bf16.mxu0 0
        %1021 = vmatpush1.bf16.msra.mxu0 0
        %1022 = vmatprep.subr.bf16.mxu0 0
        %1023 = vmatpush1.bf16.msra.mxu0 0
        %1024 = vmatprep.subr.bf16.mxu0 0
        %1025 = vmatpush1.bf16.msra.mxu0 0
        %1026 = vmatprep.mubr.bf16.mxu0 0
        %1027 = vmatmul.mubr.bf16.gmra.mrb[0].mxu0 %v992
        %v1028 = vpop.f32.mrb[0].mxu0
        %v1029 = vadd.f32 0.0, %v1028
        %v1030 = vpop.f32.mrb[0].mxu0
        %v1031 = vpop.f32.mrb[0].mxu0
        %v1032 = vpop.f32.mrb[0].mxu0
        %1033 = vdwg.mxu0
        %v1034 = vadd.f32 %v410, %v1029
        %v1035 = vld [vmem:[%s3] sm:$0x1]
        %v1037 = vlaneseq
        %v1038 = vshrl.u32 %v1037, 7
        %v1039 = vsub.s32 0, %v1038
        %v1040 = vrot.slane %v1035, %v1039
        %v1042 = vadd.f32 %v1034, %v1040
        %v1043 = vld [vmem:[%s6] sm:$0x1]
        %v1044 = vld [vmem:[%s7] sm:$0x1]
        %v1045 = vsel %vm413, %v1042, 0.0
        %1046 = vadd.xlane.f32.xlu0 %v1045
        %v1047 = vpop.xlane.xlu0 %1046
        %v1048 = vmul.f32 %v1047, %v417
        %v1049 = vsub.f32 %v1042, %v1048
        %v1050 = vmul.f32 %v1049, %v1049
        %v1051 = vsel %vm413, %v1050, 0.0
        %1052 = vadd.xlane.f32.xlu0 %v1051
        %v1053 = vpop.xlane.xlu0 %1052
        %v1054 = vmul.f32 %v1053, %v417
        %v1055 = vadd.f32 %v1054, 1e-05
        %v1056 = vrsqrt.pop %v1055
        %v1057 = vmul.f32 %v1049, %v1056
        %v1059 = vlaneseq
        %v1060 = vshrl.u32 %v1059, 7
        %v1061 = vsub.s32 0, %v1060
        %v1062 = vrot.slane %v1043, %v1061
        %v1064 = vmul.f32 %v1057, %v1062
        %v1066 = vlaneseq
        %v1067 = vshrl.u32 %v1066, 7
        %v1068 = vsub.s32 0, %v1067
        %v1069 = vrot.slane %v1044, %v1068
        %v1071 = vadd.f32 %v1064, %v1069
        %v1072 = vpack.c.bf16 %v1071, %v1071
        %v1073 = vld [vmem:[%s8] sm:$0xf]
        %v1074 = vld [vmem:[%s8 + $0x4] sm:$0xf]
        %v1075 = vld [vmem:[%s8 + $0x8] sm:$0xf]
        %v1076 = vld [vmem:[%s8 + $0xc] sm:$0xf]
        %v1077 = vld [vmem:[%s9] sm:$0x1]
        %v1079 = vlaneseq
        %v1080 = vshrl.u32 %v1079, 7
        %v1081 = vsub.s32 0, %v1080
        %v1082 = vrot.slane %v1077, %v1081
        %v1088 = vunpack.c.l.b16 %v1073
        %v1089 = vunpack.c.l.b16 %v1074
        %v1090 = vunpack.c.l.b16 %v1075
        %v1091 = vunpack.c.l.b16 %v1076
        %v1092 = vpack.c.b16 %v1089, %v1088
        %v1093 = vpack.c.b16 %v1091, %v1090
        %v1097 = vsel %vm413, %v1072, 0
        %1099 = vmatprep.subr.bf16.mxu0 0
        %1100 = vmatpush1.bf16.msra.mxu0 %v1092
        %1101 = vmatprep.subr.bf16.mxu0 0
        %1102 = vmatpush1.bf16.msra.mxu0 %v1093
        %1103 = vmatprep.subr.bf16.mxu0 0
        %1104 = vmatpush1.bf16.msra.mxu0 0
        %1105 = vmatprep.subr.bf16.mxu0 0
        %1106 = vmatpush1.bf16.msra.mxu0 0
        %1107 = vmatprep.subr.bf16.mxu0 0
        %1108 = vmatpush1.bf16.msra.mxu0 0
        %1109 = vmatprep.subr.bf16.mxu0 0
        %1110 = vmatpush1.bf16.msra.mxu0 0
        %1111 = vmatprep.subr.bf16.mxu0 0
        %1112 = vmatpush1.bf16.msra.mxu0 0
        %1113 = vmatprep.subr.bf16.mxu0 0
        %1114 = vmatpush1.bf16.msra.mxu0 0
        %1115 = vmatprep.subr.bf16.mxu0 0
        %1116 = vmatpush1.bf16.msra.mxu0 0
        %1117 = vmatprep.subr.bf16.mxu0 0
        %1118 = vmatpush1.bf16.msra.mxu0 0
        %1119 = vmatprep.subr.bf16.mxu0 0
        %1120 = vmatpush1.bf16.msra.mxu0 0
        %1121 = vmatprep.subr.bf16.mxu0 0
        %1122 = vmatpush1.bf16.msra.mxu0 0
        %1123 = vmatprep.subr.bf16.mxu0 0
        %1124 = vmatpush1.bf16.msra.mxu0 0
        %1125 = vmatprep.subr.bf16.mxu0 0
        %1126 = vmatpush1.bf16.msra.mxu0 0
        %1127 = vmatprep.subr.bf16.mxu0 0
        %1128 = vmatpush1.bf16.msra.mxu0 0
        %1129 = vmatprep.subr.bf16.mxu0 0
        %1130 = vmatpush1.bf16.msra.mxu0 0
        %1131 = vmatprep.mubr.bf16.mxu0 0
        %1132 = vmatmul.mubr.bf16.gmra.mrb[0].mxu0 %v1097
        %v1133 = vpop.f32.mrb[0].mxu0
        %v1134 = vadd.f32 %v1082, %v1133
        %v1135 = vpop.f32.mrb[0].mxu0
        %v1136 = vpop.f32.mrb[0].mxu0
        %v1137 = vpop.f32.mrb[0].mxu0
        %1138 = vdwg.mxu0
        %v1139 = vmul.f32 %v1134, 0.5
        %v1140 = vmul.f32 %v1134, 0.044715
        %v1141 = vmul.f32 %v1140, %v1134
        %v1142 = vmul.f32 %v1141, %v1134
        %v1143 = vadd.f32 %v1134, %v1142
        %v1144 = vmul.f32 %v1143, 0.7978846
        %v1145 = vtanh.pop %v1144
        %v1146 = vadd.f32 %v1145, 1.0
        %v1147 = vmul.f32 %v1139, %v1146
        %v1148 = vpack.c.bf16 %v1147, %v1147
        %v1149 = vld [vmem:[%s10] sm:$0xf]
        %v1150 = vld [vmem:[%s10 + $0x4] sm:$0xf]
        %v1151 = vld [vmem:[%s10 + $0x8] sm:$0xf]
        %v1152 = vld [vmem:[%s10 + $0xc] sm:$0xf]
        %v1153 = vld [vmem:[%s10 + $0x10] sm:$0xf]
        %v1154 = vld [vmem:[%s10 + $0x14] sm:$0xf]
        %v1155 = vld [vmem:[%s10 + $0x18] sm:$0xf]
        %v1156 = vld [vmem:[%s10 + $0x1c] sm:$0xf]
        %v1157 = vld [vmem:[%s10 + $0x20] sm:$0xf]
        %v1158 = vld [vmem:[%s10 + $0x24] sm:$0xf]
        %v1159 = vld [vmem:[%s10 + $0x28] sm:$0xf]
        %v1160 = vld [vmem:[%s10 + $0x2c] sm:$0xf]
        %v1161 = vld [vmem:[%s10 + $0x30] sm:$0xf]
        %v1162 = vld [vmem:[%s10 + $0x34] sm:$0xf]
        %v1163 = vld [vmem:[%s10 + $0x38] sm:$0xf]
        %v1164 = vld [vmem:[%s10 + $0x3c] sm:$0xf]
        %v1165 = vld [vmem:[%s11] sm:$0x1]
        %v1167 = vlaneseq
        %v1168 = vshrl.u32 %v1167, 7
        %v1169 = vsub.s32 0, %v1168
        %v1170 = vrot.slane %v1165, %v1169
        %v1188 = vunpack.c.l.b16 %v1149
        %v1189 = vunpack.c.l.b16 %v1150
        %v1190 = vunpack.c.l.b16 %v1151
        %v1191 = vunpack.c.l.b16 %v1152
        %v1192 = vunpack.c.l.b16 %v1153
        %v1193 = vunpack.c.l.b16 %v1154
        %v1194 = vunpack.c.l.b16 %v1155
        %v1195 = vunpack.c.l.b16 %v1156
        %v1196 = vunpack.c.l.b16 %v1157
        %v1197 = vunpack.c.l.b16 %v1158
        %v1198 = vunpack.c.l.b16 %v1159
        %v1199 = vunpack.c.l.b16 %v1160
        %v1200 = vunpack.c.l.b16 %v1161
        %v1201 = vunpack.c.l.b16 %v1162
        %v1202 = vunpack.c.l.b16 %v1163
        %v1203 = vunpack.c.l.b16 %v1164
        %v1204 = vpack.c.b16 %v1189, %v1188
        %v1205 = vpack.c.b16 %v1191, %v1190
        %v1206 = vpack.c.b16 %v1193, %v1192
        %v1207 = vpack.c.b16 %v1195, %v1194
        %v1208 = vpack.c.b16 %v1197, %v1196
        %v1209 = vpack.c.b16 %v1199, %v1198
        %v1210 = vpack.c.b16 %v1201, %v1200
        %v1211 = vpack.c.b16 %v1203, %v1202
        %1220 = vmatprep.subr.bf16.mxu0 0
        %1221 = vmatpush1.bf16.msra.mxu0 %v1204
        %1222 = vmatprep.subr.bf16.mxu0 0
        %1223 = vmatpush1.bf16.msra.mxu0 %v1205
        %1224 = vmatprep.subr.bf16.mxu0 0
        %1225 = vmatpush1.bf16.msra.mxu0 %v1206
        %1226 = vmatprep.subr.bf16.mxu0 0
        %1227 = vmatpush1.bf16.msra.mxu0 %v1207
        %1228 = vmatprep.subr.bf16.mxu0 0
        %1229 = vmatpush1.bf16.msra.mxu0 %v1208
        %1230 = vmatprep.subr.bf16.mxu0 0
        %1231 = vmatpush1.bf16.msra.mxu0 %v1209
        %1232 = vmatprep.subr.bf16.mxu0 0
        %1233 = vmatpush1.bf16.msra.mxu0 %v1210
        %1234 = vmatprep.subr.bf16.mxu0 0
        %1235 = vmatpush1.bf16.msra.mxu0 %v1211
        %1236 = vmatprep.subr.bf16.mxu0 0
        %1237 = vmatpush1.bf16.msra.mxu0 0
        %1238 = vmatprep.subr.bf16.mxu0 0
        %1239 = vmatpush1.bf16.msra.mxu0 0
        %1240 = vmatprep.subr.bf16.mxu0 0
        %1241 = vmatpush1.bf16.msra.mxu0 0
        %1242 = vmatprep.subr.bf16.mxu0 0
        %1243 = vmatpush1.bf16.msra.mxu0 0
        %1244 = vmatprep.subr.bf16.mxu0 0
        %1245 = vmatpush1.bf16.msra.mxu0 0
        %1246 = vmatprep.subr.bf16.mxu0 0
        %1247 = vmatpush1.bf16.msra.mxu0 0
        %1248 = vmatprep.subr.bf16.mxu0 0
        %1249 = vmatpush1.bf16.msra.mxu0 0
        %1250 = vmatprep.subr.bf16.mxu0 0
        %1251 = vmatpush1.bf16.msra.mxu0 0
        %1252 = vmatprep.mubr.bf16.mxu0 0
        %1253 = vmatmul.mubr.bf16.gmra.mrb[0].mxu0 %v1148
        %v1254 = vpop.f32.mrb[0].mxu0
        %v1255 = vadd.f32 %v1170, %v1254
        %v1256 = vpop.f32.mrb[0].mxu0
        %v1257 = vpop.f32.mrb[0].mxu0
        %v1258 = vpop.f32.mrb[0].mxu0
        %1259 = vdwg.mxu0
        %v1260 = vadd.f32 %v1042, %v1255
        %1261 = vst.msk [vmem:[%s404] sm:$0xff] %vm413, %v1260
        %s1262 = sand.u32 %s291, 1
        %s1263 = scalar_lea.sflag [#allocation4], %s1262
        %s1264 = sand.u32 %s291, 1
        %s1265 = smul.addr %s1264, 8
        %s1266 = scalar_lea.vmem [#allocation3], %s1265
        // Predicated region
        $region69: #{tpu_custom_call.1} parent=67 // pred_check
          %p1267 = pneg %p301
        $region70: #{tpu_custom_call.1} parent=67 // pred_check_branch
          %1269 = sbr.rel (%p1267) target = $region72
        $region71: #{tpu_custom_call.1} parent=67 // pred_region
          %s1271 = ssub.s32 128, 128
          %1272 = vsyncadd %s1263, %s1271
          %s1273 = smul.addr %s26, 128
          %s1274 = scalar_lea.hbm %s12, %s1273
          %s1276 = sshll.u32 %s1266, 4
          %s1277 = int_to_ptr.vmem [resolvable:$true] %s1276
          %1279 = dma.vmem_to_hbm [thread:$0]  %s1277, 128, %s1274, %s1263
        $region72: #{tpu_custom_call.1} parent=67 // pred_fallthru
          _
      $region68: #{tpu_custom_call.1} parent=5 // pred_fallthru
        _
      %p1280 = scmp.le.s32.totalorder 2, %s21
      // Predicated region
      $region73: #{tpu_custom_call.1} parent=5 // pred_check
        %p1281 = pneg %p1280
      $region74: #{tpu_custom_call.1} parent=5 // pred_check_branch
        %1283 = sbr.rel (%p1281) target = $region76
      $region75: #{tpu_custom_call.1} parent=5 // pred_region
        %s1284 = ssub.s32 %s21, 2
        // Predicated region
        $region77: #{tpu_custom_call.1} parent=75 // pred_check
          %p1285 = pneg %p307
        $region78: #{tpu_custom_call.1} parent=75 // pred_check_branch
          %1287 = sbr.rel (%p1285) target = $region80
        $region79: #{tpu_custom_call.1} parent=75 // pred_region
          %s1288 = sand.u32 %s292, 1
          %s1289 = scalar_lea.sflag [#allocation4], %s1288
          %s1290 = sand.u32 %s292, 1
          %s1291 = smul.addr %s1290, 8
          %s1292 = scalar_lea.vmem [#allocation3], %s1291
          %1293 = dma.done %s1289, 128
        $region80: #{tpu_custom_call.1} parent=75 // pred_fallthru
          _
      $region76: #{tpu_custom_call.1} parent=5 // pred_fallthru
        _
    $region6: #{tpu_custom_call.1} parent=1 // loop_footer
      %s25 = sadd.s32 1, %s21
    $region7: #{tpu_custom_call.1} parent=1 // loop_footer_branch
      %20 = sbr.rel target = $region3
    $region8: #{tpu_custom_call.1} parent=1 // loop_exit
      _
    %1294 = vsyncpa [#allocation4], 1
    %s1295 = scalar_lea.sflag [#allocation4], 1
    %1296 = vsyncpa %s1295, 1

</llo_original>
